<compile_context>
chip_gen: v7x
topology: tpu7x:2x2x1
jax: 0.10.0
libtpu: 0.0.40
codegen_flags: <defaults>
</compile_context>

<pallas_src>
import functools

import jax
import jax.numpy as jnp
from jax import lax
from jax.experimental import pallas as pl
from jax.experimental.pallas import tpu as pltpu


def _tree_sum(vals):
    """Pairwise-sum a list of arrays (short dependency chains -> VALU ILP)."""
    while len(vals) > 1:
        nxt = [vals[i] + vals[i + 1] for i in range(0, len(vals) - 1, 2)]
        if len(vals) % 2:
            nxt.append(vals[-1])
        vals = nxt
    return vals[0]


@functools.partial(jax.jit, static_argnames=("images_per_block",))
def residual_block_pallas(x_nchw, w1, b1, w2, b2, images_per_block=None):
    """out = conv2(relu(conv1(relu(x)))) + x   (3x3 'same' convs, NCHW)."""
    N, C, H, W = x_nchw.shape
    K = 3
    HW = H * W

    # --- images per grid step: amortize per-step overhead, keep grid length >= 2 ---
    if images_per_block is None:
        images_per_block = max(1, min(64, N // 2)) if N >= 2 else 1
    G = -(-N // images_per_block)          # number of grid steps
    B = -(-N // G)                         # images per step (rebalanced, minimal pad)
    Npad = G * B

    # Free reshape: merges contiguous minor dims, no HBM transpose or extra copy.
    x_flat = x_nchw.reshape(N, C, HW)
    if Npad != N:
        x_flat = jnp.pad(x_flat, ((0, Npad - N), (0, 0), (0, 0)))

    # Tiny weight repack: (Cout, Cin, kh, kw) -> (Cout, K*K*Cin); column order is
    # tap-major (kh, kw), channel-minor, matching the kernel's tap loop.
    def repack(w):
        return jnp.transpose(w, (0, 2, 3, 1)).reshape(C, K * K * C).astype(jnp.float32)

    w1_f, w2_f = repack(w1), repack(w2)
    b1_c = b1.reshape(C, 1).astype(jnp.float32)
    b2_c = b2.reshape(C, 1).astype(jnp.float32)

    # Lane offset of the image region inside the halo scratch.  128-aligned so the
    # activation store is an unmasked full-lane-tile store; only W+1 halo lanes are
    # actually needed (and zeroed) on each side.
    OFF = ((W + 1 + 127) // 128) * 128
    PADW = HW + 2 * OFF

    def kernel(x_ref, w1_ref, b1_ref, w2_ref, b2_ref, o_ref, pad_ref):
        x = x_ref[...].astype(jnp.float32)                       # (B, C, HW)

        # Column boundary masks generated in-kernel (no mask input / DMA stream).
        # f32 floor-division avoids relying on vector integer div/rem support.
        pos = lax.broadcasted_iota(jnp.int32, (1, 1, HW), 2).astype(jnp.float32)
        row = jnp.floor((pos + 0.5) * (1.0 / W))
        col = pos - W * row
        mask_l = jnp.where(col > 0.5, 1.0, 0.0)                  # for dw = -1 taps
        mask_r = jnp.where(col < W - 1.5, 1.0, 0.0)              # for dw = +1 taps

        # Zero the halo strips (top/bottom-row spill of the flattened image).
        # The centre store below never touches them, so both convs reuse these zeros.
        zstrip = jnp.zeros((B, C, W + 1), jnp.float32)
        pad_ref[:, :, OFF - (W + 1):OFF] = zstrip
        pad_ref[:, :, OFF + HW:OFF + HW + W + 1] = zstrip

        def conv3x3(y, w_ref, b_ref):
            """y: (B, C, HW) f32 -> (B, C, HW) f32; 3x3 'same' conv + bias."""
            # Stage activations into the halo scratch: every tap becomes a plain
            # statically-offset vector load (no concat-with-zeros per tap).
            pad_ref[:, :, OFF:OFF + HW] = y
            w = w_ref[...]                                       # (C, K*K*C) f32
            bias = b_ref[...].reshape(1, C, 1)
            partials = []                                        # one accumulator per dh
            t = 0
            for dh in (-1, 0, 1):
                per_tap = []
                for dw in (-1, 0, 1):
                    s = dh * W + dw
                    tap = pad_ref[:, :, OFF + s:OFF + s + HW]    # (B, C, HW)
                    if dw == -1:
                        tap = tap * mask_l
                    elif dw == 1:
                        tap = tap * mask_r
                    # Channel contraction: C independent broadcasted FMAs
                    # ((1,C,1) x (B,1,HW)), combined with a pairwise tree.
                    terms = [
                        w[:, t * C + ci:t * C + ci + 1].reshape(1, C, 1)
                        * tap[:, ci:ci + 1, :]
                        for ci in range(C)
                    ]
                    per_tap.append(_tree_sum(terms))
                    t += 1
                partials.append(_tree_sum(per_tap))
            return _tree_sum(partials) + bias

        y = jnp.maximum(x, 0.0)                                  # ReLU
        y = conv3x3(y, w1_ref, b1_ref)
        y = jnp.maximum(y, 0.0)                                  # ReLU
        y = conv3x3(y, w2_ref, b2_ref)
        o_ref[...] = (y + x).astype(o_ref.dtype)                 # identity shortcut

    out_flat = pl.pallas_call(
        kernel,
        out_shape=jax.ShapeDtypeStruct((Npad, C, HW), x_nchw.dtype),
        grid_spec=pltpu.PrefetchScalarGridSpec(
            num_scalar_prefetch=0,
            grid=(G,),
            in_specs=[
                pl.BlockSpec((B, C, HW), lambda n: (n, 0, 0)),      # x, B images/step
                pl.BlockSpec((C, K * K * C), lambda n: (0, 0)),     # w1 (resident)
                pl.BlockSpec((C, 1), lambda n: (0, 0)),             # b1
                pl.BlockSpec((C, K * K * C), lambda n: (0, 0)),     # w2
                pl.BlockSpec((C, 1), lambda n: (0, 0)),             # b2
            ],
            out_specs=pl.BlockSpec((B, C, HW), lambda n: (n, 0, 0)),
            scratch_shapes=[pltpu.VMEM((B, C, PADW), jnp.float32)], # halo scratch
        ),
        compiler_params=pltpu.CompilerParams(
            dimension_semantics=("parallel",),    # megacore on v7x, pipelined elsewhere
            vmem_limit_bytes=32 * 1024 * 1024,    # safe on every gen incl. v7x (64 MiB)
        ),
    )(x_flat, w1_f, b1_c, w2_f, b2_c)

    return out_flat[:N].reshape(N, C, H, W)


if __name__ == "__main__":
    key = jax.random.PRNGKey(0)
    N, C, H, W = 2, 4, 16, 16
    K = 3
    kx, kw1, kb1, kw2, kb2 = jax.random.split(key, 5)
    x = jax.random.normal(kx, (N, C, H, W), dtype=jnp.float32)

    # torch.nn.Conv2d default init: U(-1/sqrt(fan_in), 1/sqrt(fan_in))
    fan_in = C * K * K
    bound = 1.0 / (fan_in ** 0.5)
    w1 = jax.random.uniform(kw1, (C, C, K, K), jnp.float32, -bound, bound)
    b1 = jax.random.uniform(kb1, (C,), jnp.float32, -bound, bound)
    w2 = jax.random.uniform(kw2, (C, C, K, K), jnp.float32, -bound, bound)
    b2 = jax.random.uniform(kb2, (C,), jnp.float32, -bound, bound)

    out = residual_block_pallas(x, w1, b1, w2, b2)
    out = jax.block_until_ready(out)

    # Pure-JAX reference of the same forward pass.
    def conv2d(inp, w, b):
        y = lax.conv_general_dilated(
            inp, w, window_strides=(1, 1),
            padding=((K // 2, K // 2), (K // 2, K // 2)),
            dimension_numbers=("NCHW", "OIHW", "NCHW"),
            precision=lax.Precision.HIGHEST)
        return y + b.reshape(1, -1, 1, 1)

    y = jnp.maximum(x, 0.0)
    y = conv2d(y, w1, b1)
    y = jnp.maximum(y, 0.0)
    y = conv2d(y, w2, b2)
    ref = y + x

    assert out.shape == (N, C, H, W)
    max_err = float(jnp.max(jnp.abs(out - ref)))
    assert max_err < 1e-4, f"max abs error {max_err}"
    print("KERNEL_OK")
</pallas_src>

<mosaic_0001>
module attributes {stable_mosaic.version = 11 : i64} {
  func.func @kernel(%arg0: i32, %arg1: memref<1x4x256xf32, #tpu.memory_space<vmem>>, %arg2: memref<4x36xf32, #tpu.memory_space<vmem>>, %arg3: memref<4x1xf32, #tpu.memory_space<vmem>>, %arg4: memref<4x36xf32, #tpu.memory_space<vmem>>, %arg5: memref<4x1xf32, #tpu.memory_space<vmem>>, %arg6: memref<1x4x256xf32, #tpu.memory_space<vmem>>, %arg7: memref<1x4x512xf32, #tpu.memory_space<vmem>>) attributes {dimension_semantics = [#tpu.dimension_semantics<parallel>], iteration_bounds = array<i64: 2>, scalar_prefetch = 0 : i64, scratch_operands = 1 : i64, tpu.core_type = #tpu.core_type<tc>, window_params = [{transform_indices = @transform_0, window_bounds = array<i64: 1, 4, 256>}, {pipeline_mode = #tpu.pipeline_mode<synchronous>, transform_indices = @transform_1, window_bounds = array<i64: 4, 36>}, {pipeline_mode = #tpu.pipeline_mode<synchronous>, transform_indices = @transform_2, window_bounds = array<i64: 4, 1>}, {pipeline_mode = #tpu.pipeline_mode<synchronous>, transform_indices = @transform_3, window_bounds = array<i64: 4, 36>}, {pipeline_mode = #tpu.pipeline_mode<synchronous>, transform_indices = @transform_4, window_bounds = array<i64: 4, 1>}, {transform_indices = @transform_5, window_bounds = array<i64: 1, 4, 256>}]} {
    %c0 = arith.constant 0 : index
    %c0_0 = arith.constant 0 : index
    %c0_1 = arith.constant 0 : index
    %0 = vector.load %arg1[%c0, %c0_0, %c0_1] : memref<1x4x256xf32, #tpu.memory_space<vmem>>, vector<1x4x256xf32>
    %1 = tpu.iota {dimensions = array<i32: 2>} : vector<1x1x256xi32>
    %2 = arith.sitofp %1 : vector<1x1x256xi32> to vector<1x1x256xf32>
    %cst = arith.constant 5.000000e-01 : f32
    %3 = vector.broadcast %cst : f32 to vector<1x1x256xf32>
    %4 = arith.addf %2, %3 : vector<1x1x256xf32>
    %cst_2 = arith.constant 6.250000e-02 : f32
    %5 = vector.broadcast %cst_2 : f32 to vector<1x1x256xf32>
    %6 = arith.mulf %4, %5 : vector<1x1x256xf32>
    %7 = math.floor %6 : vector<1x1x256xf32>
    %cst_3 = arith.constant 1.600000e+01 : f32
    %8 = vector.broadcast %cst_3 : f32 to vector<1x1x256xf32>
    %9 = arith.mulf %8, %7 : vector<1x1x256xf32>
    %10 = arith.subf %2, %9 : vector<1x1x256xf32>
    %cst_4 = arith.constant 5.000000e-01 : f32
    %11 = vector.broadcast %cst_4 : f32 to vector<1x1x256xf32>
    %12 = arith.cmpf ogt, %10, %11 : vector<1x1x256xf32>
    %cst_5 = arith.constant 1.000000e+00 : f32
    %cst_6 = arith.constant 0.000000e+00 : f32
    %13 = vector.broadcast %cst_5 : f32 to vector<1x1x256xf32>
    %14 = vector.broadcast %cst_6 : f32 to vector<1x1x256xf32>
    %15 = arith.select %12, %13, %14 : vector<1x1x256xi1>, vector<1x1x256xf32>
    %cst_7 = arith.constant 1.450000e+01 : f32
    %16 = vector.broadcast %cst_7 : f32 to vector<1x1x256xf32>
    %17 = arith.cmpf olt, %10, %16 : vector<1x1x256xf32>
    %cst_8 = arith.constant 1.000000e+00 : f32
    %cst_9 = arith.constant 0.000000e+00 : f32
    %18 = vector.broadcast %cst_8 : f32 to vector<1x1x256xf32>
    %19 = vector.broadcast %cst_9 : f32 to vector<1x1x256xf32>
    %20 = arith.select %17, %18, %19 : vector<1x1x256xi1>, vector<1x1x256xf32>
    %cst_10 = arith.constant 0.000000e+00 : f32
    %21 = vector.broadcast %cst_10 : f32 to vector<1x4x17xf32>
    %c0_11 = arith.constant 0 : index
    %c0_12 = arith.constant 0 : index
    %c111 = arith.constant 111 : index
    %22 = vector.load %arg7[%c0_11, %c0_12, %c111] : memref<1x4x512xf32, #tpu.memory_space<vmem>>, vector<1x4x17xf32>
    tpu.vector_store %arg7[%c0_11, %c0_12, %c111], %21 {strides = array<i32>} : memref<1x4x512xf32, #tpu.memory_space<vmem>>, vector<1x4x17xf32>,
    %c0_13 = arith.constant 0 : index
    %c0_14 = arith.constant 0 : index
    %c384 = arith.constant 384 : index
    %23 = vector.load %arg7[%c0_13, %c0_14, %c384] : memref<1x4x512xf32, #tpu.memory_space<vmem>>, vector<1x4x17xf32>
    tpu.vector_store %arg7[%c0_13, %c0_14, %c384], %21 {strides = array<i32>} : memref<1x4x512xf32, #tpu.memory_space<vmem>>, vector<1x4x17xf32>,
    %cst_15 = arith.constant 0.000000e+00 : f32
    %24 = vector.broadcast %cst_15 : f32 to vector<1x4x256xf32>
    %25 = arith.maximumf %0, %24 : vector<1x4x256xf32>
    %c0_16 = arith.constant 0 : index
    %c0_17 = arith.constant 0 : index
    %c128 = arith.constant 128 : index
    %26 = vector.load %arg7[%c0_16, %c0_17, %c128] : memref<1x4x512xf32, #tpu.memory_space<vmem>>, vector<1x4x256xf32>
    tpu.vector_store %arg7[%c0_16, %c0_17, %c128], %25 {strides = array<i32>} : memref<1x4x512xf32, #tpu.memory_space<vmem>>, vector<1x4x256xf32>,
    %c0_18 = arith.constant 0 : index
    %c0_19 = arith.constant 0 : index
    %27 = vector.load %arg2[%c0_18, %c0_19] : memref<4x36xf32, #tpu.memory_space<vmem>>, vector<4x36xf32>
    %c0_20 = arith.constant 0 : index
    %c0_21 = arith.constant 0 : index
    %28 = vector.load %arg3[%c0_20, %c0_21] : memref<4x1xf32, #tpu.memory_space<vmem>>, vector<4x1xf32>
    %29 = vector.shape_cast %28 : vector<4x1xf32> to vector<1x4x1xf32>
    %c0_22 = arith.constant 0 : index
    %c0_23 = arith.constant 0 : index
    %c111_24 = arith.constant 111 : index
    %30 = vector.load %arg7[%c0_22, %c0_23, %c111_24] : memref<1x4x512xf32, #tpu.memory_space<vmem>>, vector<1x4x256xf32>
    %31 = vector.broadcast %15 : vector<1x1x256xf32> to vector<1x4x256xf32>
    %32 = arith.mulf %30, %31 : vector<1x4x256xf32>
    %33 = vector.extract_strided_slice %27 {offsets = [0, 0], sizes = [4, 1], strides = [1, 1]} : vector<4x36xf32> to vector<4x1xf32>
    %34 = vector.shape_cast %33 : vector<4x1xf32> to vector<1x4x1xf32>
    %35 = vector.extract_strided_slice %32 {offsets = [0, 0, 0], sizes = [1, 1, 256], strides = [1, 1, 1]} : vector<1x4x256xf32> to vector<1x1x256xf32>
    %36 = vector.broadcast %34 : vector<1x4x1xf32> to vector<1x4x256xf32>
    %37 = vector.broadcast %35 : vector<1x1x256xf32> to vector<1x4x256xf32>
    %38 = arith.mulf %36, %37 : vector<1x4x256xf32>
    %39 = vector.extract_strided_slice %27 {offsets = [0, 1], sizes = [4, 1], strides = [1, 1]} : vector<4x36xf32> to vector<4x1xf32>
    %40 = vector.shape_cast %39 : vector<4x1xf32> to vector<1x4x1xf32>
    %41 = vector.extract_strided_slice %32 {offsets = [0, 1, 0], sizes = [1, 1, 256], strides = [1, 1, 1]} : vector<1x4x256xf32> to vector<1x1x256xf32>
    %42 = vector.broadcast %40 : vector<1x4x1xf32> to vector<1x4x256xf32>
    %43 = vector.broadcast %41 : vector<1x1x256xf32> to vector<1x4x256xf32>
    %44 = arith.mulf %42, %43 : vector<1x4x256xf32>
    %45 = vector.extract_strided_slice %27 {offsets = [0, 2], sizes = [4, 1], strides = [1, 1]} : vector<4x36xf32> to vector<4x1xf32>
    %46 = vector.shape_cast %45 : vector<4x1xf32> to vector<1x4x1xf32>
    %47 = vector.extract_strided_slice %32 {offsets = [0, 2, 0], sizes = [1, 1, 256], strides = [1, 1, 1]} : vector<1x4x256xf32> to vector<1x1x256xf32>
    %48 = vector.broadcast %46 : vector<1x4x1xf32> to vector<1x4x256xf32>
    %49 = vector.broadcast %47 : vector<1x1x256xf32> to vector<1x4x256xf32>
    %50 = arith.mulf %48, %49 : vector<1x4x256xf32>
    %51 = vector.extract_strided_slice %27 {offsets = [0, 3], sizes = [4, 1], strides = [1, 1]} : vector<4x36xf32> to vector<4x1xf32>
    %52 = vector.shape_cast %51 : vector<4x1xf32> to vector<1x4x1xf32>
    %53 = vector.extract_strided_slice %32 {offsets = [0, 3, 0], sizes = [1, 1, 256], strides = [1, 1, 1]} : vector<1x4x256xf32> to vector<1x1x256xf32>
    %54 = vector.broadcast %52 : vector<1x4x1xf32> to vector<1x4x256xf32>
    %55 = vector.broadcast %53 : vector<1x1x256xf32> to vector<1x4x256xf32>
    %56 = arith.mulf %54, %55 : vector<1x4x256xf32>
    %57 = arith.addf %38, %44 : vector<1x4x256xf32>
    %58 = arith.addf %50, %56 : vector<1x4x256xf32>
    %59 = arith.addf %57, %58 : vector<1x4x256xf32>
    %c0_25 = arith.constant 0 : index
    %c0_26 = arith.constant 0 : index
    %c112 = arith.constant 112 : index
    %60 = vector.load %arg7[%c0_25, %c0_26, %c112] : memref<1x4x512xf32, #tpu.memory_space<vmem>>, vector<1x4x256xf32>
    %61 = vector.extract_strided_slice %27 {offsets = [0, 4], sizes = [4, 1], strides = [1, 1]} : vector<4x36xf32> to vector<4x1xf32>
    %62 = vector.shape_cast %61 : vector<4x1xf32> to vector<1x4x1xf32>
    %63 = vector.extract_strided_slice %60 {offsets = [0, 0, 0], sizes = [1, 1, 256], strides = [1, 1, 1]} : vector<1x4x256xf32> to vector<1x1x256xf32>
    %64 = vector.broadcast %62 : vector<1x4x1xf32> to vector<1x4x256xf32>
    %65 = vector.broadcast %63 : vector<1x1x256xf32> to vector<1x4x256xf32>
    %66 = arith.mulf %64, %65 : vector<1x4x256xf32>
    %67 = vector.extract_strided_slice %27 {offsets = [0, 5], sizes = [4, 1], strides = [1, 1]} : vector<4x36xf32> to vector<4x1xf32>
    %68 = vector.shape_cast %67 : vector<4x1xf32> to vector<1x4x1xf32>
    %69 = vector.extract_strided_slice %60 {offsets = [0, 1, 0], sizes = [1, 1, 256], strides = [1, 1, 1]} : vector<1x4x256xf32> to vector<1x1x256xf32>
    %70 = vector.broadcast %68 : vector<1x4x1xf32> to vector<1x4x256xf32>
    %71 = vector.broadcast %69 : vector<1x1x256xf32> to vector<1x4x256xf32>
    %72 = arith.mulf %70, %71 : vector<1x4x256xf32>
    %73 = vector.extract_strided_slice %27 {offsets = [0, 6], sizes = [4, 1], strides = [1, 1]} : vector<4x36xf32> to vector<4x1xf32>
    %74 = vector.shape_cast %73 : vector<4x1xf32> to vector<1x4x1xf32>
    %75 = vector.extract_strided_slice %60 {offsets = [0, 2, 0], sizes = [1, 1, 256], strides = [1, 1, 1]} : vector<1x4x256xf32> to vector<1x1x256xf32>
    %76 = vector.broadcast %74 : vector<1x4x1xf32> to vector<1x4x256xf32>
    %77 = vector.broadcast %75 : vector<1x1x256xf32> to vector<1x4x256xf32>
    %78 = arith.mulf %76, %77 : vector<1x4x256xf32>
    %79 = vector.extract_strided_slice %27 {offsets = [0, 7], sizes = [4, 1], strides = [1, 1]} : vector<4x36xf32> to vector<4x1xf32>
    %80 = vector.shape_cast %79 : vector<4x1xf32> to vector<1x4x1xf32>
    %81 = vector.extract_strided_slice %60 {offsets = [0, 3, 0], sizes = [1, 1, 256], strides = [1, 1, 1]} : vector<1x4x256xf32> to vector<1x1x256xf32>
    %82 = vector.broadcast %80 : vector<1x4x1xf32> to vector<1x4x256xf32>
    %83 = vector.broadcast %81 : vector<1x1x256xf32> to vector<1x4x256xf32>
    %84 = arith.mulf %82, %83 : vector<1x4x256xf32>
    %85 = arith.addf %66, %72 : vector<1x4x256xf32>
    %86 = arith.addf %78, %84 : vector<1x4x256xf32>
    %87 = arith.addf %85, %86 : vector<1x4x256xf32>
    %c0_27 = arith.constant 0 : index
    %c0_28 = arith.constant 0 : index
    %c113 = arith.constant 113 : index
    %88 = vector.load %arg7[%c0_27, %c0_28, %c113] : memref<1x4x512xf32, #tpu.memory_space<vmem>>, vector<1x4x256xf32>
    %89 = vector.broadcast %20 : vector<1x1x256xf32> to vector<1x4x256xf32>
    %90 = arith.mulf %88, %89 : vector<1x4x256xf32>
    %91 = vector.extract_strided_slice %27 {offsets = [0, 8], sizes = [4, 1], strides = [1, 1]} : vector<4x36xf32> to vector<4x1xf32>
    %92 = vector.shape_cast %91 : vector<4x1xf32> to vector<1x4x1xf32>
    %93 = vector.extract_strided_slice %90 {offsets = [0, 0, 0], sizes = [1, 1, 256], strides = [1, 1, 1]} : vector<1x4x256xf32> to vector<1x1x256xf32>
    %94 = vector.broadcast %92 : vector<1x4x1xf32> to vector<1x4x256xf32>
    %95 = vector.broadcast %93 : vector<1x1x256xf32> to vector<1x4x256xf32>
    %96 = arith.mulf %94, %95 : vector<1x4x256xf32>
    %97 = vector.extract_strided_slice %27 {offsets = [0, 9], sizes = [4, 1], strides = [1, 1]} : vector<4x36xf32> to vector<4x1xf32>
    %98 = vector.shape_cast %97 : vector<4x1xf32> to vector<1x4x1xf32>
    %99 = vector.extract_strided_slice %90 {offsets = [0, 1, 0], sizes = [1, 1, 256], strides = [1, 1, 1]} : vector<1x4x256xf32> to vector<1x1x256xf32>
    %100 = vector.broadcast %98 : vector<1x4x1xf32> to vector<1x4x256xf32>
    %101 = vector.broadcast %99 : vector<1x1x256xf32> to vector<1x4x256xf32>
    %102 = arith.mulf %100, %101 : vector<1x4x256xf32>
    %103 = vector.extract_strided_slice %27 {offsets = [0, 10], sizes = [4, 1], strides = [1, 1]} : vector<4x36xf32> to vector<4x1xf32>
    %104 = vector.shape_cast %103 : vector<4x1xf32> to vector<1x4x1xf32>
    %105 = vector.extract_strided_slice %90 {offsets = [0, 2, 0], sizes = [1, 1, 256], strides = [1, 1, 1]} : vector<1x4x256xf32> to vector<1x1x256xf32>
    %106 = vector.broadcast %104 : vector<1x4x1xf32> to vector<1x4x256xf32>
    %107 = vector.broadcast %105 : vector<1x1x256xf32> to vector<1x4x256xf32>
    %108 = arith.mulf %106, %107 : vector<1x4x256xf32>
    %109 = vector.extract_strided_slice %27 {offsets = [0, 11], sizes = [4, 1], strides = [1, 1]} : vector<4x36xf32> to vector<4x1xf32>
    %110 = vector.shape_cast %109 : vector<4x1xf32> to vector<1x4x1xf32>
    %111 = vector.extract_strided_slice %90 {offsets = [0, 3, 0], sizes = [1, 1, 256], strides = [1, 1, 1]} : vector<1x4x256xf32> to vector<1x1x256xf32>
    %112 = vector.broadcast %110 : vector<1x4x1xf32> to vector<1x4x256xf32>
    %113 = vector.broadcast %111 : vector<1x1x256xf32> to vector<1x4x256xf32>
    %114 = arith.mulf %112, %113 : vector<1x4x256xf32>
    %115 = arith.addf %96, %102 : vector<1x4x256xf32>
    %116 = arith.addf %108, %114 : vector<1x4x256xf32>
    %117 = arith.addf %115, %116 : vector<1x4x256xf32>
    %118 = arith.addf %59, %87 : vector<1x4x256xf32>
    %119 = arith.addf %118, %117 : vector<1x4x256xf32>
    %c0_29 = arith.constant 0 : index
    %c0_30 = arith.constant 0 : index
    %c127 = arith.constant 127 : index
    %120 = vector.load %arg7[%c0_29, %c0_30, %c127] : memref<1x4x512xf32, #tpu.memory_space<vmem>>, vector<1x4x256xf32>
    %121 = vector.broadcast %15 : vector<1x1x256xf32> to vector<1x4x256xf32>
    %122 = arith.mulf %120, %121 : vector<1x4x256xf32>
    %123 = vector.extract_strided_slice %27 {offsets = [0, 12], sizes = [4, 1], strides = [1, 1]} : vector<4x36xf32> to vector<4x1xf32>
    %124 = vector.shape_cast %123 : vector<4x1xf32> to vector<1x4x1xf32>
    %125 = vector.extract_strided_slice %122 {offsets = [0, 0, 0], sizes = [1, 1, 256], strides = [1, 1, 1]} : vector<1x4x256xf32> to vector<1x1x256xf32>
    %126 = vector.broadcast %124 : vector<1x4x1xf32> to vector<1x4x256xf32>
    %127 = vector.broadcast %125 : vector<1x1x256xf32> to vector<1x4x256xf32>
    %128 = arith.mulf %126, %127 : vector<1x4x256xf32>
    %129 = vector.extract_strided_slice %27 {offsets = [0, 13], sizes = [4, 1], strides = [1, 1]} : vector<4x36xf32> to vector<4x1xf32>
    %130 = vector.shape_cast %129 : vector<4x1xf32> to vector<1x4x1xf32>
    %131 = vector.extract_strided_slice %122 {offsets = [0, 1, 0], sizes = [1, 1, 256], strides = [1, 1, 1]} : vector<1x4x256xf32> to vector<1x1x256xf32>
    %132 = vector.broadcast %130 : vector<1x4x1xf32> to vector<1x4x256xf32>
    %133 = vector.broadcast %131 : vector<1x1x256xf32> to vector<1x4x256xf32>
    %134 = arith.mulf %132, %133 : vector<1x4x256xf32>
    %135 = vector.extract_strided_slice %27 {offsets = [0, 14], sizes = [4, 1], strides = [1, 1]} : vector<4x36xf32> to vector<4x1xf32>
    %136 = vector.shape_cast %135 : vector<4x1xf32> to vector<1x4x1xf32>
    %137 = vector.extract_strided_slice %122 {offsets = [0, 2, 0], sizes = [1, 1, 256], strides = [1, 1, 1]} : vector<1x4x256xf32> to vector<1x1x256xf32>
    %138 = vector.broadcast %136 : vector<1x4x1xf32> to vector<1x4x256xf32>
    %139 = vector.broadcast %137 : vector<1x1x256xf32> to vector<1x4x256xf32>
    %140 = arith.mulf %138, %139 : vector<1x4x256xf32>
    %141 = vector.extract_strided_slice %27 {offsets = [0, 15], sizes = [4, 1], strides = [1, 1]} : vector<4x36xf32> to vector<4x1xf32>
    %142 = vector.shape_cast %141 : vector<4x1xf32> to vector<1x4x1xf32>
    %143 = vector.extract_strided_slice %122 {offsets = [0, 3, 0], sizes = [1, 1, 256], strides = [1, 1, 1]} : vector<1x4x256xf32> to vector<1x1x256xf32>
    %144 = vector.broadcast %142 : vector<1x4x1xf32> to vector<1x4x256xf32>
    %145 = vector.broadcast %143 : vector<1x1x256xf32> to vector<1x4x256xf32>
    %146 = arith.mulf %144, %145 : vector<1x4x256xf32>
    %147 = arith.addf %128, %134 : vector<1x4x256xf32>
    %148 = arith.addf %140, %146 : vector<1x4x256xf32>
    %149 = arith.addf %147, %148 : vector<1x4x256xf32>
    %c0_31 = arith.constant 0 : index
    %c0_32 = arith.constant 0 : index
    %c128_33 = arith.constant 128 : index
    %150 = vector.load %arg7[%c0_31, %c0_32, %c128_33] : memref<1x4x512xf32, #tpu.memory_space<vmem>>, vector<1x4x256xf32>
    %151 = vector.extract_strided_slice %27 {offsets = [0, 16], sizes = [4, 1], strides = [1, 1]} : vector<4x36xf32> to vector<4x1xf32>
    %152 = vector.shape_cast %151 : vector<4x1xf32> to vector<1x4x1xf32>
    %153 = vector.extract_strided_slice %150 {offsets = [0, 0, 0], sizes = [1, 1, 256], strides = [1, 1, 1]} : vector<1x4x256xf32> to vector<1x1x256xf32>
    %154 = vector.broadcast %152 : vector<1x4x1xf32> to vector<1x4x256xf32>
    %155 = vector.broadcast %153 : vector<1x1x256xf32> to vector<1x4x256xf32>
    %156 = arith.mulf %154, %155 : vector<1x4x256xf32>
    %157 = vector.extract_strided_slice %27 {offsets = [0, 17], sizes = [4, 1], strides = [1, 1]} : vector<4x36xf32> to vector<4x1xf32>
    %158 = vector.shape_cast %157 : vector<4x1xf32> to vector<1x4x1xf32>
    %159 = vector.extract_strided_slice %150 {offsets = [0, 1, 0], sizes = [1, 1, 256], strides = [1, 1, 1]} : vector<1x4x256xf32> to vector<1x1x256xf32>
    %160 = vector.broadcast %158 : vector<1x4x1xf32> to vector<1x4x256xf32>
    %161 = vector.broadcast %159 : vector<1x1x256xf32> to vector<1x4x256xf32>
    %162 = arith.mulf %160, %161 : vector<1x4x256xf32>
    %163 = vector.extract_strided_slice %27 {offsets = [0, 18], sizes = [4, 1], strides = [1, 1]} : vector<4x36xf32> to vector<4x1xf32>
    %164 = vector.shape_cast %163 : vector<4x1xf32> to vector<1x4x1xf32>
    %165 = vector.extract_strided_slice %150 {offsets = [0, 2, 0], sizes = [1, 1, 256], strides = [1, 1, 1]} : vector<1x4x256xf32> to vector<1x1x256xf32>
    %166 = vector.broadcast %164 : vector<1x4x1xf32> to vector<1x4x256xf32>
    %167 = vector.broadcast %165 : vector<1x1x256xf32> to vector<1x4x256xf32>
    %168 = arith.mulf %166, %167 : vector<1x4x256xf32>
    %169 = vector.extract_strided_slice %27 {offsets = [0, 19], sizes = [4, 1], strides = [1, 1]} : vector<4x36xf32> to vector<4x1xf32>
    %170 = vector.shape_cast %169 : vector<4x1xf32> to vector<1x4x1xf32>
    %171 = vector.extract_strided_slice %150 {offsets = [0, 3, 0], sizes = [1, 1, 256], strides = [1, 1, 1]} : vector<1x4x256xf32> to vector<1x1x256xf32>
    %172 = vector.broadcast %170 : vector<1x4x1xf32> to vector<1x4x256xf32>
    %173 = vector.broadcast %171 : vector<1x1x256xf32> to vector<1x4x256xf32>
    %174 = arith.mulf %172, %173 : vector<1x4x256xf32>
    %175 = arith.addf %156, %162 : vector<1x4x256xf32>
    %176 = arith.addf %168, %174 : vector<1x4x256xf32>
    %177 = arith.addf %175, %176 : vector<1x4x256xf32>
    %c0_34 = arith.constant 0 : index
    %c0_35 = arith.constant 0 : index
    %c129 = arith.constant 129 : index
    %178 = vector.load %arg7[%c0_34, %c0_35, %c129] : memref<1x4x512xf32, #tpu.memory_space<vmem>>, vector<1x4x256xf32>
    %179 = vector.broadcast %20 : vector<1x1x256xf32> to vector<1x4x256xf32>
    %180 = arith.mulf %178, %179 : vector<1x4x256xf32>
    %181 = vector.extract_strided_slice %27 {offsets = [0, 20], sizes = [4, 1], strides = [1, 1]} : vector<4x36xf32> to vector<4x1xf32>
    %182 = vector.shape_cast %181 : vector<4x1xf32> to vector<1x4x1xf32>
    %183 = vector.extract_strided_slice %180 {offsets = [0, 0, 0], sizes = [1, 1, 256], strides = [1, 1, 1]} : vector<1x4x256xf32> to vector<1x1x256xf32>
    %184 = vector.broadcast %182 : vector<1x4x1xf32> to vector<1x4x256xf32>
    %185 = vector.broadcast %183 : vector<1x1x256xf32> to vector<1x4x256xf32>
    %186 = arith.mulf %184, %185 : vector<1x4x256xf32>
    %187 = vector.extract_strided_slice %27 {offsets = [0, 21], sizes = [4, 1], strides = [1, 1]} : vector<4x36xf32> to vector<4x1xf32>
    %188 = vector.shape_cast %187 : vector<4x1xf32> to vector<1x4x1xf32>
    %189 = vector.extract_strided_slice %180 {offsets = [0, 1, 0], sizes = [1, 1, 256], strides = [1, 1, 1]} : vector<1x4x256xf32> to vector<1x1x256xf32>
    %190 = vector.broadcast %188 : vector<1x4x1xf32> to vector<1x4x256xf32>
    %191 = vector.broadcast %189 : vector<1x1x256xf32> to vector<1x4x256xf32>
    %192 = arith.mulf %190, %191 : vector<1x4x256xf32>
    %193 = vector.extract_strided_slice %27 {offsets = [0, 22], sizes = [4, 1], strides = [1, 1]} : vector<4x36xf32> to vector<4x1xf32>
    %194 = vector.shape_cast %193 : vector<4x1xf32> to vector<1x4x1xf32>
    %195 = vector.extract_strided_slice %180 {offsets = [0, 2, 0], sizes = [1, 1, 256], strides = [1, 1, 1]} : vector<1x4x256xf32> to vector<1x1x256xf32>
    %196 = vector.broadcast %194 : vector<1x4x1xf32> to vector<1x4x256xf32>
    %197 = vector.broadcast %195 : vector<1x1x256xf32> to vector<1x4x256xf32>
    %198 = arith.mulf %196, %197 : vector<1x4x256xf32>
    %199 = vector.extract_strided_slice %27 {offsets = [0, 23], sizes = [4, 1], strides = [1, 1]} : vector<4x36xf32> to vector<4x1xf32>
    %200 = vector.shape_cast %199 : vector<4x1xf32> to vector<1x4x1xf32>
    %201 = vector.extract_strided_slice %180 {offsets = [0, 3, 0], sizes = [1, 1, 256], strides = [1, 1, 1]} : vector<1x4x256xf32> to vector<1x1x256xf32>
    %202 = vector.broadcast %200 : vector<1x4x1xf32> to vector<1x4x256xf32>
    %203 = vector.broadcast %201 : vector<1x1x256xf32> to vector<1x4x256xf32>
    %204 = arith.mulf %202, %203 : vector<1x4x256xf32>
    %205 = arith.addf %186, %192 : vector<1x4x256xf32>
    %206 = arith.addf %198, %204 : vector<1x4x256xf32>
    %207 = arith.addf %205, %206 : vector<1x4x256xf32>
    %208 = arith.addf %149, %177 : vector<1x4x256xf32>
    %209 = arith.addf %208, %207 : vector<1x4x256xf32>
    %c0_36 = arith.constant 0 : index
    %c0_37 = arith.constant 0 : index
    %c143 = arith.constant 143 : index
    %210 = vector.load %arg7[%c0_36, %c0_37, %c143] : memref<1x4x512xf32, #tpu.memory_space<vmem>>, vector<1x4x256xf32>
    %211 = vector.broadcast %15 : vector<1x1x256xf32> to vector<1x4x256xf32>
    %212 = arith.mulf %210, %211 : vector<1x4x256xf32>
    %213 = vector.extract_strided_slice %27 {offsets = [0, 24], sizes = [4, 1], strides = [1, 1]} : vector<4x36xf32> to vector<4x1xf32>
    %214 = vector.shape_cast %213 : vector<4x1xf32> to vector<1x4x1xf32>
    %215 = vector.extract_strided_slice %212 {offsets = [0, 0, 0], sizes = [1, 1, 256], strides = [1, 1, 1]} : vector<1x4x256xf32> to vector<1x1x256xf32>
    %216 = vector.broadcast %214 : vector<1x4x1xf32> to vector<1x4x256xf32>
    %217 = vector.broadcast %215 : vector<1x1x256xf32> to vector<1x4x256xf32>
    %218 = arith.mulf %216, %217 : vector<1x4x256xf32>
    %219 = vector.extract_strided_slice %27 {offsets = [0, 25], sizes = [4, 1], strides = [1, 1]} : vector<4x36xf32> to vector<4x1xf32>
    %220 = vector.shape_cast %219 : vector<4x1xf32> to vector<1x4x1xf32>
    %221 = vector.extract_strided_slice %212 {offsets = [0, 1, 0], sizes = [1, 1, 256], strides = [1, 1, 1]} : vector<1x4x256xf32> to vector<1x1x256xf32>
    %222 = vector.broadcast %220 : vector<1x4x1xf32> to vector<1x4x256xf32>
    %223 = vector.broadcast %221 : vector<1x1x256xf32> to vector<1x4x256xf32>
    %224 = arith.mulf %222, %223 : vector<1x4x256xf32>
    %225 = vector.extract_strided_slice %27 {offsets = [0, 26], sizes = [4, 1], strides = [1, 1]} : vector<4x36xf32> to vector<4x1xf32>
    %226 = vector.shape_cast %225 : vector<4x1xf32> to vector<1x4x1xf32>
    %227 = vector.extract_strided_slice %212 {offsets = [0, 2, 0], sizes = [1, 1, 256], strides = [1, 1, 1]} : vector<1x4x256xf32> to vector<1x1x256xf32>
    %228 = vector.broadcast %226 : vector<1x4x1xf32> to vector<1x4x256xf32>
    %229 = vector.broadcast %227 : vector<1x1x256xf32> to vector<1x4x256xf32>
    %230 = arith.mulf %228, %229 : vector<1x4x256xf32>
    %231 = vector.extract_strided_slice %27 {offsets = [0, 27], sizes = [4, 1], strides = [1, 1]} : vector<4x36xf32> to vector<4x1xf32>
    %232 = vector.shape_cast %231 : vector<4x1xf32> to vector<1x4x1xf32>
    %233 = vector.extract_strided_slice %212 {offsets = [0, 3, 0], sizes = [1, 1, 256], strides = [1, 1, 1]} : vector<1x4x256xf32> to vector<1x1x256xf32>
    %234 = vector.broadcast %232 : vector<1x4x1xf32> to vector<1x4x256xf32>
    %235 = vector.broadcast %233 : vector<1x1x256xf32> to vector<1x4x256xf32>
    %236 = arith.mulf %234, %235 : vector<1x4x256xf32>
    %237 = arith.addf %218, %224 : vector<1x4x256xf32>
    %238 = arith.addf %230, %236 : vector<1x4x256xf32>
    %239 = arith.addf %237, %238 : vector<1x4x256xf32>
    %c0_38 = arith.constant 0 : index
    %c0_39 = arith.constant 0 : index
    %c144 = arith.constant 144 : index
    %240 = vector.load %arg7[%c0_38, %c0_39, %c144] : memref<1x4x512xf32, #tpu.memory_space<vmem>>, vector<1x4x256xf32>
    %241 = vector.extract_strided_slice %27 {offsets = [0, 28], sizes = [4, 1], strides = [1, 1]} : vector<4x36xf32> to vector<4x1xf32>
    %242 = vector.shape_cast %241 : vector<4x1xf32> to vector<1x4x1xf32>
    %243 = vector.extract_strided_slice %240 {offsets = [0, 0, 0], sizes = [1, 1, 256], strides = [1, 1, 1]} : vector<1x4x256xf32> to vector<1x1x256xf32>
    %244 = vector.broadcast %242 : vector<1x4x1xf32> to vector<1x4x256xf32>
    %245 = vector.broadcast %243 : vector<1x1x256xf32> to vector<1x4x256xf32>
    %246 = arith.mulf %244, %245 : vector<1x4x256xf32>
    %247 = vector.extract_strided_slice %27 {offsets = [0, 29], sizes = [4, 1], strides = [1, 1]} : vector<4x36xf32> to vector<4x1xf32>
    %248 = vector.shape_cast %247 : vector<4x1xf32> to vector<1x4x1xf32>
    %249 = vector.extract_strided_slice %240 {offsets = [0, 1, 0], sizes = [1, 1, 256], strides = [1, 1, 1]} : vector<1x4x256xf32> to vector<1x1x256xf32>
    %250 = vector.broadcast %248 : vector<1x4x1xf32> to vector<1x4x256xf32>
    %251 = vector.broadcast %249 : vector<1x1x256xf32> to vector<1x4x256xf32>
    %252 = arith.mulf %250, %251 : vector<1x4x256xf32>
    %253 = vector.extract_strided_slice %27 {offsets = [0, 30], sizes = [4, 1], strides = [1, 1]} : vector<4x36xf32> to vector<4x1xf32>
    %254 = vector.shape_cast %253 : vector<4x1xf32> to vector<1x4x1xf32>
    %255 = vector.extract_strided_slice %240 {offsets = [0, 2, 0], sizes = [1, 1, 256], strides = [1, 1, 1]} : vector<1x4x256xf32> to vector<1x1x256xf32>
    %256 = vector.broadcast %254 : vector<1x4x1xf32> to vector<1x4x256xf32>
    %257 = vector.broadcast %255 : vector<1x1x256xf32> to vector<1x4x256xf32>
    %258 = arith.mulf %256, %257 : vector<1x4x256xf32>
    %259 = vector.extract_strided_slice %27 {offsets = [0, 31], sizes = [4, 1], strides = [1, 1]} : vector<4x36xf32> to vector<4x1xf32>
    %260 = vector.shape_cast %259 : vector<4x1xf32> to vector<1x4x1xf32>
    %261 = vector.extract_strided_slice %240 {offsets = [0, 3, 0], sizes = [1, 1, 256], strides = [1, 1, 1]} : vector<1x4x256xf32> to vector<1x1x256xf32>
    %262 = vector.broadcast %260 : vector<1x4x1xf32> to vector<1x4x256xf32>
    %263 = vector.broadcast %261 : vector<1x1x256xf32> to vector<1x4x256xf32>
    %264 = arith.mulf %262, %263 : vector<1x4x256xf32>
    %265 = arith.addf %246, %252 : vector<1x4x256xf32>
    %266 = arith.addf %258, %264 : vector<1x4x256xf32>
    %267 = arith.addf %265, %266 : vector<1x4x256xf32>
    %c0_40 = arith.constant 0 : index
    %c0_41 = arith.constant 0 : index
    %c145 = arith.constant 145 : index
    %268 = vector.load %arg7[%c0_40, %c0_41, %c145] : memref<1x4x512xf32, #tpu.memory_space<vmem>>, vector<1x4x256xf32>
    %269 = vector.broadcast %20 : vector<1x1x256xf32> to vector<1x4x256xf32>
    %270 = arith.mulf %268, %269 : vector<1x4x256xf32>
    %271 = vector.extract_strided_slice %27 {offsets = [0, 32], sizes = [4, 1], strides = [1, 1]} : vector<4x36xf32> to vector<4x1xf32>
    %272 = vector.shape_cast %271 : vector<4x1xf32> to vector<1x4x1xf32>
    %273 = vector.extract_strided_slice %270 {offsets = [0, 0, 0], sizes = [1, 1, 256], strides = [1, 1, 1]} : vector<1x4x256xf32> to vector<1x1x256xf32>
    %274 = vector.broadcast %272 : vector<1x4x1xf32> to vector<1x4x256xf32>
    %275 = vector.broadcast %273 : vector<1x1x256xf32> to vector<1x4x256xf32>
    %276 = arith.mulf %274, %275 : vector<1x4x256xf32>
    %277 = vector.extract_strided_slice %27 {offsets = [0, 33], sizes = [4, 1], strides = [1, 1]} : vector<4x36xf32> to vector<4x1xf32>
    %278 = vector.shape_cast %277 : vector<4x1xf32> to vector<1x4x1xf32>
    %279 = vector.extract_strided_slice %270 {offsets = [0, 1, 0], sizes = [1, 1, 256], strides = [1, 1, 1]} : vector<1x4x256xf32> to vector<1x1x256xf32>
    %280 = vector.broadcast %278 : vector<1x4x1xf32> to vector<1x4x256xf32>
    %281 = vector.broadcast %279 : vector<1x1x256xf32> to vector<1x4x256xf32>
    %282 = arith.mulf %280, %281 : vector<1x4x256xf32>
    %283 = vector.extract_strided_slice %27 {offsets = [0, 34], sizes = [4, 1], strides = [1, 1]} : vector<4x36xf32> to vector<4x1xf32>
    %284 = vector.shape_cast %283 : vector<4x1xf32> to vector<1x4x1xf32>
    %285 = vector.extract_strided_slice %270 {offsets = [0, 2, 0], sizes = [1, 1, 256], strides = [1, 1, 1]} : vector<1x4x256xf32> to vector<1x1x256xf32>
    %286 = vector.broadcast %284 : vector<1x4x1xf32> to vector<1x4x256xf32>
    %287 = vector.broadcast %285 : vector<1x1x256xf32> to vector<1x4x256xf32>
    %288 = arith.mulf %286, %287 : vector<1x4x256xf32>
    %289 = vector.extract_strided_slice %27 {offsets = [0, 35], sizes = [4, 1], strides = [1, 1]} : vector<4x36xf32> to vector<4x1xf32>
    %290 = vector.shape_cast %289 : vector<4x1xf32> to vector<1x4x1xf32>
    %291 = vector.extract_strided_slice %270 {offsets = [0, 3, 0], sizes = [1, 1, 256], strides = [1, 1, 1]} : vector<1x4x256xf32> to vector<1x1x256xf32>
    %292 = vector.broadcast %290 : vector<1x4x1xf32> to vector<1x4x256xf32>
    %293 = vector.broadcast %291 : vector<1x1x256xf32> to vector<1x4x256xf32>
    %294 = arith.mulf %292, %293 : vector<1x4x256xf32>
    %295 = arith.addf %276, %282 : vector<1x4x256xf32>
    %296 = arith.addf %288, %294 : vector<1x4x256xf32>
    %297 = arith.addf %295, %296 : vector<1x4x256xf32>
    %298 = arith.addf %239, %267 : vector<1x4x256xf32>
    %299 = arith.addf %298, %297 : vector<1x4x256xf32>
    %300 = arith.addf %119, %209 : vector<1x4x256xf32>
    %301 = arith.addf %300, %299 : vector<1x4x256xf32>
    %302 = vector.broadcast %29 : vector<1x4x1xf32> to vector<1x4x256xf32>
    %303 = arith.addf %301, %302 : vector<1x4x256xf32>
    %cst_42 = arith.constant 0.000000e+00 : f32
    %304 = vector.broadcast %cst_42 : f32 to vector<1x4x256xf32>
    %305 = arith.maximumf %303, %304 : vector<1x4x256xf32>
    %c0_43 = arith.constant 0 : index
    %c0_44 = arith.constant 0 : index
    %c128_45 = arith.constant 128 : index
    %306 = vector.load %arg7[%c0_43, %c0_44, %c128_45] : memref<1x4x512xf32, #tpu.memory_space<vmem>>, vector<1x4x256xf32>
    tpu.vector_store %arg7[%c0_43, %c0_44, %c128_45], %305 {strides = array<i32>} : memref<1x4x512xf32, #tpu.memory_space<vmem>>, vector<1x4x256xf32>,
    %c0_46 = arith.constant 0 : index
    %c0_47 = arith.constant 0 : index
    %307 = vector.load %arg4[%c0_46, %c0_47] : memref<4x36xf32, #tpu.memory_space<vmem>>, vector<4x36xf32>
    %c0_48 = arith.constant 0 : index
    %c0_49 = arith.constant 0 : index
    %308 = vector.load %arg5[%c0_48, %c0_49] : memref<4x1xf32, #tpu.memory_space<vmem>>, vector<4x1xf32>
    %309 = vector.shape_cast %308 : vector<4x1xf32> to vector<1x4x1xf32>
    %c0_50 = arith.constant 0 : index
    %c0_51 = arith.constant 0 : index
    %c111_52 = arith.constant 111 : index
    %310 = vector.load %arg7[%c0_50, %c0_51, %c111_52] : memref<1x4x512xf32, #tpu.memory_space<vmem>>, vector<1x4x256xf32>
    %311 = vector.broadcast %15 : vector<1x1x256xf32> to vector<1x4x256xf32>
    %312 = arith.mulf %310, %311 : vector<1x4x256xf32>
    %313 = vector.extract_strided_slice %307 {offsets = [0, 0], sizes = [4, 1], strides = [1, 1]} : vector<4x36xf32> to vector<4x1xf32>
    %314 = vector.shape_cast %313 : vector<4x1xf32> to vector<1x4x1xf32>
    %315 = vector.extract_strided_slice %312 {offsets = [0, 0, 0], sizes = [1, 1, 256], strides = [1, 1, 1]} : vector<1x4x256xf32> to vector<1x1x256xf32>
    %316 = vector.broadcast %314 : vector<1x4x1xf32> to vector<1x4x256xf32>
    %317 = vector.broadcast %315 : vector<1x1x256xf32> to vector<1x4x256xf32>
    %318 = arith.mulf %316, %317 : vector<1x4x256xf32>
    %319 = vector.extract_strided_slice %307 {offsets = [0, 1], sizes = [4, 1], strides = [1, 1]} : vector<4x36xf32> to vector<4x1xf32>
    %320 = vector.shape_cast %319 : vector<4x1xf32> to vector<1x4x1xf32>
    %321 = vector.extract_strided_slice %312 {offsets = [0, 1, 0], sizes = [1, 1, 256], strides = [1, 1, 1]} : vector<1x4x256xf32> to vector<1x1x256xf32>
    %322 = vector.broadcast %320 : vector<1x4x1xf32> to vector<1x4x256xf32>
    %323 = vector.broadcast %321 : vector<1x1x256xf32> to vector<1x4x256xf32>
    %324 = arith.mulf %322, %323 : vector<1x4x256xf32>
    %325 = vector.extract_strided_slice %307 {offsets = [0, 2], sizes = [4, 1], strides = [1, 1]} : vector<4x36xf32> to vector<4x1xf32>
    %326 = vector.shape_cast %325 : vector<4x1xf32> to vector<1x4x1xf32>
    %327 = vector.extract_strided_slice %312 {offsets = [0, 2, 0], sizes = [1, 1, 256], strides = [1, 1, 1]} : vector<1x4x256xf32> to vector<1x1x256xf32>
    %328 = vector.broadcast %326 : vector<1x4x1xf32> to vector<1x4x256xf32>
    %329 = vector.broadcast %327 : vector<1x1x256xf32> to vector<1x4x256xf32>
    %330 = arith.mulf %328, %329 : vector<1x4x256xf32>
    %331 = vector.extract_strided_slice %307 {offsets = [0, 3], sizes = [4, 1], strides = [1, 1]} : vector<4x36xf32> to vector<4x1xf32>
    %332 = vector.shape_cast %331 : vector<4x1xf32> to vector<1x4x1xf32>
    %333 = vector.extract_strided_slice %312 {offsets = [0, 3, 0], sizes = [1, 1, 256], strides = [1, 1, 1]} : vector<1x4x256xf32> to vector<1x1x256xf32>
    %334 = vector.broadcast %332 : vector<1x4x1xf32> to vector<1x4x256xf32>
    %335 = vector.broadcast %333 : vector<1x1x256xf32> to vector<1x4x256xf32>
    %336 = arith.mulf %334, %335 : vector<1x4x256xf32>
    %337 = arith.addf %318, %324 : vector<1x4x256xf32>
    %338 = arith.addf %330, %336 : vector<1x4x256xf32>
    %339 = arith.addf %337, %338 : vector<1x4x256xf32>
    %c0_53 = arith.constant 0 : index
    %c0_54 = arith.constant 0 : index
    %c112_55 = arith.constant 112 : index
    %340 = vector.load %arg7[%c0_53, %c0_54, %c112_55] : memref<1x4x512xf32, #tpu.memory_space<vmem>>, vector<1x4x256xf32>
    %341 = vector.extract_strided_slice %307 {offsets = [0, 4], sizes = [4, 1], strides = [1, 1]} : vector<4x36xf32> to vector<4x1xf32>
    %342 = vector.shape_cast %341 : vector<4x1xf32> to vector<1x4x1xf32>
    %343 = vector.extract_strided_slice %340 {offsets = [0, 0, 0], sizes = [1, 1, 256], strides = [1, 1, 1]} : vector<1x4x256xf32> to vector<1x1x256xf32>
    %344 = vector.broadcast %342 : vector<1x4x1xf32> to vector<1x4x256xf32>
    %345 = vector.broadcast %343 : vector<1x1x256xf32> to vector<1x4x256xf32>
    %346 = arith.mulf %344, %345 : vector<1x4x256xf32>
    %347 = vector.extract_strided_slice %307 {offsets = [0, 5], sizes = [4, 1], strides = [1, 1]} : vector<4x36xf32> to vector<4x1xf32>
    %348 = vector.shape_cast %347 : vector<4x1xf32> to vector<1x4x1xf32>
    %349 = vector.extract_strided_slice %340 {offsets = [0, 1, 0], sizes = [1, 1, 256], strides = [1, 1, 1]} : vector<1x4x256xf32> to vector<1x1x256xf32>
    %350 = vector.broadcast %348 : vector<1x4x1xf32> to vector<1x4x256xf32>
    %351 = vector.broadcast %349 : vector<1x1x256xf32> to vector<1x4x256xf32>
    %352 = arith.mulf %350, %351 : vector<1x4x256xf32>
    %353 = vector.extract_strided_slice %307 {offsets = [0, 6], sizes = [4, 1], strides = [1, 1]} : vector<4x36xf32> to vector<4x1xf32>
    %354 = vector.shape_cast %353 : vector<4x1xf32> to vector<1x4x1xf32>
    %355 = vector.extract_strided_slice %340 {offsets = [0, 2, 0], sizes = [1, 1, 256], strides = [1, 1, 1]} : vector<1x4x256xf32> to vector<1x1x256xf32>
    %356 = vector.broadcast %354 : vector<1x4x1xf32> to vector<1x4x256xf32>
    %357 = vector.broadcast %355 : vector<1x1x256xf32> to vector<1x4x256xf32>
    %358 = arith.mulf %356, %357 : vector<1x4x256xf32>
    %359 = vector.extract_strided_slice %307 {offsets = [0, 7], sizes = [4, 1], strides = [1, 1]} : vector<4x36xf32> to vector<4x1xf32>
    %360 = vector.shape_cast %359 : vector<4x1xf32> to vector<1x4x1xf32>
    %361 = vector.extract_strided_slice %340 {offsets = [0, 3, 0], sizes = [1, 1, 256], strides = [1, 1, 1]} : vector<1x4x256xf32> to vector<1x1x256xf32>
    %362 = vector.broadcast %360 : vector<1x4x1xf32> to vector<1x4x256xf32>
    %363 = vector.broadcast %361 : vector<1x1x256xf32> to vector<1x4x256xf32>
    %364 = arith.mulf %362, %363 : vector<1x4x256xf32>
    %365 = arith.addf %346, %352 : vector<1x4x256xf32>
    %366 = arith.addf %358, %364 : vector<1x4x256xf32>
    %367 = arith.addf %365, %366 : vector<1x4x256xf32>
    %c0_56 = arith.constant 0 : index
    %c0_57 = arith.constant 0 : index
    %c113_58 = arith.constant 113 : index
    %368 = vector.load %arg7[%c0_56, %c0_57, %c113_58] : memref<1x4x512xf32, #tpu.memory_space<vmem>>, vector<1x4x256xf32>
    %369 = vector.broadcast %20 : vector<1x1x256xf32> to vector<1x4x256xf32>
    %370 = arith.mulf %368, %369 : vector<1x4x256xf32>
    %371 = vector.extract_strided_slice %307 {offsets = [0, 8], sizes = [4, 1], strides = [1, 1]} : vector<4x36xf32> to vector<4x1xf32>
    %372 = vector.shape_cast %371 : vector<4x1xf32> to vector<1x4x1xf32>
    %373 = vector.extract_strided_slice %370 {offsets = [0, 0, 0], sizes = [1, 1, 256], strides = [1, 1, 1]} : vector<1x4x256xf32> to vector<1x1x256xf32>
    %374 = vector.broadcast %372 : vector<1x4x1xf32> to vector<1x4x256xf32>
    %375 = vector.broadcast %373 : vector<1x1x256xf32> to vector<1x4x256xf32>
    %376 = arith.mulf %374, %375 : vector<1x4x256xf32>
    %377 = vector.extract_strided_slice %307 {offsets = [0, 9], sizes = [4, 1], strides = [1, 1]} : vector<4x36xf32> to vector<4x1xf32>
    %378 = vector.shape_cast %377 : vector<4x1xf32> to vector<1x4x1xf32>
    %379 = vector.extract_strided_slice %370 {offsets = [0, 1, 0], sizes = [1, 1, 256], strides = [1, 1, 1]} : vector<1x4x256xf32> to vector<1x1x256xf32>
    %380 = vector.broadcast %378 : vector<1x4x1xf32> to vector<1x4x256xf32>
    %381 = vector.broadcast %379 : vector<1x1x256xf32> to vector<1x4x256xf32>
    %382 = arith.mulf %380, %381 : vector<1x4x256xf32>
    %383 = vector.extract_strided_slice %307 {offsets = [0, 10], sizes = [4, 1], strides = [1, 1]} : vector<4x36xf32> to vector<4x1xf32>
    %384 = vector.shape_cast %383 : vector<4x1xf32> to vector<1x4x1xf32>
    %385 = vector.extract_strided_slice %370 {offsets = [0, 2, 0], sizes = [1, 1, 256], strides = [1, 1, 1]} : vector<1x4x256xf32> to vector<1x1x256xf32>
    %386 = vector.broadcast %384 : vector<1x4x1xf32> to vector<1x4x256xf32>
    %387 = vector.broadcast %385 : vector<1x1x256xf32> to vector<1x4x256xf32>
    %388 = arith.mulf %386, %387 : vector<1x4x256xf32>
    %389 = vector.extract_strided_slice %307 {offsets = [0, 11], sizes = [4, 1], strides = [1, 1]} : vector<4x36xf32> to vector<4x1xf32>
    %390 = vector.shape_cast %389 : vector<4x1xf32> to vector<1x4x1xf32>
    %391 = vector.extract_strided_slice %370 {offsets = [0, 3, 0], sizes = [1, 1, 256], strides = [1, 1, 1]} : vector<1x4x256xf32> to vector<1x1x256xf32>
    %392 = vector.broadcast %390 : vector<1x4x1xf32> to vector<1x4x256xf32>
    %393 = vector.broadcast %391 : vector<1x1x256xf32> to vector<1x4x256xf32>
    %394 = arith.mulf %392, %393 : vector<1x4x256xf32>
    %395 = arith.addf %376, %382 : vector<1x4x256xf32>
    %396 = arith.addf %388, %394 : vector<1x4x256xf32>
    %397 = arith.addf %395, %396 : vector<1x4x256xf32>
    %398 = arith.addf %339, %367 : vector<1x4x256xf32>
    %399 = arith.addf %398, %397 : vector<1x4x256xf32>
    %c0_59 = arith.constant 0 : index
    %c0_60 = arith.constant 0 : index
    %c127_61 = arith.constant 127 : index
    %400 = vector.load %arg7[%c0_59, %c0_60, %c127_61] : memref<1x4x512xf32, #tpu.memory_space<vmem>>, vector<1x4x256xf32>
    %401 = vector.broadcast %15 : vector<1x1x256xf32> to vector<1x4x256xf32>
    %402 = arith.mulf %400, %401 : vector<1x4x256xf32>
    %403 = vector.extract_strided_slice %307 {offsets = [0, 12], sizes = [4, 1], strides = [1, 1]} : vector<4x36xf32> to vector<4x1xf32>
    %404 = vector.shape_cast %403 : vector<4x1xf32> to vector<1x4x1xf32>
    %405 = vector.extract_strided_slice %402 {offsets = [0, 0, 0], sizes = [1, 1, 256], strides = [1, 1, 1]} : vector<1x4x256xf32> to vector<1x1x256xf32>
    %406 = vector.broadcast %404 : vector<1x4x1xf32> to vector<1x4x256xf32>
    %407 = vector.broadcast %405 : vector<1x1x256xf32> to vector<1x4x256xf32>
    %408 = arith.mulf %406, %407 : vector<1x4x256xf32>
    %409 = vector.extract_strided_slice %307 {offsets = [0, 13], sizes = [4, 1], strides = [1, 1]} : vector<4x36xf32> to vector<4x1xf32>
    %410 = vector.shape_cast %409 : vector<4x1xf32> to vector<1x4x1xf32>
    %411 = vector.extract_strided_slice %402 {offsets = [0, 1, 0], sizes = [1, 1, 256], strides = [1, 1, 1]} : vector<1x4x256xf32> to vector<1x1x256xf32>
    %412 = vector.broadcast %410 : vector<1x4x1xf32> to vector<1x4x256xf32>
    %413 = vector.broadcast %411 : vector<1x1x256xf32> to vector<1x4x256xf32>
    %414 = arith.mulf %412, %413 : vector<1x4x256xf32>
    %415 = vector.extract_strided_slice %307 {offsets = [0, 14], sizes = [4, 1], strides = [1, 1]} : vector<4x36xf32> to vector<4x1xf32>
    %416 = vector.shape_cast %415 : vector<4x1xf32> to vector<1x4x1xf32>
    %417 = vector.extract_strided_slice %402 {offsets = [0, 2, 0], sizes = [1, 1, 256], strides = [1, 1, 1]} : vector<1x4x256xf32> to vector<1x1x256xf32>
    %418 = vector.broadcast %416 : vector<1x4x1xf32> to vector<1x4x256xf32>
    %419 = vector.broadcast %417 : vector<1x1x256xf32> to vector<1x4x256xf32>
    %420 = arith.mulf %418, %419 : vector<1x4x256xf32>
    %421 = vector.extract_strided_slice %307 {offsets = [0, 15], sizes = [4, 1], strides = [1, 1]} : vector<4x36xf32> to vector<4x1xf32>
    %422 = vector.shape_cast %421 : vector<4x1xf32> to vector<1x4x1xf32>
    %423 = vector.extract_strided_slice %402 {offsets = [0, 3, 0], sizes = [1, 1, 256], strides = [1, 1, 1]} : vector<1x4x256xf32> to vector<1x1x256xf32>
    %424 = vector.broadcast %422 : vector<1x4x1xf32> to vector<1x4x256xf32>
    %425 = vector.broadcast %423 : vector<1x1x256xf32> to vector<1x4x256xf32>
    %426 = arith.mulf %424, %425 : vector<1x4x256xf32>
    %427 = arith.addf %408, %414 : vector<1x4x256xf32>
    %428 = arith.addf %420, %426 : vector<1x4x256xf32>
    %429 = arith.addf %427, %428 : vector<1x4x256xf32>
    %c0_62 = arith.constant 0 : index
    %c0_63 = arith.constant 0 : index
    %c128_64 = arith.constant 128 : index
    %430 = vector.load %arg7[%c0_62, %c0_63, %c128_64] : memref<1x4x512xf32, #tpu.memory_space<vmem>>, vector<1x4x256xf32>
    %431 = vector.extract_strided_slice %307 {offsets = [0, 16], sizes = [4, 1], strides = [1, 1]} : vector<4x36xf32> to vector<4x1xf32>
    %432 = vector.shape_cast %431 : vector<4x1xf32> to vector<1x4x1xf32>
    %433 = vector.extract_strided_slice %430 {offsets = [0, 0, 0], sizes = [1, 1, 256], strides = [1, 1, 1]} : vector<1x4x256xf32> to vector<1x1x256xf32>
    %434 = vector.broadcast %432 : vector<1x4x1xf32> to vector<1x4x256xf32>
    %435 = vector.broadcast %433 : vector<1x1x256xf32> to vector<1x4x256xf32>
    %436 = arith.mulf %434, %435 : vector<1x4x256xf32>
    %437 = vector.extract_strided_slice %307 {offsets = [0, 17], sizes = [4, 1], strides = [1, 1]} : vector<4x36xf32> to vector<4x1xf32>
    %438 = vector.shape_cast %437 : vector<4x1xf32> to vector<1x4x1xf32>
    %439 = vector.extract_strided_slice %430 {offsets = [0, 1, 0], sizes = [1, 1, 256], strides = [1, 1, 1]} : vector<1x4x256xf32> to vector<1x1x256xf32>
    %440 = vector.broadcast %438 : vector<1x4x1xf32> to vector<1x4x256xf32>
    %441 = vector.broadcast %439 : vector<1x1x256xf32> to vector<1x4x256xf32>
    %442 = arith.mulf %440, %441 : vector<1x4x256xf32>
    %443 = vector.extract_strided_slice %307 {offsets = [0, 18], sizes = [4, 1], strides = [1, 1]} : vector<4x36xf32> to vector<4x1xf32>
    %444 = vector.shape_cast %443 : vector<4x1xf32> to vector<1x4x1xf32>
    %445 = vector.extract_strided_slice %430 {offsets = [0, 2, 0], sizes = [1, 1, 256], strides = [1, 1, 1]} : vector<1x4x256xf32> to vector<1x1x256xf32>
    %446 = vector.broadcast %444 : vector<1x4x1xf32> to vector<1x4x256xf32>
    %447 = vector.broadcast %445 : vector<1x1x256xf32> to vector<1x4x256xf32>
    %448 = arith.mulf %446, %447 : vector<1x4x256xf32>
    %449 = vector.extract_strided_slice %307 {offsets = [0, 19], sizes = [4, 1], strides = [1, 1]} : vector<4x36xf32> to vector<4x1xf32>
    %450 = vector.shape_cast %449 : vector<4x1xf32> to vector<1x4x1xf32>
    %451 = vector.extract_strided_slice %430 {offsets = [0, 3, 0], sizes = [1, 1, 256], strides = [1, 1, 1]} : vector<1x4x256xf32> to vector<1x1x256xf32>
    %452 = vector.broadcast %450 : vector<1x4x1xf32> to vector<1x4x256xf32>
    %453 = vector.broadcast %451 : vector<1x1x256xf32> to vector<1x4x256xf32>
    %454 = arith.mulf %452, %453 : vector<1x4x256xf32>
    %455 = arith.addf %436, %442 : vector<1x4x256xf32>
    %456 = arith.addf %448, %454 : vector<1x4x256xf32>
    %457 = arith.addf %455, %456 : vector<1x4x256xf32>
    %c0_65 = arith.constant 0 : index
    %c0_66 = arith.constant 0 : index
    %c129_67 = arith.constant 129 : index
    %458 = vector.load %arg7[%c0_65, %c0_66, %c129_67] : memref<1x4x512xf32, #tpu.memory_space<vmem>>, vector<1x4x256xf32>
    %459 = vector.broadcast %20 : vector<1x1x256xf32> to vector<1x4x256xf32>
    %460 = arith.mulf %458, %459 : vector<1x4x256xf32>
    %461 = vector.extract_strided_slice %307 {offsets = [0, 20], sizes = [4, 1], strides = [1, 1]} : vector<4x36xf32> to vector<4x1xf32>
    %462 = vector.shape_cast %461 : vector<4x1xf32> to vector<1x4x1xf32>
    %463 = vector.extract_strided_slice %460 {offsets = [0, 0, 0], sizes = [1, 1, 256], strides = [1, 1, 1]} : vector<1x4x256xf32> to vector<1x1x256xf32>
    %464 = vector.broadcast %462 : vector<1x4x1xf32> to vector<1x4x256xf32>
    %465 = vector.broadcast %463 : vector<1x1x256xf32> to vector<1x4x256xf32>
    %466 = arith.mulf %464, %465 : vector<1x4x256xf32>
    %467 = vector.extract_strided_slice %307 {offsets = [0, 21], sizes = [4, 1], strides = [1, 1]} : vector<4x36xf32> to vector<4x1xf32>
    %468 = vector.shape_cast %467 : vector<4x1xf32> to vector<1x4x1xf32>
    %469 = vector.extract_strided_slice %460 {offsets = [0, 1, 0], sizes = [1, 1, 256], strides = [1, 1, 1]} : vector<1x4x256xf32> to vector<1x1x256xf32>
    %470 = vector.broadcast %468 : vector<1x4x1xf32> to vector<1x4x256xf32>
    %471 = vector.broadcast %469 : vector<1x1x256xf32> to vector<1x4x256xf32>
    %472 = arith.mulf %470, %471 : vector<1x4x256xf32>
    %473 = vector.extract_strided_slice %307 {offsets = [0, 22], sizes = [4, 1], strides = [1, 1]} : vector<4x36xf32> to vector<4x1xf32>
    %474 = vector.shape_cast %473 : vector<4x1xf32> to vector<1x4x1xf32>
    %475 = vector.extract_strided_slice %460 {offsets = [0, 2, 0], sizes = [1, 1, 256], strides = [1, 1, 1]} : vector<1x4x256xf32> to vector<1x1x256xf32>
    %476 = vector.broadcast %474 : vector<1x4x1xf32> to vector<1x4x256xf32>
    %477 = vector.broadcast %475 : vector<1x1x256xf32> to vector<1x4x256xf32>
    %478 = arith.mulf %476, %477 : vector<1x4x256xf32>
    %479 = vector.extract_strided_slice %307 {offsets = [0, 23], sizes = [4, 1], strides = [1, 1]} : vector<4x36xf32> to vector<4x1xf32>
    %480 = vector.shape_cast %479 : vector<4x1xf32> to vector<1x4x1xf32>
    %481 = vector.extract_strided_slice %460 {offsets = [0, 3, 0], sizes = [1, 1, 256], strides = [1, 1, 1]} : vector<1x4x256xf32> to vector<1x1x256xf32>
    %482 = vector.broadcast %480 : vector<1x4x1xf32> to vector<1x4x256xf32>
    %483 = vector.broadcast %481 : vector<1x1x256xf32> to vector<1x4x256xf32>
    %484 = arith.mulf %482, %483 : vector<1x4x256xf32>
    %485 = arith.addf %466, %472 : vector<1x4x256xf32>
    %486 = arith.addf %478, %484 : vector<1x4x256xf32>
    %487 = arith.addf %485, %486 : vector<1x4x256xf32>
    %488 = arith.addf %429, %457 : vector<1x4x256xf32>
    %489 = arith.addf %488, %487 : vector<1x4x256xf32>
    %c0_68 = arith.constant 0 : index
    %c0_69 = arith.constant 0 : index
    %c143_70 = arith.constant 143 : index
    %490 = vector.load %arg7[%c0_68, %c0_69, %c143_70] : memref<1x4x512xf32, #tpu.memory_space<vmem>>, vector<1x4x256xf32>
    %491 = vector.broadcast %15 : vector<1x1x256xf32> to vector<1x4x256xf32>
    %492 = arith.mulf %490, %491 : vector<1x4x256xf32>
    %493 = vector.extract_strided_slice %307 {offsets = [0, 24], sizes = [4, 1], strides = [1, 1]} : vector<4x36xf32> to vector<4x1xf32>
    %494 = vector.shape_cast %493 : vector<4x1xf32> to vector<1x4x1xf32>
    %495 = vector.extract_strided_slice %492 {offsets = [0, 0, 0], sizes = [1, 1, 256], strides = [1, 1, 1]} : vector<1x4x256xf32> to vector<1x1x256xf32>
    %496 = vector.broadcast %494 : vector<1x4x1xf32> to vector<1x4x256xf32>
    %497 = vector.broadcast %495 : vector<1x1x256xf32> to vector<1x4x256xf32>
    %498 = arith.mulf %496, %497 : vector<1x4x256xf32>
    %499 = vector.extract_strided_slice %307 {offsets = [0, 25], sizes = [4, 1], strides = [1, 1]} : vector<4x36xf32> to vector<4x1xf32>
    %500 = vector.shape_cast %499 : vector<4x1xf32> to vector<1x4x1xf32>
    %501 = vector.extract_strided_slice %492 {offsets = [0, 1, 0], sizes = [1, 1, 256], strides = [1, 1, 1]} : vector<1x4x256xf32> to vector<1x1x256xf32>
    %502 = vector.broadcast %500 : vector<1x4x1xf32> to vector<1x4x256xf32>
    %503 = vector.broadcast %501 : vector<1x1x256xf32> to vector<1x4x256xf32>
    %504 = arith.mulf %502, %503 : vector<1x4x256xf32>
    %505 = vector.extract_strided_slice %307 {offsets = [0, 26], sizes = [4, 1], strides = [1, 1]} : vector<4x36xf32> to vector<4x1xf32>
    %506 = vector.shape_cast %505 : vector<4x1xf32> to vector<1x4x1xf32>
    %507 = vector.extract_strided_slice %492 {offsets = [0, 2, 0], sizes = [1, 1, 256], strides = [1, 1, 1]} : vector<1x4x256xf32> to vector<1x1x256xf32>
    %508 = vector.broadcast %506 : vector<1x4x1xf32> to vector<1x4x256xf32>
    %509 = vector.broadcast %507 : vector<1x1x256xf32> to vector<1x4x256xf32>
    %510 = arith.mulf %508, %509 : vector<1x4x256xf32>
    %511 = vector.extract_strided_slice %307 {offsets = [0, 27], sizes = [4, 1], strides = [1, 1]} : vector<4x36xf32> to vector<4x1xf32>
    %512 = vector.shape_cast %511 : vector<4x1xf32> to vector<1x4x1xf32>
    %513 = vector.extract_strided_slice %492 {offsets = [0, 3, 0], sizes = [1, 1, 256], strides = [1, 1, 1]} : vector<1x4x256xf32> to vector<1x1x256xf32>
    %514 = vector.broadcast %512 : vector<1x4x1xf32> to vector<1x4x256xf32>
    %515 = vector.broadcast %513 : vector<1x1x256xf32> to vector<1x4x256xf32>
    %516 = arith.mulf %514, %515 : vector<1x4x256xf32>
    %517 = arith.addf %498, %504 : vector<1x4x256xf32>
    %518 = arith.addf %510, %516 : vector<1x4x256xf32>
    %519 = arith.addf %517, %518 : vector<1x4x256xf32>
    %c0_71 = arith.constant 0 : index
    %c0_72 = arith.constant 0 : index
    %c144_73 = arith.constant 144 : index
    %520 = vector.load %arg7[%c0_71, %c0_72, %c144_73] : memref<1x4x512xf32, #tpu.memory_space<vmem>>, vector<1x4x256xf32>
    %521 = vector.extract_strided_slice %307 {offsets = [0, 28], sizes = [4, 1], strides = [1, 1]} : vector<4x36xf32> to vector<4x1xf32>
    %522 = vector.shape_cast %521 : vector<4x1xf32> to vector<1x4x1xf32>
    %523 = vector.extract_strided_slice %520 {offsets = [0, 0, 0], sizes = [1, 1, 256], strides = [1, 1, 1]} : vector<1x4x256xf32> to vector<1x1x256xf32>
    %524 = vector.broadcast %522 : vector<1x4x1xf32> to vector<1x4x256xf32>
    %525 = vector.broadcast %523 : vector<1x1x256xf32> to vector<1x4x256xf32>
    %526 = arith.mulf %524, %525 : vector<1x4x256xf32>
    %527 = vector.extract_strided_slice %307 {offsets = [0, 29], sizes = [4, 1], strides = [1, 1]} : vector<4x36xf32> to vector<4x1xf32>
    %528 = vector.shape_cast %527 : vector<4x1xf32> to vector<1x4x1xf32>
    %529 = vector.extract_strided_slice %520 {offsets = [0, 1, 0], sizes = [1, 1, 256], strides = [1, 1, 1]} : vector<1x4x256xf32> to vector<1x1x256xf32>
    %530 = vector.broadcast %528 : vector<1x4x1xf32> to vector<1x4x256xf32>
    %531 = vector.broadcast %529 : vector<1x1x256xf32> to vector<1x4x256xf32>
    %532 = arith.mulf %530, %531 : vector<1x4x256xf32>
    %533 = vector.extract_strided_slice %307 {offsets = [0, 30], sizes = [4, 1], strides = [1, 1]} : vector<4x36xf32> to vector<4x1xf32>
    %534 = vector.shape_cast %533 : vector<4x1xf32> to vector<1x4x1xf32>
    %535 = vector.extract_strided_slice %520 {offsets = [0, 2, 0], sizes = [1, 1, 256], strides = [1, 1, 1]} : vector<1x4x256xf32> to vector<1x1x256xf32>
    %536 = vector.broadcast %534 : vector<1x4x1xf32> to vector<1x4x256xf32>
    %537 = vector.broadcast %535 : vector<1x1x256xf32> to vector<1x4x256xf32>
    %538 = arith.mulf %536, %537 : vector<1x4x256xf32>
    %539 = vector.extract_strided_slice %307 {offsets = [0, 31], sizes = [4, 1], strides = [1, 1]} : vector<4x36xf32> to vector<4x1xf32>
    %540 = vector.shape_cast %539 : vector<4x1xf32> to vector<1x4x1xf32>
    %541 = vector.extract_strided_slice %520 {offsets = [0, 3, 0], sizes = [1, 1, 256], strides = [1, 1, 1]} : vector<1x4x256xf32> to vector<1x1x256xf32>
    %542 = vector.broadcast %540 : vector<1x4x1xf32> to vector<1x4x256xf32>
    %543 = vector.broadcast %541 : vector<1x1x256xf32> to vector<1x4x256xf32>
    %544 = arith.mulf %542, %543 : vector<1x4x256xf32>
    %545 = arith.addf %526, %532 : vector<1x4x256xf32>
    %546 = arith.addf %538, %544 : vector<1x4x256xf32>
    %547 = arith.addf %545, %546 : vector<1x4x256xf32>
    %c0_74 = arith.constant 0 : index
    %c0_75 = arith.constant 0 : index
    %c145_76 = arith.constant 145 : index
    %548 = vector.load %arg7[%c0_74, %c0_75, %c145_76] : memref<1x4x512xf32, #tpu.memory_space<vmem>>, vector<1x4x256xf32>
    %549 = vector.broadcast %20 : vector<1x1x256xf32> to vector<1x4x256xf32>
    %550 = arith.mulf %548, %549 : vector<1x4x256xf32>
    %551 = vector.extract_strided_slice %307 {offsets = [0, 32], sizes = [4, 1], strides = [1, 1]} : vector<4x36xf32> to vector<4x1xf32>
    %552 = vector.shape_cast %551 : vector<4x1xf32> to vector<1x4x1xf32>
    %553 = vector.extract_strided_slice %550 {offsets = [0, 0, 0], sizes = [1, 1, 256], strides = [1, 1, 1]} : vector<1x4x256xf32> to vector<1x1x256xf32>
    %554 = vector.broadcast %552 : vector<1x4x1xf32> to vector<1x4x256xf32>
    %555 = vector.broadcast %553 : vector<1x1x256xf32> to vector<1x4x256xf32>
    %556 = arith.mulf %554, %555 : vector<1x4x256xf32>
    %557 = vector.extract_strided_slice %307 {offsets = [0, 33], sizes = [4, 1], strides = [1, 1]} : vector<4x36xf32> to vector<4x1xf32>
    %558 = vector.shape_cast %557 : vector<4x1xf32> to vector<1x4x1xf32>
    %559 = vector.extract_strided_slice %550 {offsets = [0, 1, 0], sizes = [1, 1, 256], strides = [1, 1, 1]} : vector<1x4x256xf32> to vector<1x1x256xf32>
    %560 = vector.broadcast %558 : vector<1x4x1xf32> to vector<1x4x256xf32>
    %561 = vector.broadcast %559 : vector<1x1x256xf32> to vector<1x4x256xf32>
    %562 = arith.mulf %560, %561 : vector<1x4x256xf32>
    %563 = vector.extract_strided_slice %307 {offsets = [0, 34], sizes = [4, 1], strides = [1, 1]} : vector<4x36xf32> to vector<4x1xf32>
    %564 = vector.shape_cast %563 : vector<4x1xf32> to vector<1x4x1xf32>
    %565 = vector.extract_strided_slice %550 {offsets = [0, 2, 0], sizes = [1, 1, 256], strides = [1, 1, 1]} : vector<1x4x256xf32> to vector<1x1x256xf32>
    %566 = vector.broadcast %564 : vector<1x4x1xf32> to vector<1x4x256xf32>
    %567 = vector.broadcast %565 : vector<1x1x256xf32> to vector<1x4x256xf32>
    %568 = arith.mulf %566, %567 : vector<1x4x256xf32>
    %569 = vector.extract_strided_slice %307 {offsets = [0, 35], sizes = [4, 1], strides = [1, 1]} : vector<4x36xf32> to vector<4x1xf32>
    %570 = vector.shape_cast %569 : vector<4x1xf32> to vector<1x4x1xf32>
    %571 = vector.extract_strided_slice %550 {offsets = [0, 3, 0], sizes = [1, 1, 256], strides = [1, 1, 1]} : vector<1x4x256xf32> to vector<1x1x256xf32>
    %572 = vector.broadcast %570 : vector<1x4x1xf32> to vector<1x4x256xf32>
    %573 = vector.broadcast %571 : vector<1x1x256xf32> to vector<1x4x256xf32>
    %574 = arith.mulf %572, %573 : vector<1x4x256xf32>
    %575 = arith.addf %556, %562 : vector<1x4x256xf32>
    %576 = arith.addf %568, %574 : vector<1x4x256xf32>
    %577 = arith.addf %575, %576 : vector<1x4x256xf32>
    %578 = arith.addf %519, %547 : vector<1x4x256xf32>
    %579 = arith.addf %578, %577 : vector<1x4x256xf32>
    %580 = arith.addf %399, %489 : vector<1x4x256xf32>
    %581 = arith.addf %580, %579 : vector<1x4x256xf32>
    %582 = vector.broadcast %309 : vector<1x4x1xf32> to vector<1x4x256xf32>
    %583 = arith.addf %581, %582 : vector<1x4x256xf32>
    %584 = arith.addf %583, %0 : vector<1x4x256xf32>
    %c0_77 = arith.constant 0 : index
    %c0_78 = arith.constant 0 : index
    %c0_79 = arith.constant 0 : index
    %585 = vector.load %arg6[%c0_77, %c0_78, %c0_79] : memref<1x4x256xf32, #tpu.memory_space<vmem>>, vector<1x4x256xf32>
    tpu.vector_store %arg6[%c0_77, %c0_78, %c0_79], %584 {strides = array<i32>} : memref<1x4x256xf32, #tpu.memory_space<vmem>>, vector<1x4x256xf32>,
    return
  }
  func.func @transform_0(%arg0: i32) -> (i32, i32, i32) {
    %c0_i32 = arith.constant 0 : i32
    %c0_i32_0 = arith.constant 0 : i32
    %c0_i32_1 = arith.constant 0 : i32
    return %arg0, %c0_i32, %c0_i32_0 : i32, i32, i32
  }
  func.func @transform_1(%arg0: i32) -> (i32, i32) {
    %c0_i32 = arith.constant 0 : i32
    %c0_i32_0 = arith.constant 0 : i32
    %c0_i32_1 = arith.constant 0 : i32
    return %c0_i32, %c0_i32_0 : i32, i32
  }
  func.func @transform_2(%arg0: i32) -> (i32, i32) {
    %c0_i32 = arith.constant 0 : i32
    %c0_i32_0 = arith.constant 0 : i32
    %c0_i32_1 = arith.constant 0 : i32
    return %c0_i32, %c0_i32_0 : i32, i32
  }
  func.func @transform_3(%arg0: i32) -> (i32, i32) {
    %c0_i32 = arith.constant 0 : i32
    %c0_i32_0 = arith.constant 0 : i32
    %c0_i32_1 = arith.constant 0 : i32
    return %c0_i32, %c0_i32_0 : i32, i32
  }
  func.func @transform_4(%arg0: i32) -> (i32, i32) {
    %c0_i32 = arith.constant 0 : i32
    %c0_i32_0 = arith.constant 0 : i32
    %c0_i32_1 = arith.constant 0 : i32
    return %c0_i32, %c0_i32_0 : i32, i32
  }
  func.func @transform_5(%arg0: i32) -> (i32, i32, i32) {
    %c0_i32 = arith.constant 0 : i32
    %c0_i32_0 = arith.constant 0 : i32
    %c0_i32_1 = arith.constant 0 : i32
    return %arg0, %c0_i32, %c0_i32_0 : i32, i32, i32
  }
}

</mosaic_0001>

<llo_original>
// kernel: residual_block_pallas.1
$region0: #{residual_block_pallas.1}
  #allocation0 [shape = 'u32[]', space=smem, size = 0x4, offset = 0x4, fixed_abs, tag = 'smem constant byte address 0x4 - core index']
  #allocation1 [shape = 'u32[144,128]{1,0:T(1,128)}', space=vmem, size = 0x12000, scoped, tag = 'internal scratch']
  #allocation2 [shape = 'f32[1,4,512]{2,1,0:T(4,128)}', space=vmem, size = 0x2000, scoped, tag = 'scratch operand']
  %s0 = inlined_call_operand.vmem [shape: f32[2,4,256], index: 0, kind: input, shape index: {}]
  %s1 = inlined_call_operand.vmem [shape: f32[4,36], index: 1, kind: input, shape index: {}]
  %s2 = inlined_call_operand.vmem [shape: f32[4,1], index: 2, kind: input, shape index: {}]
  %s3 = inlined_call_operand.vmem [shape: f32[4,36], index: 3, kind: input, shape index: {}]
  %s4 = inlined_call_operand.vmem [shape: f32[4,1], index: 4, kind: input, shape index: {}]
  %s5 = inlined_call_operand.vmem [shape: f32[2,4,256], index: 5, kind: output, shape index: {}]
  %s6 = sld [smem:[#allocation0]]
  $region53: #{residual_block_pallas.1} parent=0
    _
  %s8 = ssub.s32 1, %s6
  %s9 = scalar_select 0, %s8, %s6
  loop: start=0, step=1, limit=4
  $region2: #{residual_block_pallas.1} parent=0 // loop_pre_header
    _
  $region3: #{residual_block_pallas.1} parent=0 // loop_header
    %s11 = sphi 0, %s15
    %p12 = scmp.ge.s32.totalorder %s11, 4
    %s21 = sphi 0, %s23
    %s24 = sphi 0, %s21
    %s25 = sphi 0, %s24
    %s41 = sphi 0, %s25
    %s45 = sphi 0, %s45
    %s47 = sphi 0, %s45
    %s48 = sphi 0, %s47
    %s62 = sphi 0, %s48
    %s66 = sphi 0, %s66
    %s68 = sphi 0, %s66
    %s69 = sphi 0, %s68
    %s83 = sphi 0, %s69
    %s87 = sphi 0, %s87
    %s89 = sphi 0, %s87
    %s90 = sphi 0, %s89
    %s104 = sphi 0, %s90
    %s108 = sphi 0, %s108
    %s110 = sphi 0, %s108
    %s111 = sphi 0, %s110
    %s125 = sphi 0, %s111
    %s131 = sphi 0, %s133
    %s134 = sphi 0, %s131
    %s135 = sphi 0, %s134
    %s151 = sphi 0, %s135
  $region4: #{residual_block_pallas.1} parent=0 // loop_header_branch
    %14 = sbr.rel (%p12) target = $region8
  $region5: #{residual_block_pallas.1} parent=0 // loop_body
    %s16 = ssub.s32 %s11, 1
    %s17 = ssub.s32 %s11, 2
    %s18 = sadd.s32 %s11, 1
    %s19 = ssub.s32 %s11, %s18
    %p20 = scmp.eq.s32.totalorder %s19, 0
    %s22 = sadd.s32 %s21, 1
    %s23 = scalar_select %p20, %s21, %s22
    %p26 = pneg %p20
    %p27 = scmp.eq.s32.totalorder %s11, 1
    %p28 = por %p26, %p27
    %p29 = scmp.ne.s32.totalorder %s21, %s24
    %p30 = scmp.eq.s32.totalorder %s11, 0
    %p31 = por %p29, %p30
    %p32 = scmp.ne.s32.totalorder %s21, %s24
    %p33 = scmp.eq.s32.totalorder %s16, 1
    %p34 = por %p32, %p33
    %p35 = scmp.ne.s32.totalorder %s24, %s25
    %p36 = scmp.eq.s32.totalorder %s16, 0
    %p37 = por %p35, %p36
    %p38 = scmp.ne.s32.totalorder %s24, %s25
    %p39 = scmp.eq.s32.totalorder %s17, 1
    %p40 = por %p38, %p39
    %p42 = scmp.ne.s32.totalorder %s25, %s41
    %p43 = scmp.eq.s32.totalorder %s17, 0
    %p44 = por %p42, %p43
    %s46 = sadd.s32 %s45, 1
    %p49 = scmp.eq.s32.totalorder %s11, 1
    %p50 = scmp.ne.s32.totalorder %s45, %s47
    %p51 = scmp.eq.s32.totalorder %s11, 0
    %p52 = por %p50, %p51
    %p53 = scmp.ne.s32.totalorder %s45, %s47
    %p54 = scmp.eq.s32.totalorder %s16, 1
    %p55 = por %p53, %p54
    %p56 = scmp.ne.s32.totalorder %s47, %s48
    %p57 = scmp.eq.s32.totalorder %s16, 0
    %p58 = por %p56, %p57
    %p59 = scmp.ne.s32.totalorder %s47, %s48
    %p60 = scmp.eq.s32.totalorder %s17, 1
    %p61 = por %p59, %p60
    %p63 = scmp.ne.s32.totalorder %s48, %s62
    %p64 = scmp.eq.s32.totalorder %s17, 0
    %p65 = por %p63, %p64
    %s67 = sadd.s32 %s66, 1
    %p70 = scmp.eq.s32.totalorder %s11, 1
    %p71 = scmp.ne.s32.totalorder %s66, %s68
    %p72 = scmp.eq.s32.totalorder %s11, 0
    %p73 = por %p71, %p72
    %p74 = scmp.ne.s32.totalorder %s66, %s68
    %p75 = scmp.eq.s32.totalorder %s16, 1
    %p76 = por %p74, %p75
    %p77 = scmp.ne.s32.totalorder %s68, %s69
    %p78 = scmp.eq.s32.totalorder %s16, 0
    %p79 = por %p77, %p78
    %p80 = scmp.ne.s32.totalorder %s68, %s69
    %p81 = scmp.eq.s32.totalorder %s17, 1
    %p82 = por %p80, %p81
    %p84 = scmp.ne.s32.totalorder %s69, %s83
    %p85 = scmp.eq.s32.totalorder %s17, 0
    %p86 = por %p84, %p85
    %s88 = sadd.s32 %s87, 1
    %p91 = scmp.eq.s32.totalorder %s11, 1
    %p92 = scmp.ne.s32.totalorder %s87, %s89
    %p93 = scmp.eq.s32.totalorder %s11, 0
    %p94 = por %p92, %p93
    %p95 = scmp.ne.s32.totalorder %s87, %s89
    %p96 = scmp.eq.s32.totalorder %s16, 1
    %p97 = por %p95, %p96
    %p98 = scmp.ne.s32.totalorder %s89, %s90
    %p99 = scmp.eq.s32.totalorder %s16, 0
    %p100 = por %p98, %p99
    %p101 = scmp.ne.s32.totalorder %s89, %s90
    %p102 = scmp.eq.s32.totalorder %s17, 1
    %p103 = por %p101, %p102
    %p105 = scmp.ne.s32.totalorder %s90, %s104
    %p106 = scmp.eq.s32.totalorder %s17, 0
    %p107 = por %p105, %p106
    %s109 = sadd.s32 %s108, 1
    %p112 = scmp.eq.s32.totalorder %s11, 1
    %p113 = scmp.ne.s32.totalorder %s108, %s110
    %p114 = scmp.eq.s32.totalorder %s11, 0
    %p115 = por %p113, %p114
    %p116 = scmp.ne.s32.totalorder %s108, %s110
    %p117 = scmp.eq.s32.totalorder %s16, 1
    %p118 = por %p116, %p117
    %p119 = scmp.ne.s32.totalorder %s110, %s111
    %p120 = scmp.eq.s32.totalorder %s16, 0
    %p121 = por %p119, %p120
    %p122 = scmp.ne.s32.totalorder %s110, %s111
    %p123 = scmp.eq.s32.totalorder %s17, 1
    %p124 = por %p122, %p123
    %p126 = scmp.ne.s32.totalorder %s111, %s125
    %p127 = scmp.eq.s32.totalorder %s17, 0
    %p128 = por %p126, %p127
    %s129 = ssub.s32 %s11, %s18
    %p130 = scmp.eq.s32.totalorder %s129, 0
    %s132 = sadd.s32 %s131, 1
    %s133 = scalar_select %p130, %s131, %s132
    %p136 = pneg %p130
    %p137 = scmp.eq.s32.totalorder %s11, 1
    %p138 = por %p136, %p137
    %p139 = scmp.ne.s32.totalorder %s131, %s134
    %p140 = scmp.eq.s32.totalorder %s11, 0
    %p141 = por %p139, %p140
    %p142 = scmp.ne.s32.totalorder %s131, %s134
    %p143 = scmp.eq.s32.totalorder %s16, 1
    %p144 = por %p142, %p143
    %p145 = scmp.ne.s32.totalorder %s134, %s135
    %p146 = scmp.eq.s32.totalorder %s16, 0
    %p147 = por %p145, %p146
    %p148 = scmp.ne.s32.totalorder %s134, %s135
    %p149 = scmp.eq.s32.totalorder %s17, 1
    %p150 = por %p148, %p149
    %p152 = scmp.ne.s32.totalorder %s135, %s151
    %p153 = scmp.eq.s32.totalorder %s17, 0
    %p154 = por %p152, %p153
    %p155 = scmp.le.s32.totalorder 1, %s11
    %p156 = scmp.lt.s32.totalorder %s11, 3
    %p157 = pnand %p155, %p156
    %p158 = pneg %p157
    // Predicated region
    $region9: #{residual_block_pallas.1} parent=5 // pred_check
      _
    $region10: #{residual_block_pallas.1} parent=5 // pred_check_branch
      %160 = sbr.rel (%p157) target = $region12
    $region11: #{residual_block_pallas.1} parent=5 // pred_region
      %s161 = ssub.s32 %s11, 1
      // Predicated region
      $region13: #{residual_block_pallas.1} parent=11 // pred_check
        %p162 = pneg %p58
      $region14: #{residual_block_pallas.1} parent=11 // pred_check_branch
        %164 = sbr.rel (%p162) target = $region16
      $region15: #{residual_block_pallas.1} parent=11 // pred_region
        _
      $region16: #{residual_block_pallas.1} parent=11 // pred_fallthru
        _
      // Predicated region
      $region17: #{residual_block_pallas.1} parent=11 // pred_check
        %p165 = pneg %p79
      $region18: #{residual_block_pallas.1} parent=11 // pred_check_branch
        %167 = sbr.rel (%p165) target = $region20
      $region19: #{residual_block_pallas.1} parent=11 // pred_region
        _
      $region20: #{residual_block_pallas.1} parent=11 // pred_fallthru
        _
      // Predicated region
      $region21: #{residual_block_pallas.1} parent=11 // pred_check
        %p168 = pneg %p100
      $region22: #{residual_block_pallas.1} parent=11 // pred_check_branch
        %170 = sbr.rel (%p168) target = $region24
      $region23: #{residual_block_pallas.1} parent=11 // pred_region
        _
      $region24: #{residual_block_pallas.1} parent=11 // pred_fallthru
        _
      // Predicated region
      $region25: #{residual_block_pallas.1} parent=11 // pred_check
        %p171 = pneg %p121
      $region26: #{residual_block_pallas.1} parent=11 // pred_check_branch
        %173 = sbr.rel (%p171) target = $region28
      $region27: #{residual_block_pallas.1} parent=11 // pred_region
        _
      $region28: #{residual_block_pallas.1} parent=11 // pred_fallthru
        _
    $region12: #{residual_block_pallas.1} parent=5 // pred_fallthru
      _
    %p174 = scmp.lt.s32.totalorder %s11, 2
    // Predicated region
    $region29: #{residual_block_pallas.1} parent=5 // pred_check
      %p175 = pneg %p174
    $region30: #{residual_block_pallas.1} parent=5 // pred_check_branch
      %177 = sbr.rel (%p175) target = $region32
    $region31: #{residual_block_pallas.1} parent=5 // pred_region
      // Predicated region
      $region33: #{residual_block_pallas.1} parent=31 // pred_check
        %p178 = pneg %p31
      $region34: #{residual_block_pallas.1} parent=31 // pred_check_branch
        %180 = sbr.rel (%p178) target = $region36
      $region35: #{residual_block_pallas.1} parent=31 // pred_region
        %p181 = scmp.lt.s32.totalorder %s11, 1
        %s182 = scalar_select %p181, %s11, 1
        %s183 = smul.addr %s182, 2
        %s184 = smul.addr %s183, 4
        %s185 = scalar_lea.vmem %s0, %s184
      $region36: #{residual_block_pallas.1} parent=31 // pred_fallthru
        _
    $region32: #{residual_block_pallas.1} parent=5 // pred_fallthru
      _
    %p186 = scmp.le.s32.totalorder 1, %s11
    %p187 = scmp.lt.s32.totalorder %s11, 3
    %p188 = pnand %p186, %p187
    %p189 = pneg %p188
    // Predicated region
    $region37: #{residual_block_pallas.1} parent=5 // pred_check
      _
    $region38: #{residual_block_pallas.1} parent=5 // pred_check_branch
      %191 = sbr.rel (%p188) target = $region40
    $region39: #{residual_block_pallas.1} parent=5 // pred_region
      %s192 = ssub.s32 %s11, 1
      %p193 = scmp.lt.s32.totalorder %s16, 1
      %s194 = scalar_select %p193, %s16, 1
      %s195 = smul.addr %s194, 2
      %s196 = smul.addr %s195, 4
      %s197 = scalar_lea.vmem %s0, %s196
      %p198 = pneg %p37
      %p199 = pneg %p34
      %p200 = pneg %p58
      %p201 = pneg %p55
      %p202 = pneg %p79
      %p203 = pneg %p76
      %p204 = pneg %p100
      %p205 = pneg %p97
      %p206 = pneg %p121
      %p207 = pneg %p118
      %p208 = pneg %p147
      %p209 = pneg %p144
      %p210 = scmp.lt.s32.totalorder %s16, 1
      %s211 = scalar_select %p210, %s16, 1
      %s212 = smul.addr %s211, 2
      %s213 = smul.addr %s212, 4
      %s214 = scalar_lea.vmem %s5, %s213
      %p215 = scmp.lt.s32.totalorder %s16, 1
      %s216 = scalar_select %p215, %s16, 1
      %s217 = smul.addr %s216, 2
      %s218 = smul.addr %s217, 4
      %s219 = scalar_lea.vmem %s0, %s218
      %p220 = scmp.lt.s32.totalorder %s16, 1
      %s221 = scalar_select %p220, %s16, 1
      %s222 = smul.addr %s221, 2
      %s223 = smul.addr %s222, 4
      %s224 = scalar_lea.vmem %s5, %s223
      %v225 = vld [vmem:[%s219] sm:$0xff]
      %v226 = vlaneseq
      %v227 = vand.u32 %v226, 127
      %v228 = vadd.s32 %v227, 128
      %v229 = vcvt.s32.f32 %v227
      %v230 = vcvt.s32.f32 %v228
      %v231 = vadd.f32 %v229, 0.5
      %v232 = vadd.f32 %v230, 0.5
      %v233 = vmul.f32 %v231, 0.0625
      %v234 = vmul.f32 %v232, 0.0625
      %v235 = vfloor.f32 %v233
      %v236 = vfloor.f32 %v234
      %v237 = vmul.f32 %v235, 16.0
      %v238 = vmul.f32 %v236, 16.0
      %v239 = vsub.f32 %v229, %v237
      %v240 = vsub.f32 %v230, %v238
      %vm241 = vcmp.gt.f32.partialorder %v239, 0.5
      %vm242 = vcmp.gt.f32.partialorder %v240, 0.5
      %v243 = vsel %vm241, 1.0, 0.0
      %v244 = vsel %vm242, 1.0, 0.0
      %vm245 = vcmp.lt.f32.partialorder %v239, 14.5
      %vm246 = vcmp.lt.f32.partialorder %v240, 14.5
      %v247 = vsel %vm245, 1.0, 0.0
      %v248 = vsel %vm246, 1.0, 0.0
      %vm249 = vcmask 1044344
      %250 = vst.msk [vmem:[#allocation2] sm:$0xf] %vm249, 0.0
      %vm251 = vcmask 134144
      %252 = vst.msk [vmem:[#allocation2 + $0xc] sm:$0xf] %vm251, 0.0
      %v253 = vmax.f32 %v225, 0.0
      %254 = vst [vmem:[#allocation2 + $0x4] sm:$0xff] %v253
      %v255 = vld [vmem:[%s1] sm:$0xf]
      %v256 = vld [vmem:[%s2] sm:$0xf]
      %v257 = vld [vmem:[#allocation2] sm:$0xff]
      %v258 = vld [vmem:[#allocation2 + $0x8] sm:$0xf]
      %v261 = vcombine.low %v243, %v244
      %262 = vrot.lane.b32.xlu0 %v261, 111
      %v263 = vpop.permute.xlu0 %262
      %v264 = vrot.slane %v263, 4
      %vm265 = vcmask 908288
      %v266 = vsel %vm265, %v264, %v263
      %v269 = vmul.f32 %v257, %v266
      %v270 = vmul.f32 %v258, %v264
      %272 = vset.pattern.permute.xlu0 0
      %273 = vperm.xlu0 %272, %v255
      %v274 = vpop.permute.xlu0 %273
      %v278 = vlaneseq
      %v279 = vshrl.u32 %v278, 7
      %v280 = vsub.s32 0, %v279
      %v281 = vrot.slane %v269, %v280
      %v282 = vlaneseq
      %v283 = vshrl.u32 %v282, 7
      %v284 = vsub.s32 4, %v283
      %v285 = vrot.slane %v269, %v284
      %v286 = vlaneseq
      %v287 = vshrl.u32 %v286, 7
      %v288 = vsub.s32 0, %v287
      %v289 = vrot.slane %v270, %v288
      %v293 = vlaneseq
      %v294 = vshrl.u32 %v293, 7
      %v295 = vsub.s32 0, %v294
      %v296 = vrot.slane %v281, %v295
      %v297 = vlaneseq
      %v298 = vshrl.u32 %v297, 7
      %v299 = vsub.s32 0, %v298
      %v300 = vrot.slane %v285, %v299
      %v301 = vlaneseq
      %v302 = vshrl.u32 %v301, 7
      %v303 = vsub.s32 0, %v302
      %v304 = vrot.slane %v289, %v303
      %v305 = vmul.f32 %v274, %v296
      %v306 = vmul.f32 %v274, %v300
      %v307 = vmul.f32 %v274, %v304
      %308 = vset.pattern.permute.xlu0 1
      %309 = vperm.xlu0 %308, %v255
      %v310 = vpop.permute.xlu0 %309
      %v312 = vlaneseq
      %v313 = vshrl.u32 %v312, 7
      %v314 = vsub.s32 1, %v313
      %v315 = vrot.slane %v269, %v314
      %v316 = vlaneseq
      %v317 = vshrl.u32 %v316, 7
      %v318 = vsub.s32 5, %v317
      %v319 = vrot.slane %v269, %v318
      %v320 = vlaneseq
      %v321 = vshrl.u32 %v320, 7
      %v322 = vsub.s32 1, %v321
      %v323 = vrot.slane %v270, %v322
      %v327 = vlaneseq
      %v328 = vshrl.u32 %v327, 7
      %v329 = vsub.s32 1, %v328
      %v330 = vrot.slane %v315, %v329
      %v331 = vlaneseq
      %v332 = vshrl.u32 %v331, 7
      %v333 = vsub.s32 1, %v332
      %v334 = vrot.slane %v319, %v333
      %v335 = vlaneseq
      %v336 = vshrl.u32 %v335, 7
      %v337 = vsub.s32 1, %v336
      %v338 = vrot.slane %v323, %v337
      %v339 = vmul.f32 %v310, %v330
      %v340 = vmul.f32 %v310, %v334
      %v341 = vmul.f32 %v310, %v338
      %342 = vset.pattern.permute.xlu0 2
      %343 = vperm.xlu0 %342, %v255
      %v344 = vpop.permute.xlu0 %343
      %v346 = vlaneseq
      %v347 = vshrl.u32 %v346, 7
      %v348 = vsub.s32 2, %v347
      %v349 = vrot.slane %v269, %v348
      %v350 = vlaneseq
      %v351 = vshrl.u32 %v350, 7
      %v352 = vsub.s32 6, %v351
      %v353 = vrot.slane %v269, %v352
      %v354 = vlaneseq
      %v355 = vshrl.u32 %v354, 7
      %v356 = vsub.s32 2, %v355
      %v357 = vrot.slane %v270, %v356
      %v361 = vlaneseq
      %v362 = vshrl.u32 %v361, 7
      %v363 = vsub.s32 2, %v362
      %v364 = vrot.slane %v349, %v363
      %v365 = vlaneseq
      %v366 = vshrl.u32 %v365, 7
      %v367 = vsub.s32 2, %v366
      %v368 = vrot.slane %v353, %v367
      %v369 = vlaneseq
      %v370 = vshrl.u32 %v369, 7
      %v371 = vsub.s32 2, %v370
      %v372 = vrot.slane %v357, %v371
      %v373 = vmul.f32 %v344, %v364
      %v374 = vmul.f32 %v344, %v368
      %v375 = vmul.f32 %v344, %v372
      %376 = vset.pattern.permute.xlu0 3
      %377 = vperm.xlu0 %376, %v255
      %v378 = vpop.permute.xlu0 %377
      %v380 = vlaneseq
      %v381 = vshrl.u32 %v380, 7
      %v382 = vsub.s32 3, %v381
      %v383 = vrot.slane %v269, %v382
      %v384 = vlaneseq
      %v385 = vshrl.u32 %v384, 7
      %v386 = vsub.s32 7, %v385
      %v387 = vrot.slane %v269, %v386
      %v388 = vlaneseq
      %v389 = vshrl.u32 %v388, 7
      %v390 = vsub.s32 3, %v389
      %v391 = vrot.slane %v270, %v390
      %v395 = vlaneseq
      %v396 = vshrl.u32 %v395, 7
      %v397 = vsub.s32 3, %v396
      %v398 = vrot.slane %v383, %v397
      %v399 = vlaneseq
      %v400 = vshrl.u32 %v399, 7
      %v401 = vsub.s32 3, %v400
      %v402 = vrot.slane %v387, %v401
      %v403 = vlaneseq
      %v404 = vshrl.u32 %v403, 7
      %v405 = vsub.s32 3, %v404
      %v406 = vrot.slane %v391, %v405
      %v407 = vmul.f32 %v378, %v398
      %v408 = vmul.f32 %v378, %v402
      %v409 = vmul.f32 %v378, %v406
      %v410 = vadd.f32 %v305, %v339
      %v411 = vadd.f32 %v306, %v340
      %v412 = vadd.f32 %v307, %v341
      %v413 = vadd.f32 %v373, %v407
      %v414 = vadd.f32 %v374, %v408
      %v415 = vadd.f32 %v375, %v409
      %v416 = vadd.f32 %v410, %v413
      %v417 = vadd.f32 %v411, %v414
      %v418 = vadd.f32 %v412, %v415
      %v419 = vld [vmem:[#allocation2] sm:$0xff]
      %v420 = vld [vmem:[#allocation2 + $0x8] sm:$0xf]
      %421 = vset.pattern.permute.xlu0 4
      %422 = vperm.xlu0 %421, %v255
      %v423 = vpop.permute.xlu0 %422
      %v427 = vlaneseq
      %v428 = vshrl.u32 %v427, 7
      %v429 = vsub.s32 0, %v428
      %v430 = vrot.slane %v419, %v429
      %v431 = vlaneseq
      %v432 = vshrl.u32 %v431, 7
      %v433 = vsub.s32 4, %v432
      %v434 = vrot.slane %v419, %v433
      %v435 = vlaneseq
      %v436 = vshrl.u32 %v435, 7
      %v437 = vsub.s32 0, %v436
      %v438 = vrot.slane %v420, %v437
      %v442 = vlaneseq
      %v443 = vshrl.u32 %v442, 7
      %v444 = vsub.s32 0, %v443
      %v445 = vrot.slane %v430, %v444
      %v446 = vlaneseq
      %v447 = vshrl.u32 %v446, 7
      %v448 = vsub.s32 0, %v447
      %v449 = vrot.slane %v434, %v448
      %v450 = vlaneseq
      %v451 = vshrl.u32 %v450, 7
      %v452 = vsub.s32 0, %v451
      %v453 = vrot.slane %v438, %v452
      %v454 = vmul.f32 %v423, %v445
      %v455 = vmul.f32 %v423, %v449
      %v456 = vmul.f32 %v423, %v453
      %457 = vset.pattern.permute.xlu0 5
      %458 = vperm.xlu0 %457, %v255
      %v459 = vpop.permute.xlu0 %458
      %v461 = vlaneseq
      %v462 = vshrl.u32 %v461, 7
      %v463 = vsub.s32 1, %v462
      %v464 = vrot.slane %v419, %v463
      %v465 = vlaneseq
      %v466 = vshrl.u32 %v465, 7
      %v467 = vsub.s32 5, %v466
      %v468 = vrot.slane %v419, %v467
      %v469 = vlaneseq
      %v470 = vshrl.u32 %v469, 7
      %v471 = vsub.s32 1, %v470
      %v472 = vrot.slane %v420, %v471
      %v476 = vlaneseq
      %v477 = vshrl.u32 %v476, 7
      %v478 = vsub.s32 1, %v477
      %v479 = vrot.slane %v464, %v478
      %v480 = vlaneseq
      %v481 = vshrl.u32 %v480, 7
      %v482 = vsub.s32 1, %v481
      %v483 = vrot.slane %v468, %v482
      %v484 = vlaneseq
      %v485 = vshrl.u32 %v484, 7
      %v486 = vsub.s32 1, %v485
      %v487 = vrot.slane %v472, %v486
      %v488 = vmul.f32 %v459, %v479
      %v489 = vmul.f32 %v459, %v483
      %v490 = vmul.f32 %v459, %v487
      %491 = vset.pattern.permute.xlu0 6
      %492 = vperm.xlu0 %491, %v255
      %v493 = vpop.permute.xlu0 %492
      %v495 = vlaneseq
      %v496 = vshrl.u32 %v495, 7
      %v497 = vsub.s32 2, %v496
      %v498 = vrot.slane %v419, %v497
      %v499 = vlaneseq
      %v500 = vshrl.u32 %v499, 7
      %v501 = vsub.s32 6, %v500
      %v502 = vrot.slane %v419, %v501
      %v503 = vlaneseq
      %v504 = vshrl.u32 %v503, 7
      %v505 = vsub.s32 2, %v504
      %v506 = vrot.slane %v420, %v505
      %v510 = vlaneseq
      %v511 = vshrl.u32 %v510, 7
      %v512 = vsub.s32 2, %v511
      %v513 = vrot.slane %v498, %v512
      %v514 = vlaneseq
      %v515 = vshrl.u32 %v514, 7
      %v516 = vsub.s32 2, %v515
      %v517 = vrot.slane %v502, %v516
      %v518 = vlaneseq
      %v519 = vshrl.u32 %v518, 7
      %v520 = vsub.s32 2, %v519
      %v521 = vrot.slane %v506, %v520
      %v522 = vmul.f32 %v493, %v513
      %v523 = vmul.f32 %v493, %v517
      %v524 = vmul.f32 %v493, %v521
      %525 = vset.pattern.permute.xlu0 7
      %526 = vperm.xlu0 %525, %v255
      %v527 = vpop.permute.xlu0 %526
      %v529 = vlaneseq
      %v530 = vshrl.u32 %v529, 7
      %v531 = vsub.s32 3, %v530
      %v532 = vrot.slane %v419, %v531
      %v533 = vlaneseq
      %v534 = vshrl.u32 %v533, 7
      %v535 = vsub.s32 7, %v534
      %v536 = vrot.slane %v419, %v535
      %v537 = vlaneseq
      %v538 = vshrl.u32 %v537, 7
      %v539 = vsub.s32 3, %v538
      %v540 = vrot.slane %v420, %v539
      %v544 = vlaneseq
      %v545 = vshrl.u32 %v544, 7
      %v546 = vsub.s32 3, %v545
      %v547 = vrot.slane %v532, %v546
      %v548 = vlaneseq
      %v549 = vshrl.u32 %v548, 7
      %v550 = vsub.s32 3, %v549
      %v551 = vrot.slane %v536, %v550
      %v552 = vlaneseq
      %v553 = vshrl.u32 %v552, 7
      %v554 = vsub.s32 3, %v553
      %v555 = vrot.slane %v540, %v554
      %v556 = vmul.f32 %v527, %v547
      %v557 = vmul.f32 %v527, %v551
      %v558 = vmul.f32 %v527, %v555
      %v559 = vadd.f32 %v454, %v488
      %v560 = vadd.f32 %v455, %v489
      %v561 = vadd.f32 %v456, %v490
      %v562 = vadd.f32 %v522, %v556
      %v563 = vadd.f32 %v523, %v557
      %v564 = vadd.f32 %v524, %v558
      %v565 = vadd.f32 %v559, %v562
      %v566 = vadd.f32 %v560, %v563
      %v567 = vadd.f32 %v561, %v564
      %v570 = vcombine.low %v247, %v248
      %571 = vrot.lane.b32.xlu0 %v570, 113
      %v572 = vpop.permute.xlu0 %571
      %v573 = vrot.slane %v572, 4
      %vm574 = vcmask 924672
      %v575 = vsel %vm574, %v573, %v572
      %v578 = vmul.f32 %v419, %v575
      %v579 = vmul.f32 %v420, %v573
      %580 = vset.pattern.permute.xlu0 8
      %581 = vperm.xlu0 %580, %v255
      %v582 = vpop.permute.xlu0 %581
      %v586 = vlaneseq
      %v587 = vshrl.u32 %v586, 7
      %v588 = vsub.s32 0, %v587
      %v589 = vrot.slane %v578, %v588
      %v590 = vlaneseq
      %v591 = vshrl.u32 %v590, 7
      %v592 = vsub.s32 4, %v591
      %v593 = vrot.slane %v578, %v592
      %v594 = vlaneseq
      %v595 = vshrl.u32 %v594, 7
      %v596 = vsub.s32 0, %v595
      %v597 = vrot.slane %v579, %v596
      %v601 = vlaneseq
      %v602 = vshrl.u32 %v601, 7
      %v603 = vsub.s32 0, %v602
      %v604 = vrot.slane %v589, %v603
      %v605 = vlaneseq
      %v606 = vshrl.u32 %v605, 7
      %v607 = vsub.s32 0, %v606
      %v608 = vrot.slane %v593, %v607
      %v609 = vlaneseq
      %v610 = vshrl.u32 %v609, 7
      %v611 = vsub.s32 0, %v610
      %v612 = vrot.slane %v597, %v611
      %v613 = vmul.f32 %v582, %v604
      %v614 = vmul.f32 %v582, %v608
      %v615 = vmul.f32 %v582, %v612
      %616 = vset.pattern.permute.xlu0 9
      %617 = vperm.xlu0 %616, %v255
      %v618 = vpop.permute.xlu0 %617
      %v620 = vlaneseq
      %v621 = vshrl.u32 %v620, 7
      %v622 = vsub.s32 1, %v621
      %v623 = vrot.slane %v578, %v622
      %v624 = vlaneseq
      %v625 = vshrl.u32 %v624, 7
      %v626 = vsub.s32 5, %v625
      %v627 = vrot.slane %v578, %v626
      %v628 = vlaneseq
      %v629 = vshrl.u32 %v628, 7
      %v630 = vsub.s32 1, %v629
      %v631 = vrot.slane %v579, %v630
      %v635 = vlaneseq
      %v636 = vshrl.u32 %v635, 7
      %v637 = vsub.s32 1, %v636
      %v638 = vrot.slane %v623, %v637
      %v639 = vlaneseq
      %v640 = vshrl.u32 %v639, 7
      %v641 = vsub.s32 1, %v640
      %v642 = vrot.slane %v627, %v641
      %v643 = vlaneseq
      %v644 = vshrl.u32 %v643, 7
      %v645 = vsub.s32 1, %v644
      %v646 = vrot.slane %v631, %v645
      %v647 = vmul.f32 %v618, %v638
      %v648 = vmul.f32 %v618, %v642
      %v649 = vmul.f32 %v618, %v646
      %650 = vset.pattern.permute.xlu0 10
      %651 = vperm.xlu0 %650, %v255
      %v652 = vpop.permute.xlu0 %651
      %v654 = vlaneseq
      %v655 = vshrl.u32 %v654, 7
      %v656 = vsub.s32 2, %v655
      %v657 = vrot.slane %v578, %v656
      %v658 = vlaneseq
      %v659 = vshrl.u32 %v658, 7
      %v660 = vsub.s32 6, %v659
      %v661 = vrot.slane %v578, %v660
      %v662 = vlaneseq
      %v663 = vshrl.u32 %v662, 7
      %v664 = vsub.s32 2, %v663
      %v665 = vrot.slane %v579, %v664
      %v669 = vlaneseq
      %v670 = vshrl.u32 %v669, 7
      %v671 = vsub.s32 2, %v670
      %v672 = vrot.slane %v657, %v671
      %v673 = vlaneseq
      %v674 = vshrl.u32 %v673, 7
      %v675 = vsub.s32 2, %v674
      %v676 = vrot.slane %v661, %v675
      %v677 = vlaneseq
      %v678 = vshrl.u32 %v677, 7
      %v679 = vsub.s32 2, %v678
      %v680 = vrot.slane %v665, %v679
      %v681 = vmul.f32 %v652, %v672
      %v682 = vmul.f32 %v652, %v676
      %v683 = vmul.f32 %v652, %v680
      %684 = vset.pattern.permute.xlu0 11
      %685 = vperm.xlu0 %684, %v255
      %v686 = vpop.permute.xlu0 %685
      %v688 = vlaneseq
      %v689 = vshrl.u32 %v688, 7
      %v690 = vsub.s32 3, %v689
      %v691 = vrot.slane %v578, %v690
      %v692 = vlaneseq
      %v693 = vshrl.u32 %v692, 7
      %v694 = vsub.s32 7, %v693
      %v695 = vrot.slane %v578, %v694
      %v696 = vlaneseq
      %v697 = vshrl.u32 %v696, 7
      %v698 = vsub.s32 3, %v697
      %v699 = vrot.slane %v579, %v698
      %v703 = vlaneseq
      %v704 = vshrl.u32 %v703, 7
      %v705 = vsub.s32 3, %v704
      %v706 = vrot.slane %v691, %v705
      %v707 = vlaneseq
      %v708 = vshrl.u32 %v707, 7
      %v709 = vsub.s32 3, %v708
      %v710 = vrot.slane %v695, %v709
      %v711 = vlaneseq
      %v712 = vshrl.u32 %v711, 7
      %v713 = vsub.s32 3, %v712
      %v714 = vrot.slane %v699, %v713
      %v715 = vmul.f32 %v686, %v706
      %v716 = vmul.f32 %v686, %v710
      %v717 = vmul.f32 %v686, %v714
      %v718 = vadd.f32 %v613, %v647
      %v719 = vadd.f32 %v614, %v648
      %v720 = vadd.f32 %v615, %v649
      %v721 = vadd.f32 %v681, %v715
      %v722 = vadd.f32 %v682, %v716
      %v723 = vadd.f32 %v683, %v717
      %v724 = vadd.f32 %v718, %v721
      %v725 = vadd.f32 %v719, %v722
      %v726 = vadd.f32 %v720, %v723
      %730 = vrot.lane.b32.xlu0 %v565, 127
      %v731 = vpop.permute.xlu0 %730
      %732 = vrot.lane.b32.xlu0 %v566, 127
      %v733 = vpop.permute.xlu0 %732
      %734 = vrot.lane.b32.xlu0 %v567, 127
      %v735 = vpop.permute.xlu0 %734
      %vm736 = vcmask 1039360
      %v737 = vsel %vm736, %v731, %v733
      %v738 = vsel %vm736, %v733, %v735
      %v742 = vadd.f32 %v416, %v737
      %v743 = vadd.f32 %v417, %v738
      %v744 = vadd.f32 %v418, %v735
      %748 = vrot.lane.b32.xlu0 %v724, 126
      %v749 = vpop.permute.xlu0 %748
      %750 = vrot.lane.b32.xlu0 %v725, 126
      %v751 = vpop.permute.xlu0 %750
      %752 = vrot.lane.b32.xlu0 %v726, 126
      %v753 = vpop.permute.xlu0 %752
      %vm754 = vcmask 1031168
      %v755 = vsel %vm754, %v749, %v751
      %v756 = vsel %vm754, %v751, %v753
      %v760 = vadd.f32 %v742, %v755
      %v761 = vadd.f32 %v743, %v756
      %v762 = vadd.f32 %v744, %v753
      %v763 = vld [vmem:[#allocation2] sm:$0xff]
      %v764 = vld [vmem:[#allocation2 + $0x8] sm:$0xf]
      %765 = vrot.lane.b32.xlu0 %v261, 127
      %v766 = vpop.permute.xlu0 %765
      %v767 = vrot.slane %v766, 4
      %v768 = vsel %vm736, %v767, %v766
      %v771 = vmul.f32 %v763, %v768
      %v772 = vmul.f32 %v764, %v767
      %773 = vset.pattern.permute.xlu0 12
      %774 = vperm.xlu0 %773, %v255
      %v775 = vpop.permute.xlu0 %774
      %v779 = vlaneseq
      %v780 = vshrl.u32 %v779, 7
      %v781 = vsub.s32 0, %v780
      %v782 = vrot.slane %v771, %v781
      %v783 = vlaneseq
      %v784 = vshrl.u32 %v783, 7
      %v785 = vsub.s32 4, %v784
      %v786 = vrot.slane %v771, %v785
      %v787 = vlaneseq
      %v788 = vshrl.u32 %v787, 7
      %v789 = vsub.s32 0, %v788
      %v790 = vrot.slane %v772, %v789
      %v794 = vlaneseq
      %v795 = vshrl.u32 %v794, 7
      %v796 = vsub.s32 0, %v795
      %v797 = vrot.slane %v782, %v796
      %v798 = vlaneseq
      %v799 = vshrl.u32 %v798, 7
      %v800 = vsub.s32 0, %v799
      %v801 = vrot.slane %v786, %v800
      %v802 = vlaneseq
      %v803 = vshrl.u32 %v802, 7
      %v804 = vsub.s32 0, %v803
      %v805 = vrot.slane %v790, %v804
      %v806 = vmul.f32 %v775, %v797
      %v807 = vmul.f32 %v775, %v801
      %v808 = vmul.f32 %v775, %v805
      %809 = vset.pattern.permute.xlu0 13
      %810 = vperm.xlu0 %809, %v255
      %v811 = vpop.permute.xlu0 %810
      %v813 = vlaneseq
      %v814 = vshrl.u32 %v813, 7
      %v815 = vsub.s32 1, %v814
      %v816 = vrot.slane %v771, %v815
      %v817 = vlaneseq
      %v818 = vshrl.u32 %v817, 7
      %v819 = vsub.s32 5, %v818
      %v820 = vrot.slane %v771, %v819
      %v821 = vlaneseq
      %v822 = vshrl.u32 %v821, 7
      %v823 = vsub.s32 1, %v822
      %v824 = vrot.slane %v772, %v823
      %v828 = vlaneseq
      %v829 = vshrl.u32 %v828, 7
      %v830 = vsub.s32 1, %v829
      %v831 = vrot.slane %v816, %v830
      %v832 = vlaneseq
      %v833 = vshrl.u32 %v832, 7
      %v834 = vsub.s32 1, %v833
      %v835 = vrot.slane %v820, %v834
      %v836 = vlaneseq
      %v837 = vshrl.u32 %v836, 7
      %v838 = vsub.s32 1, %v837
      %v839 = vrot.slane %v824, %v838
      %v840 = vmul.f32 %v811, %v831
      %v841 = vmul.f32 %v811, %v835
      %v842 = vmul.f32 %v811, %v839
      %843 = vset.pattern.permute.xlu0 14
      %844 = vperm.xlu0 %843, %v255
      %v845 = vpop.permute.xlu0 %844
      %v847 = vlaneseq
      %v848 = vshrl.u32 %v847, 7
      %v849 = vsub.s32 2, %v848
      %v850 = vrot.slane %v771, %v849
      %v851 = vlaneseq
      %v852 = vshrl.u32 %v851, 7
      %v853 = vsub.s32 6, %v852
      %v854 = vrot.slane %v771, %v853
      %v855 = vlaneseq
      %v856 = vshrl.u32 %v855, 7
      %v857 = vsub.s32 2, %v856
      %v858 = vrot.slane %v772, %v857
      %v862 = vlaneseq
      %v863 = vshrl.u32 %v862, 7
      %v864 = vsub.s32 2, %v863
      %v865 = vrot.slane %v850, %v864
      %v866 = vlaneseq
      %v867 = vshrl.u32 %v866, 7
      %v868 = vsub.s32 2, %v867
      %v869 = vrot.slane %v854, %v868
      %v870 = vlaneseq
      %v871 = vshrl.u32 %v870, 7
      %v872 = vsub.s32 2, %v871
      %v873 = vrot.slane %v858, %v872
      %v874 = vmul.f32 %v845, %v865
      %v875 = vmul.f32 %v845, %v869
      %v876 = vmul.f32 %v845, %v873
      %877 = vset.pattern.permute.xlu0 15
      %878 = vperm.xlu0 %877, %v255
      %v879 = vpop.permute.xlu0 %878
      %v881 = vlaneseq
      %v882 = vshrl.u32 %v881, 7
      %v883 = vsub.s32 3, %v882
      %v884 = vrot.slane %v771, %v883
      %v885 = vlaneseq
      %v886 = vshrl.u32 %v885, 7
      %v887 = vsub.s32 7, %v886
      %v888 = vrot.slane %v771, %v887
      %v889 = vlaneseq
      %v890 = vshrl.u32 %v889, 7
      %v891 = vsub.s32 3, %v890
      %v892 = vrot.slane %v772, %v891
      %v896 = vlaneseq
      %v897 = vshrl.u32 %v896, 7
      %v898 = vsub.s32 3, %v897
      %v899 = vrot.slane %v884, %v898
      %v900 = vlaneseq
      %v901 = vshrl.u32 %v900, 7
      %v902 = vsub.s32 3, %v901
      %v903 = vrot.slane %v888, %v902
      %v904 = vlaneseq
      %v905 = vshrl.u32 %v904, 7
      %v906 = vsub.s32 3, %v905
      %v907 = vrot.slane %v892, %v906
      %v908 = vmul.f32 %v879, %v899
      %v909 = vmul.f32 %v879, %v903
      %v910 = vmul.f32 %v879, %v907
      %v911 = vadd.f32 %v806, %v840
      %v912 = vadd.f32 %v807, %v841
      %v913 = vadd.f32 %v808, %v842
      %v914 = vadd.f32 %v874, %v908
      %v915 = vadd.f32 %v875, %v909
      %v916 = vadd.f32 %v876, %v910
      %v917 = vadd.f32 %v911, %v914
      %v918 = vadd.f32 %v912, %v915
      %v919 = vadd.f32 %v913, %v916
      %v920 = vld [vmem:[#allocation2 + $0x4] sm:$0xff]
      %921 = vset.pattern.permute.xlu0 16
      %922 = vperm.xlu0 %921, %v255
      %v923 = vpop.permute.xlu0 %922
      %v926 = vlaneseq
      %v927 = vshrl.u32 %v926, 7
      %v928 = vsub.s32 0, %v927
      %v929 = vrot.slane %v920, %v928
      %v930 = vlaneseq
      %v931 = vshrl.u32 %v930, 7
      %v932 = vsub.s32 4, %v931
      %v933 = vrot.slane %v920, %v932
      %v936 = vlaneseq
      %v937 = vshrl.u32 %v936, 7
      %v938 = vsub.s32 0, %v937
      %v939 = vrot.slane %v929, %v938
      %v940 = vlaneseq
      %v941 = vshrl.u32 %v940, 7
      %v942 = vsub.s32 0, %v941
      %v943 = vrot.slane %v933, %v942
      %v944 = vmul.f32 %v923, %v939
      %v945 = vmul.f32 %v923, %v943
      %946 = vset.pattern.permute.xlu0 17
      %947 = vperm.xlu0 %946, %v255
      %v948 = vpop.permute.xlu0 %947
      %v950 = vlaneseq
      %v951 = vshrl.u32 %v950, 7
      %v952 = vsub.s32 1, %v951
      %v953 = vrot.slane %v920, %v952
      %v954 = vlaneseq
      %v955 = vshrl.u32 %v954, 7
      %v956 = vsub.s32 5, %v955
      %v957 = vrot.slane %v920, %v956
      %v960 = vlaneseq
      %v961 = vshrl.u32 %v960, 7
      %v962 = vsub.s32 1, %v961
      %v963 = vrot.slane %v953, %v962
      %v964 = vlaneseq
      %v965 = vshrl.u32 %v964, 7
      %v966 = vsub.s32 1, %v965
      %v967 = vrot.slane %v957, %v966
      %v968 = vmul.f32 %v948, %v963
      %v969 = vmul.f32 %v948, %v967
      %970 = vset.pattern.permute.xlu0 18
      %971 = vperm.xlu0 %970, %v255
      %v972 = vpop.permute.xlu0 %971
      %v974 = vlaneseq
      %v975 = vshrl.u32 %v974, 7
      %v976 = vsub.s32 2, %v975
      %v977 = vrot.slane %v920, %v976
      %v978 = vlaneseq
      %v979 = vshrl.u32 %v978, 7
      %v980 = vsub.s32 6, %v979
      %v981 = vrot.slane %v920, %v980
      %v984 = vlaneseq
      %v985 = vshrl.u32 %v984, 7
      %v986 = vsub.s32 2, %v985
      %v987 = vrot.slane %v977, %v986
      %v988 = vlaneseq
      %v989 = vshrl.u32 %v988, 7
      %v990 = vsub.s32 2, %v989
      %v991 = vrot.slane %v981, %v990
      %v992 = vmul.f32 %v972, %v987
      %v993 = vmul.f32 %v972, %v991
      %994 = vset.pattern.permute.xlu0 19
      %995 = vperm.xlu0 %994, %v255
      %v996 = vpop.permute.xlu0 %995
      %v998 = vlaneseq
      %v999 = vshrl.u32 %v998, 7
      %v1000 = vsub.s32 3, %v999
      %v1001 = vrot.slane %v920, %v1000
      %v1002 = vlaneseq
      %v1003 = vshrl.u32 %v1002, 7
      %v1004 = vsub.s32 7, %v1003
      %v1005 = vrot.slane %v920, %v1004
      %v1008 = vlaneseq
      %v1009 = vshrl.u32 %v1008, 7
      %v1010 = vsub.s32 3, %v1009
      %v1011 = vrot.slane %v1001, %v1010
      %v1012 = vlaneseq
      %v1013 = vshrl.u32 %v1012, 7
      %v1014 = vsub.s32 3, %v1013
      %v1015 = vrot.slane %v1005, %v1014
      %v1016 = vmul.f32 %v996, %v1011
      %v1017 = vmul.f32 %v996, %v1015
      %v1018 = vadd.f32 %v944, %v968
      %v1019 = vadd.f32 %v945, %v969
      %v1020 = vadd.f32 %v992, %v1016
      %v1021 = vadd.f32 %v993, %v1017
      %v1022 = vadd.f32 %v1018, %v1020
      %v1023 = vadd.f32 %v1019, %v1021
      %v1024 = vld [vmem:[#allocation2 + $0x4] sm:$0xff]
      %v1025 = vld [vmem:[#allocation2 + $0xc] sm:$0xf]
      %1026 = vrot.lane.b32.xlu0 %v570, 1
      %v1027 = vpop.permute.xlu0 %1026
      %v1028 = vrot.slane %v1027, 4
      %vm1029 = vcmask 7168
      %v1030 = vsel %vm1029, %v1028, %v1027
      %v1033 = vmul.f32 %v1024, %v1030
      %v1034 = vmul.f32 %v1025, %v1028
      %1035 = vset.pattern.permute.xlu0 20
      %1036 = vperm.xlu0 %1035, %v255
      %v1037 = vpop.permute.xlu0 %1036
      %v1041 = vlaneseq
      %v1042 = vshrl.u32 %v1041, 7
      %v1043 = vsub.s32 0, %v1042
      %v1044 = vrot.slane %v1033, %v1043
      %v1045 = vlaneseq
      %v1046 = vshrl.u32 %v1045, 7
      %v1047 = vsub.s32 4, %v1046
      %v1048 = vrot.slane %v1033, %v1047
      %v1049 = vlaneseq
      %v1050 = vshrl.u32 %v1049, 7
      %v1051 = vsub.s32 0, %v1050
      %v1052 = vrot.slane %v1034, %v1051
      %v1056 = vlaneseq
      %v1057 = vshrl.u32 %v1056, 7
      %v1058 = vsub.s32 0, %v1057
      %v1059 = vrot.slane %v1044, %v1058
      %v1060 = vlaneseq
      %v1061 = vshrl.u32 %v1060, 7
      %v1062 = vsub.s32 0, %v1061
      %v1063 = vrot.slane %v1048, %v1062
      %v1064 = vlaneseq
      %v1065 = vshrl.u32 %v1064, 7
      %v1066 = vsub.s32 0, %v1065
      %v1067 = vrot.slane %v1052, %v1066
      %v1068 = vmul.f32 %v1037, %v1059
      %v1069 = vmul.f32 %v1037, %v1063
      %v1070 = vmul.f32 %v1037, %v1067
      %1071 = vset.pattern.permute.xlu0 21
      %1072 = vperm.xlu0 %1071, %v255
      %v1073 = vpop.permute.xlu0 %1072
      %v1075 = vlaneseq
      %v1076 = vshrl.u32 %v1075, 7
      %v1077 = vsub.s32 1, %v1076
      %v1078 = vrot.slane %v1033, %v1077
      %v1079 = vlaneseq
      %v1080 = vshrl.u32 %v1079, 7
      %v1081 = vsub.s32 5, %v1080
      %v1082 = vrot.slane %v1033, %v1081
      %v1083 = vlaneseq
      %v1084 = vshrl.u32 %v1083, 7
      %v1085 = vsub.s32 1, %v1084
      %v1086 = vrot.slane %v1034, %v1085
      %v1090 = vlaneseq
      %v1091 = vshrl.u32 %v1090, 7
      %v1092 = vsub.s32 1, %v1091
      %v1093 = vrot.slane %v1078, %v1092
      %v1094 = vlaneseq
      %v1095 = vshrl.u32 %v1094, 7
      %v1096 = vsub.s32 1, %v1095
      %v1097 = vrot.slane %v1082, %v1096
      %v1098 = vlaneseq
      %v1099 = vshrl.u32 %v1098, 7
      %v1100 = vsub.s32 1, %v1099
      %v1101 = vrot.slane %v1086, %v1100
      %v1102 = vmul.f32 %v1073, %v1093
      %v1103 = vmul.f32 %v1073, %v1097
      %v1104 = vmul.f32 %v1073, %v1101
      %1105 = vset.pattern.permute.xlu0 22
      %1106 = vperm.xlu0 %1105, %v255
      %v1107 = vpop.permute.xlu0 %1106
      %v1109 = vlaneseq
      %v1110 = vshrl.u32 %v1109, 7
      %v1111 = vsub.s32 2, %v1110
      %v1112 = vrot.slane %v1033, %v1111
      %v1113 = vlaneseq
      %v1114 = vshrl.u32 %v1113, 7
      %v1115 = vsub.s32 6, %v1114
      %v1116 = vrot.slane %v1033, %v1115
      %v1117 = vlaneseq
      %v1118 = vshrl.u32 %v1117, 7
      %v1119 = vsub.s32 2, %v1118
      %v1120 = vrot.slane %v1034, %v1119
      %v1124 = vlaneseq
      %v1125 = vshrl.u32 %v1124, 7
      %v1126 = vsub.s32 2, %v1125
      %v1127 = vrot.slane %v1112, %v1126
      %v1128 = vlaneseq
      %v1129 = vshrl.u32 %v1128, 7
      %v1130 = vsub.s32 2, %v1129
      %v1131 = vrot.slane %v1116, %v1130
      %v1132 = vlaneseq
      %v1133 = vshrl.u32 %v1132, 7
      %v1134 = vsub.s32 2, %v1133
      %v1135 = vrot.slane %v1120, %v1134
      %v1136 = vmul.f32 %v1107, %v1127
      %v1137 = vmul.f32 %v1107, %v1131
      %v1138 = vmul.f32 %v1107, %v1135
      %1139 = vset.pattern.permute.xlu0 23
      %1140 = vperm.xlu0 %1139, %v255
      %v1141 = vpop.permute.xlu0 %1140
      %v1143 = vlaneseq
      %v1144 = vshrl.u32 %v1143, 7
      %v1145 = vsub.s32 3, %v1144
      %v1146 = vrot.slane %v1033, %v1145
      %v1147 = vlaneseq
      %v1148 = vshrl.u32 %v1147, 7
      %v1149 = vsub.s32 7, %v1148
      %v1150 = vrot.slane %v1033, %v1149
      %v1151 = vlaneseq
      %v1152 = vshrl.u32 %v1151, 7
      %v1153 = vsub.s32 3, %v1152
      %v1154 = vrot.slane %v1034, %v1153
      %v1158 = vlaneseq
      %v1159 = vshrl.u32 %v1158, 7
      %v1160 = vsub.s32 3, %v1159
      %v1161 = vrot.slane %v1146, %v1160
      %v1162 = vlaneseq
      %v1163 = vshrl.u32 %v1162, 7
      %v1164 = vsub.s32 3, %v1163
      %v1165 = vrot.slane %v1150, %v1164
      %v1166 = vlaneseq
      %v1167 = vshrl.u32 %v1166, 7
      %v1168 = vsub.s32 3, %v1167
      %v1169 = vrot.slane %v1154, %v1168
      %v1170 = vmul.f32 %v1141, %v1161
      %v1171 = vmul.f32 %v1141, %v1165
      %v1172 = vmul.f32 %v1141, %v1169
      %v1173 = vadd.f32 %v1068, %v1102
      %v1174 = vadd.f32 %v1069, %v1103
      %v1175 = vadd.f32 %v1070, %v1104
      %v1176 = vadd.f32 %v1136, %v1170
      %v1177 = vadd.f32 %v1137, %v1171
      %v1178 = vadd.f32 %v1138, %v1172
      %v1179 = vadd.f32 %v1173, %v1176
      %v1180 = vadd.f32 %v1174, %v1177
      %v1181 = vadd.f32 %v1175, %v1178
      %1184 = vrot.lane.b32.xlu0 %v1022, 127
      %v1185 = vpop.permute.xlu0 %1184
      %1186 = vrot.lane.b32.xlu0 %v1023, 127
      %v1187 = vpop.permute.xlu0 %1186
      %v1188 = vsel %vm736, %v1185, %v1187
      %v1192 = vadd.f32 %v917, %v1185
      %v1193 = vadd.f32 %v918, %v1188
      %v1194 = vadd.f32 %v919, %v1187
      %1198 = vrot.lane.b32.xlu0 %v1179, 126
      %v1199 = vpop.permute.xlu0 %1198
      %1200 = vrot.lane.b32.xlu0 %v1180, 126
      %v1201 = vpop.permute.xlu0 %1200
      %1202 = vrot.lane.b32.xlu0 %v1181, 126
      %v1203 = vpop.permute.xlu0 %1202
      %v1204 = vsel %vm754, %v1199, %v1201
      %v1205 = vsel %vm754, %v1201, %v1203
      %v1209 = vadd.f32 %v1192, %v1199
      %v1210 = vadd.f32 %v1193, %v1204
      %v1211 = vadd.f32 %v1194, %v1205
      %v1212 = vld [vmem:[#allocation2 + $0x4] sm:$0xff]
      %v1213 = vld [vmem:[#allocation2 + $0xc] sm:$0xf]
      %1214 = vrot.lane.b32.xlu0 %v261, 15
      %v1215 = vpop.permute.xlu0 %1214
      %v1216 = vrot.slane %v1215, 4
      %vm1217 = vcmask 121856
      %v1218 = vsel %vm1217, %v1216, %v1215
      %v1221 = vmul.f32 %v1212, %v1218
      %v1222 = vmul.f32 %v1213, %v1216
      %1223 = vset.pattern.permute.xlu0 24
      %1224 = vperm.xlu0 %1223, %v255
      %v1225 = vpop.permute.xlu0 %1224
      %v1229 = vlaneseq
      %v1230 = vshrl.u32 %v1229, 7
      %v1231 = vsub.s32 0, %v1230
      %v1232 = vrot.slane %v1221, %v1231
      %v1233 = vlaneseq
      %v1234 = vshrl.u32 %v1233, 7
      %v1235 = vsub.s32 4, %v1234
      %v1236 = vrot.slane %v1221, %v1235
      %v1237 = vlaneseq
      %v1238 = vshrl.u32 %v1237, 7
      %v1239 = vsub.s32 0, %v1238
      %v1240 = vrot.slane %v1222, %v1239
      %v1244 = vlaneseq
      %v1245 = vshrl.u32 %v1244, 7
      %v1246 = vsub.s32 0, %v1245
      %v1247 = vrot.slane %v1232, %v1246
      %v1248 = vlaneseq
      %v1249 = vshrl.u32 %v1248, 7
      %v1250 = vsub.s32 0, %v1249
      %v1251 = vrot.slane %v1236, %v1250
      %v1252 = vlaneseq
      %v1253 = vshrl.u32 %v1252, 7
      %v1254 = vsub.s32 0, %v1253
      %v1255 = vrot.slane %v1240, %v1254
      %v1256 = vmul.f32 %v1225, %v1247
      %v1257 = vmul.f32 %v1225, %v1251
      %v1258 = vmul.f32 %v1225, %v1255
      %1259 = vset.pattern.permute.xlu0 25
      %1260 = vperm.xlu0 %1259, %v255
      %v1261 = vpop.permute.xlu0 %1260
      %v1263 = vlaneseq
      %v1264 = vshrl.u32 %v1263, 7
      %v1265 = vsub.s32 1, %v1264
      %v1266 = vrot.slane %v1221, %v1265
      %v1267 = vlaneseq
      %v1268 = vshrl.u32 %v1267, 7
      %v1269 = vsub.s32 5, %v1268
      %v1270 = vrot.slane %v1221, %v1269
      %v1271 = vlaneseq
      %v1272 = vshrl.u32 %v1271, 7
      %v1273 = vsub.s32 1, %v1272
      %v1274 = vrot.slane %v1222, %v1273
      %v1278 = vlaneseq
      %v1279 = vshrl.u32 %v1278, 7
      %v1280 = vsub.s32 1, %v1279
      %v1281 = vrot.slane %v1266, %v1280
      %v1282 = vlaneseq
      %v1283 = vshrl.u32 %v1282, 7
      %v1284 = vsub.s32 1, %v1283
      %v1285 = vrot.slane %v1270, %v1284
      %v1286 = vlaneseq
      %v1287 = vshrl.u32 %v1286, 7
      %v1288 = vsub.s32 1, %v1287
      %v1289 = vrot.slane %v1274, %v1288
      %v1290 = vmul.f32 %v1261, %v1281
      %v1291 = vmul.f32 %v1261, %v1285
      %v1292 = vmul.f32 %v1261, %v1289
      %1293 = vset.pattern.permute.xlu0 26
      %1294 = vperm.xlu0 %1293, %v255
      %v1295 = vpop.permute.xlu0 %1294
      %v1297 = vlaneseq
      %v1298 = vshrl.u32 %v1297, 7
      %v1299 = vsub.s32 2, %v1298
      %v1300 = vrot.slane %v1221, %v1299
      %v1301 = vlaneseq
      %v1302 = vshrl.u32 %v1301, 7
      %v1303 = vsub.s32 6, %v1302
      %v1304 = vrot.slane %v1221, %v1303
      %v1305 = vlaneseq
      %v1306 = vshrl.u32 %v1305, 7
      %v1307 = vsub.s32 2, %v1306
      %v1308 = vrot.slane %v1222, %v1307
      %v1312 = vlaneseq
      %v1313 = vshrl.u32 %v1312, 7
      %v1314 = vsub.s32 2, %v1313
      %v1315 = vrot.slane %v1300, %v1314
      %v1316 = vlaneseq
      %v1317 = vshrl.u32 %v1316, 7
      %v1318 = vsub.s32 2, %v1317
      %v1319 = vrot.slane %v1304, %v1318
      %v1320 = vlaneseq
      %v1321 = vshrl.u32 %v1320, 7
      %v1322 = vsub.s32 2, %v1321
      %v1323 = vrot.slane %v1308, %v1322
      %v1324 = vmul.f32 %v1295, %v1315
      %v1325 = vmul.f32 %v1295, %v1319
      %v1326 = vmul.f32 %v1295, %v1323
      %1327 = vset.pattern.permute.xlu0 27
      %1328 = vperm.xlu0 %1327, %v255
      %v1329 = vpop.permute.xlu0 %1328
      %v1331 = vlaneseq
      %v1332 = vshrl.u32 %v1331, 7
      %v1333 = vsub.s32 3, %v1332
      %v1334 = vrot.slane %v1221, %v1333
      %v1335 = vlaneseq
      %v1336 = vshrl.u32 %v1335, 7
      %v1337 = vsub.s32 7, %v1336
      %v1338 = vrot.slane %v1221, %v1337
      %v1339 = vlaneseq
      %v1340 = vshrl.u32 %v1339, 7
      %v1341 = vsub.s32 3, %v1340
      %v1342 = vrot.slane %v1222, %v1341
      %v1346 = vlaneseq
      %v1347 = vshrl.u32 %v1346, 7
      %v1348 = vsub.s32 3, %v1347
      %v1349 = vrot.slane %v1334, %v1348
      %v1350 = vlaneseq
      %v1351 = vshrl.u32 %v1350, 7
      %v1352 = vsub.s32 3, %v1351
      %v1353 = vrot.slane %v1338, %v1352
      %v1354 = vlaneseq
      %v1355 = vshrl.u32 %v1354, 7
      %v1356 = vsub.s32 3, %v1355
      %v1357 = vrot.slane %v1342, %v1356
      %v1358 = vmul.f32 %v1329, %v1349
      %v1359 = vmul.f32 %v1329, %v1353
      %v1360 = vmul.f32 %v1329, %v1357
      %v1361 = vadd.f32 %v1256, %v1290
      %v1362 = vadd.f32 %v1257, %v1291
      %v1363 = vadd.f32 %v1258, %v1292
      %v1364 = vadd.f32 %v1324, %v1358
      %v1365 = vadd.f32 %v1325, %v1359
      %v1366 = vadd.f32 %v1326, %v1360
      %v1367 = vadd.f32 %v1361, %v1364
      %v1368 = vadd.f32 %v1362, %v1365
      %v1369 = vadd.f32 %v1363, %v1366
      %v1370 = vld [vmem:[#allocation2 + $0x4] sm:$0xff]
      %v1371 = vld [vmem:[#allocation2 + $0xc] sm:$0xf]
      %1372 = vset.pattern.permute.xlu0 28
      %1373 = vperm.xlu0 %1372, %v255
      %v1374 = vpop.permute.xlu0 %1373
      %v1378 = vlaneseq
      %v1379 = vshrl.u32 %v1378, 7
      %v1380 = vsub.s32 0, %v1379
      %v1381 = vrot.slane %v1370, %v1380
      %v1382 = vlaneseq
      %v1383 = vshrl.u32 %v1382, 7
      %v1384 = vsub.s32 4, %v1383
      %v1385 = vrot.slane %v1370, %v1384
      %v1386 = vlaneseq
      %v1387 = vshrl.u32 %v1386, 7
      %v1388 = vsub.s32 0, %v1387
      %v1389 = vrot.slane %v1371, %v1388
      %v1393 = vlaneseq
      %v1394 = vshrl.u32 %v1393, 7
      %v1395 = vsub.s32 0, %v1394
      %v1396 = vrot.slane %v1381, %v1395
      %v1397 = vlaneseq
      %v1398 = vshrl.u32 %v1397, 7
      %v1399 = vsub.s32 0, %v1398
      %v1400 = vrot.slane %v1385, %v1399
      %v1401 = vlaneseq
      %v1402 = vshrl.u32 %v1401, 7
      %v1403 = vsub.s32 0, %v1402
      %v1404 = vrot.slane %v1389, %v1403
      %v1405 = vmul.f32 %v1374, %v1396
      %v1406 = vmul.f32 %v1374, %v1400
      %v1407 = vmul.f32 %v1374, %v1404
      %1408 = vset.pattern.permute.xlu0 29
      %1409 = vperm.xlu0 %1408, %v255
      %v1410 = vpop.permute.xlu0 %1409
      %v1412 = vlaneseq
      %v1413 = vshrl.u32 %v1412, 7
      %v1414 = vsub.s32 1, %v1413
      %v1415 = vrot.slane %v1370, %v1414
      %v1416 = vlaneseq
      %v1417 = vshrl.u32 %v1416, 7
      %v1418 = vsub.s32 5, %v1417
      %v1419 = vrot.slane %v1370, %v1418
      %v1420 = vlaneseq
      %v1421 = vshrl.u32 %v1420, 7
      %v1422 = vsub.s32 1, %v1421
      %v1423 = vrot.slane %v1371, %v1422
      %v1427 = vlaneseq
      %v1428 = vshrl.u32 %v1427, 7
      %v1429 = vsub.s32 1, %v1428
      %v1430 = vrot.slane %v1415, %v1429
      %v1431 = vlaneseq
      %v1432 = vshrl.u32 %v1431, 7
      %v1433 = vsub.s32 1, %v1432
      %v1434 = vrot.slane %v1419, %v1433
      %v1435 = vlaneseq
      %v1436 = vshrl.u32 %v1435, 7
      %v1437 = vsub.s32 1, %v1436
      %v1438 = vrot.slane %v1423, %v1437
      %v1439 = vmul.f32 %v1410, %v1430
      %v1440 = vmul.f32 %v1410, %v1434
      %v1441 = vmul.f32 %v1410, %v1438
      %1442 = vset.pattern.permute.xlu0 30
      %1443 = vperm.xlu0 %1442, %v255
      %v1444 = vpop.permute.xlu0 %1443
      %v1446 = vlaneseq
      %v1447 = vshrl.u32 %v1446, 7
      %v1448 = vsub.s32 2, %v1447
      %v1449 = vrot.slane %v1370, %v1448
      %v1450 = vlaneseq
      %v1451 = vshrl.u32 %v1450, 7
      %v1452 = vsub.s32 6, %v1451
      %v1453 = vrot.slane %v1370, %v1452
      %v1454 = vlaneseq
      %v1455 = vshrl.u32 %v1454, 7
      %v1456 = vsub.s32 2, %v1455
      %v1457 = vrot.slane %v1371, %v1456
      %v1461 = vlaneseq
      %v1462 = vshrl.u32 %v1461, 7
      %v1463 = vsub.s32 2, %v1462
      %v1464 = vrot.slane %v1449, %v1463
      %v1465 = vlaneseq
      %v1466 = vshrl.u32 %v1465, 7
      %v1467 = vsub.s32 2, %v1466
      %v1468 = vrot.slane %v1453, %v1467
      %v1469 = vlaneseq
      %v1470 = vshrl.u32 %v1469, 7
      %v1471 = vsub.s32 2, %v1470
      %v1472 = vrot.slane %v1457, %v1471
      %v1473 = vmul.f32 %v1444, %v1464
      %v1474 = vmul.f32 %v1444, %v1468
      %v1475 = vmul.f32 %v1444, %v1472
      %1476 = vset.pattern.permute.xlu0 31
      %1477 = vperm.xlu0 %1476, %v255
      %v1478 = vpop.permute.xlu0 %1477
      %v1480 = vlaneseq
      %v1481 = vshrl.u32 %v1480, 7
      %v1482 = vsub.s32 3, %v1481
      %v1483 = vrot.slane %v1370, %v1482
      %v1484 = vlaneseq
      %v1485 = vshrl.u32 %v1484, 7
      %v1486 = vsub.s32 7, %v1485
      %v1487 = vrot.slane %v1370, %v1486
      %v1488 = vlaneseq
      %v1489 = vshrl.u32 %v1488, 7
      %v1490 = vsub.s32 3, %v1489
      %v1491 = vrot.slane %v1371, %v1490
      %v1495 = vlaneseq
      %v1496 = vshrl.u32 %v1495, 7
      %v1497 = vsub.s32 3, %v1496
      %v1498 = vrot.slane %v1483, %v1497
      %v1499 = vlaneseq
      %v1500 = vshrl.u32 %v1499, 7
      %v1501 = vsub.s32 3, %v1500
      %v1502 = vrot.slane %v1487, %v1501
      %v1503 = vlaneseq
      %v1504 = vshrl.u32 %v1503, 7
      %v1505 = vsub.s32 3, %v1504
      %v1506 = vrot.slane %v1491, %v1505
      %v1507 = vmul.f32 %v1478, %v1498
      %v1508 = vmul.f32 %v1478, %v1502
      %v1509 = vmul.f32 %v1478, %v1506
      %v1510 = vadd.f32 %v1405, %v1439
      %v1511 = vadd.f32 %v1406, %v1440
      %v1512 = vadd.f32 %v1407, %v1441
      %v1513 = vadd.f32 %v1473, %v1507
      %v1514 = vadd.f32 %v1474, %v1508
      %v1515 = vadd.f32 %v1475, %v1509
      %v1516 = vadd.f32 %v1510, %v1513
      %v1517 = vadd.f32 %v1511, %v1514
      %v1518 = vadd.f32 %v1512, %v1515
      %1519 = vrot.lane.b32.xlu0 %v570, 17
      %v1520 = vpop.permute.xlu0 %1519
      %v1521 = vrot.slane %v1520, 4
      %vm1522 = vcmask 138240
      %v1523 = vsel %vm1522, %v1521, %v1520
      %v1526 = vmul.f32 %v1370, %v1523
      %v1527 = vmul.f32 %v1371, %v1521
      %1528 = vset.pattern.permute.xlu0 32
      %1529 = vperm.xlu0 %1528, %v255
      %v1530 = vpop.permute.xlu0 %1529
      %v1534 = vlaneseq
      %v1535 = vshrl.u32 %v1534, 7
      %v1536 = vsub.s32 0, %v1535
      %v1537 = vrot.slane %v1526, %v1536
      %v1538 = vlaneseq
      %v1539 = vshrl.u32 %v1538, 7
      %v1540 = vsub.s32 4, %v1539
      %v1541 = vrot.slane %v1526, %v1540
      %v1542 = vlaneseq
      %v1543 = vshrl.u32 %v1542, 7
      %v1544 = vsub.s32 0, %v1543
      %v1545 = vrot.slane %v1527, %v1544
      %v1549 = vlaneseq
      %v1550 = vshrl.u32 %v1549, 7
      %v1551 = vsub.s32 0, %v1550
      %v1552 = vrot.slane %v1537, %v1551
      %v1553 = vlaneseq
      %v1554 = vshrl.u32 %v1553, 7
      %v1555 = vsub.s32 0, %v1554
      %v1556 = vrot.slane %v1541, %v1555
      %v1557 = vlaneseq
      %v1558 = vshrl.u32 %v1557, 7
      %v1559 = vsub.s32 0, %v1558
      %v1560 = vrot.slane %v1545, %v1559
      %v1561 = vmul.f32 %v1530, %v1552
      %v1562 = vmul.f32 %v1530, %v1556
      %v1563 = vmul.f32 %v1530, %v1560
      %1564 = vset.pattern.permute.xlu0 33
      %1565 = vperm.xlu0 %1564, %v255
      %v1566 = vpop.permute.xlu0 %1565
      %v1568 = vlaneseq
      %v1569 = vshrl.u32 %v1568, 7
      %v1570 = vsub.s32 1, %v1569
      %v1571 = vrot.slane %v1526, %v1570
      %v1572 = vlaneseq
      %v1573 = vshrl.u32 %v1572, 7
      %v1574 = vsub.s32 5, %v1573
      %v1575 = vrot.slane %v1526, %v1574
      %v1576 = vlaneseq
      %v1577 = vshrl.u32 %v1576, 7
      %v1578 = vsub.s32 1, %v1577
      %v1579 = vrot.slane %v1527, %v1578
      %v1583 = vlaneseq
      %v1584 = vshrl.u32 %v1583, 7
      %v1585 = vsub.s32 1, %v1584
      %v1586 = vrot.slane %v1571, %v1585
      %v1587 = vlaneseq
      %v1588 = vshrl.u32 %v1587, 7
      %v1589 = vsub.s32 1, %v1588
      %v1590 = vrot.slane %v1575, %v1589
      %v1591 = vlaneseq
      %v1592 = vshrl.u32 %v1591, 7
      %v1593 = vsub.s32 1, %v1592
      %v1594 = vrot.slane %v1579, %v1593
      %v1595 = vmul.f32 %v1566, %v1586
      %v1596 = vmul.f32 %v1566, %v1590
      %v1597 = vmul.f32 %v1566, %v1594
      %1598 = vset.pattern.permute.xlu0 34
      %1599 = vperm.xlu0 %1598, %v255
      %v1600 = vpop.permute.xlu0 %1599
      %v1602 = vlaneseq
      %v1603 = vshrl.u32 %v1602, 7
      %v1604 = vsub.s32 2, %v1603
      %v1605 = vrot.slane %v1526, %v1604
      %v1606 = vlaneseq
      %v1607 = vshrl.u32 %v1606, 7
      %v1608 = vsub.s32 6, %v1607
      %v1609 = vrot.slane %v1526, %v1608
      %v1610 = vlaneseq
      %v1611 = vshrl.u32 %v1610, 7
      %v1612 = vsub.s32 2, %v1611
      %v1613 = vrot.slane %v1527, %v1612
      %v1617 = vlaneseq
      %v1618 = vshrl.u32 %v1617, 7
      %v1619 = vsub.s32 2, %v1618
      %v1620 = vrot.slane %v1605, %v1619
      %v1621 = vlaneseq
      %v1622 = vshrl.u32 %v1621, 7
      %v1623 = vsub.s32 2, %v1622
      %v1624 = vrot.slane %v1609, %v1623
      %v1625 = vlaneseq
      %v1626 = vshrl.u32 %v1625, 7
      %v1627 = vsub.s32 2, %v1626
      %v1628 = vrot.slane %v1613, %v1627
      %v1629 = vmul.f32 %v1600, %v1620
      %v1630 = vmul.f32 %v1600, %v1624
      %v1631 = vmul.f32 %v1600, %v1628
      %1632 = vset.pattern.permute.xlu0 35
      %1633 = vperm.xlu0 %1632, %v255
      %v1634 = vpop.permute.xlu0 %1633
      %v1636 = vlaneseq
      %v1637 = vshrl.u32 %v1636, 7
      %v1638 = vsub.s32 3, %v1637
      %v1639 = vrot.slane %v1526, %v1638
      %v1640 = vlaneseq
      %v1641 = vshrl.u32 %v1640, 7
      %v1642 = vsub.s32 7, %v1641
      %v1643 = vrot.slane %v1526, %v1642
      %v1644 = vlaneseq
      %v1645 = vshrl.u32 %v1644, 7
      %v1646 = vsub.s32 3, %v1645
      %v1647 = vrot.slane %v1527, %v1646
      %v1651 = vlaneseq
      %v1652 = vshrl.u32 %v1651, 7
      %v1653 = vsub.s32 3, %v1652
      %v1654 = vrot.slane %v1639, %v1653
      %v1655 = vlaneseq
      %v1656 = vshrl.u32 %v1655, 7
      %v1657 = vsub.s32 3, %v1656
      %v1658 = vrot.slane %v1643, %v1657
      %v1659 = vlaneseq
      %v1660 = vshrl.u32 %v1659, 7
      %v1661 = vsub.s32 3, %v1660
      %v1662 = vrot.slane %v1647, %v1661
      %v1663 = vmul.f32 %v1634, %v1654
      %v1664 = vmul.f32 %v1634, %v1658
      %v1665 = vmul.f32 %v1634, %v1662
      %v1666 = vadd.f32 %v1561, %v1595
      %v1667 = vadd.f32 %v1562, %v1596
      %v1668 = vadd.f32 %v1563, %v1597
      %v1669 = vadd.f32 %v1629, %v1663
      %v1670 = vadd.f32 %v1630, %v1664
      %v1671 = vadd.f32 %v1631, %v1665
      %v1672 = vadd.f32 %v1666, %v1669
      %v1673 = vadd.f32 %v1667, %v1670
      %v1674 = vadd.f32 %v1668, %v1671
      %1678 = vrot.lane.b32.xlu0 %v1516, 127
      %v1679 = vpop.permute.xlu0 %1678
      %1680 = vrot.lane.b32.xlu0 %v1517, 127
      %v1681 = vpop.permute.xlu0 %1680
      %1682 = vrot.lane.b32.xlu0 %v1518, 127
      %v1683 = vpop.permute.xlu0 %1682
      %v1684 = vsel %vm736, %v1679, %v1681
      %v1685 = vsel %vm736, %v1681, %v1683
      %v1689 = vadd.f32 %v1367, %v1684
      %v1690 = vadd.f32 %v1368, %v1685
      %v1691 = vadd.f32 %v1369, %v1683
      %1695 = vrot.lane.b32.xlu0 %v1672, 126
      %v1696 = vpop.permute.xlu0 %1695
      %1697 = vrot.lane.b32.xlu0 %v1673, 126
      %v1698 = vpop.permute.xlu0 %1697
      %1699 = vrot.lane.b32.xlu0 %v1674, 126
      %v1700 = vpop.permute.xlu0 %1699
      %v1701 = vsel %vm754, %v1696, %v1698
      %v1702 = vsel %vm754, %v1698, %v1700
      %v1706 = vadd.f32 %v1689, %v1701
      %v1707 = vadd.f32 %v1690, %v1702
      %v1708 = vadd.f32 %v1691, %v1700
      %1712 = vrot.lane.b32.xlu0 %v1209, 112
      %v1713 = vpop.permute.xlu0 %1712
      %1714 = vrot.lane.b32.xlu0 %v1210, 112
      %v1715 = vpop.permute.xlu0 %1714
      %1716 = vrot.lane.b32.xlu0 %v1211, 112
      %v1717 = vpop.permute.xlu0 %1716
      %vm1718 = vcmask 916480
      %v1719 = vsel %vm1718, %v1713, %v1715
      %v1720 = vsel %vm1718, %v1715, %v1717
      %v1724 = vadd.f32 %v760, %v1719
      %v1725 = vadd.f32 %v761, %v1720
      %v1726 = vadd.f32 %v762, %v1717
      %1730 = vrot.lane.b32.xlu0 %v1706, 96
      %v1731 = vpop.permute.xlu0 %1730
      %1732 = vrot.lane.b32.xlu0 %v1707, 96
      %v1733 = vpop.permute.xlu0 %1732
      %1734 = vrot.lane.b32.xlu0 %v1708, 96
      %v1735 = vpop.permute.xlu0 %1734
      %vm1736 = vcmask 785408
      %v1737 = vsel %vm1736, %v1731, %v1733
      %v1738 = vsel %vm1736, %v1733, %v1735
      %v1742 = vadd.f32 %v1724, %v1731
      %v1743 = vadd.f32 %v1725, %v1737
      %v1744 = vadd.f32 %v1726, %v1738
      %1746 = vset.pattern.permute.xlu0 0
      %1747 = vperm.xlu0 %1746, %v256
      %v1748 = vpop.permute.xlu0 %1747
      %v1750 = vadd.f32 %v1742, %v1748
      %v1751 = vadd.f32 %v1743, %v1748
      %v1752 = vadd.f32 %v1744, %v1748
      %v1753 = vmax.f32 %v1750, 0.0
      %v1754 = vmax.f32 %v1751, 0.0
      %v1755 = vmax.f32 %v1752, 0.0
      %v1759 = vcombine.low %v1753, %v1754
      %1760 = vrot.lane.b32.xlu0 %v1759, 17
      %v1761 = vpop.permute.xlu0 %1760
      %1762 = vrot.lane.b32.xlu0 %v1755, 17
      %v1763 = vpop.permute.xlu0 %1762
      %v1764 = vrot.slane %v1761, 4
      %v1765 = vrot.slane %v1763, 4
      %vm1766 = vcmask 1043456
      %v1767 = vsel %vm1766, %v1764, %v1765
      %v1768 = vsel %vm1522, %v1761, %v1767
      %1770 = vst [vmem:[#allocation2 + $0x4] sm:$0xff] %v1768
      %v1771 = vld [vmem:[%s3] sm:$0xf]
      %v1772 = vld [vmem:[%s4] sm:$0xf]
      %v1773 = vld [vmem:[#allocation2] sm:$0xff]
      %v1774 = vld [vmem:[#allocation2 + $0x8] sm:$0xf]
      %v1775 = vmul.f32 %v1773, %v266
      %v1776 = vmul.f32 %v1774, %v264
      %1778 = vset.pattern.permute.xlu0 0
      %1779 = vperm.xlu0 %1778, %v1771
      %v1780 = vpop.permute.xlu0 %1779
      %v1784 = vlaneseq
      %v1785 = vshrl.u32 %v1784, 7
      %v1786 = vsub.s32 0, %v1785
      %v1787 = vrot.slane %v1775, %v1786
      %v1788 = vlaneseq
      %v1789 = vshrl.u32 %v1788, 7
      %v1790 = vsub.s32 4, %v1789
      %v1791 = vrot.slane %v1775, %v1790
      %v1792 = vlaneseq
      %v1793 = vshrl.u32 %v1792, 7
      %v1794 = vsub.s32 0, %v1793
      %v1795 = vrot.slane %v1776, %v1794
      %v1799 = vlaneseq
      %v1800 = vshrl.u32 %v1799, 7
      %v1801 = vsub.s32 0, %v1800
      %v1802 = vrot.slane %v1787, %v1801
      %v1803 = vlaneseq
      %v1804 = vshrl.u32 %v1803, 7
      %v1805 = vsub.s32 0, %v1804
      %v1806 = vrot.slane %v1791, %v1805
      %v1807 = vlaneseq
      %v1808 = vshrl.u32 %v1807, 7
      %v1809 = vsub.s32 0, %v1808
      %v1810 = vrot.slane %v1795, %v1809
      %v1811 = vmul.f32 %v1780, %v1802
      %v1812 = vmul.f32 %v1780, %v1806
      %v1813 = vmul.f32 %v1780, %v1810
      %1814 = vset.pattern.permute.xlu0 1
      %1815 = vperm.xlu0 %1814, %v1771
      %v1816 = vpop.permute.xlu0 %1815
      %v1818 = vlaneseq
      %v1819 = vshrl.u32 %v1818, 7
      %v1820 = vsub.s32 1, %v1819
      %v1821 = vrot.slane %v1775, %v1820
      %v1822 = vlaneseq
      %v1823 = vshrl.u32 %v1822, 7
      %v1824 = vsub.s32 5, %v1823
      %v1825 = vrot.slane %v1775, %v1824
      %v1826 = vlaneseq
      %v1827 = vshrl.u32 %v1826, 7
      %v1828 = vsub.s32 1, %v1827
      %v1829 = vrot.slane %v1776, %v1828
      %v1833 = vlaneseq
      %v1834 = vshrl.u32 %v1833, 7
      %v1835 = vsub.s32 1, %v1834
      %v1836 = vrot.slane %v1821, %v1835
      %v1837 = vlaneseq
      %v1838 = vshrl.u32 %v1837, 7
      %v1839 = vsub.s32 1, %v1838
      %v1840 = vrot.slane %v1825, %v1839
      %v1841 = vlaneseq
      %v1842 = vshrl.u32 %v1841, 7
      %v1843 = vsub.s32 1, %v1842
      %v1844 = vrot.slane %v1829, %v1843
      %v1845 = vmul.f32 %v1816, %v1836
      %v1846 = vmul.f32 %v1816, %v1840
      %v1847 = vmul.f32 %v1816, %v1844
      %1848 = vset.pattern.permute.xlu0 2
      %1849 = vperm.xlu0 %1848, %v1771
      %v1850 = vpop.permute.xlu0 %1849
      %v1852 = vlaneseq
      %v1853 = vshrl.u32 %v1852, 7
      %v1854 = vsub.s32 2, %v1853
      %v1855 = vrot.slane %v1775, %v1854
      %v1856 = vlaneseq
      %v1857 = vshrl.u32 %v1856, 7
      %v1858 = vsub.s32 6, %v1857
      %v1859 = vrot.slane %v1775, %v1858
      %v1860 = vlaneseq
      %v1861 = vshrl.u32 %v1860, 7
      %v1862 = vsub.s32 2, %v1861
      %v1863 = vrot.slane %v1776, %v1862
      %v1867 = vlaneseq
      %v1868 = vshrl.u32 %v1867, 7
      %v1869 = vsub.s32 2, %v1868
      %v1870 = vrot.slane %v1855, %v1869
      %v1871 = vlaneseq
      %v1872 = vshrl.u32 %v1871, 7
      %v1873 = vsub.s32 2, %v1872
      %v1874 = vrot.slane %v1859, %v1873
      %v1875 = vlaneseq
      %v1876 = vshrl.u32 %v1875, 7
      %v1877 = vsub.s32 2, %v1876
      %v1878 = vrot.slane %v1863, %v1877
      %v1879 = vmul.f32 %v1850, %v1870
      %v1880 = vmul.f32 %v1850, %v1874
      %v1881 = vmul.f32 %v1850, %v1878
      %1882 = vset.pattern.permute.xlu0 3
      %1883 = vperm.xlu0 %1882, %v1771
      %v1884 = vpop.permute.xlu0 %1883
      %v1886 = vlaneseq
      %v1887 = vshrl.u32 %v1886, 7
      %v1888 = vsub.s32 3, %v1887
      %v1889 = vrot.slane %v1775, %v1888
      %v1890 = vlaneseq
      %v1891 = vshrl.u32 %v1890, 7
      %v1892 = vsub.s32 7, %v1891
      %v1893 = vrot.slane %v1775, %v1892
      %v1894 = vlaneseq
      %v1895 = vshrl.u32 %v1894, 7
      %v1896 = vsub.s32 3, %v1895
      %v1897 = vrot.slane %v1776, %v1896
      %v1901 = vlaneseq
      %v1902 = vshrl.u32 %v1901, 7
      %v1903 = vsub.s32 3, %v1902
      %v1904 = vrot.slane %v1889, %v1903
      %v1905 = vlaneseq
      %v1906 = vshrl.u32 %v1905, 7
      %v1907 = vsub.s32 3, %v1906
      %v1908 = vrot.slane %v1893, %v1907
      %v1909 = vlaneseq
      %v1910 = vshrl.u32 %v1909, 7
      %v1911 = vsub.s32 3, %v1910
      %v1912 = vrot.slane %v1897, %v1911
      %v1913 = vmul.f32 %v1884, %v1904
      %v1914 = vmul.f32 %v1884, %v1908
      %v1915 = vmul.f32 %v1884, %v1912
      %v1916 = vadd.f32 %v1811, %v1845
      %v1917 = vadd.f32 %v1812, %v1846
      %v1918 = vadd.f32 %v1813, %v1847
      %v1919 = vadd.f32 %v1879, %v1913
      %v1920 = vadd.f32 %v1880, %v1914
      %v1921 = vadd.f32 %v1881, %v1915
      %v1922 = vadd.f32 %v1916, %v1919
      %v1923 = vadd.f32 %v1917, %v1920
      %v1924 = vadd.f32 %v1918, %v1921
      %v1925 = vld [vmem:[#allocation2] sm:$0xff]
      %v1926 = vld [vmem:[#allocation2 + $0x8] sm:$0xf]
      %1927 = vset.pattern.permute.xlu0 4
      %1928 = vperm.xlu0 %1927, %v1771
      %v1929 = vpop.permute.xlu0 %1928
      %v1933 = vlaneseq
      %v1934 = vshrl.u32 %v1933, 7
      %v1935 = vsub.s32 0, %v1934
      %v1936 = vrot.slane %v1925, %v1935
      %v1937 = vlaneseq
      %v1938 = vshrl.u32 %v1937, 7
      %v1939 = vsub.s32 4, %v1938
      %v1940 = vrot.slane %v1925, %v1939
      %v1941 = vlaneseq
      %v1942 = vshrl.u32 %v1941, 7
      %v1943 = vsub.s32 0, %v1942
      %v1944 = vrot.slane %v1926, %v1943
      %v1948 = vlaneseq
      %v1949 = vshrl.u32 %v1948, 7
      %v1950 = vsub.s32 0, %v1949
      %v1951 = vrot.slane %v1936, %v1950
      %v1952 = vlaneseq
      %v1953 = vshrl.u32 %v1952, 7
      %v1954 = vsub.s32 0, %v1953
      %v1955 = vrot.slane %v1940, %v1954
      %v1956 = vlaneseq
      %v1957 = vshrl.u32 %v1956, 7
      %v1958 = vsub.s32 0, %v1957
      %v1959 = vrot.slane %v1944, %v1958
      %v1960 = vmul.f32 %v1929, %v1951
      %v1961 = vmul.f32 %v1929, %v1955
      %v1962 = vmul.f32 %v1929, %v1959
      %1963 = vset.pattern.permute.xlu0 5
      %1964 = vperm.xlu0 %1963, %v1771
      %v1965 = vpop.permute.xlu0 %1964
      %v1967 = vlaneseq
      %v1968 = vshrl.u32 %v1967, 7
      %v1969 = vsub.s32 1, %v1968
      %v1970 = vrot.slane %v1925, %v1969
      %v1971 = vlaneseq
      %v1972 = vshrl.u32 %v1971, 7
      %v1973 = vsub.s32 5, %v1972
      %v1974 = vrot.slane %v1925, %v1973
      %v1975 = vlaneseq
      %v1976 = vshrl.u32 %v1975, 7
      %v1977 = vsub.s32 1, %v1976
      %v1978 = vrot.slane %v1926, %v1977
      %v1982 = vlaneseq
      %v1983 = vshrl.u32 %v1982, 7
      %v1984 = vsub.s32 1, %v1983
      %v1985 = vrot.slane %v1970, %v1984
      %v1986 = vlaneseq
      %v1987 = vshrl.u32 %v1986, 7
      %v1988 = vsub.s32 1, %v1987
      %v1989 = vrot.slane %v1974, %v1988
      %v1990 = vlaneseq
      %v1991 = vshrl.u32 %v1990, 7
      %v1992 = vsub.s32 1, %v1991
      %v1993 = vrot.slane %v1978, %v1992
      %v1994 = vmul.f32 %v1965, %v1985
      %v1995 = vmul.f32 %v1965, %v1989
      %v1996 = vmul.f32 %v1965, %v1993
      %1997 = vset.pattern.permute.xlu0 6
      %1998 = vperm.xlu0 %1997, %v1771
      %v1999 = vpop.permute.xlu0 %1998
      %v2001 = vlaneseq
      %v2002 = vshrl.u32 %v2001, 7
      %v2003 = vsub.s32 2, %v2002
      %v2004 = vrot.slane %v1925, %v2003
      %v2005 = vlaneseq
      %v2006 = vshrl.u32 %v2005, 7
      %v2007 = vsub.s32 6, %v2006
      %v2008 = vrot.slane %v1925, %v2007
      %v2009 = vlaneseq
      %v2010 = vshrl.u32 %v2009, 7
      %v2011 = vsub.s32 2, %v2010
      %v2012 = vrot.slane %v1926, %v2011
      %v2016 = vlaneseq
      %v2017 = vshrl.u32 %v2016, 7
      %v2018 = vsub.s32 2, %v2017
      %v2019 = vrot.slane %v2004, %v2018
      %v2020 = vlaneseq
      %v2021 = vshrl.u32 %v2020, 7
      %v2022 = vsub.s32 2, %v2021
      %v2023 = vrot.slane %v2008, %v2022
      %v2024 = vlaneseq
      %v2025 = vshrl.u32 %v2024, 7
      %v2026 = vsub.s32 2, %v2025
      %v2027 = vrot.slane %v2012, %v2026
      %v2028 = vmul.f32 %v1999, %v2019
      %v2029 = vmul.f32 %v1999, %v2023
      %v2030 = vmul.f32 %v1999, %v2027
      %2031 = vset.pattern.permute.xlu0 7
      %2032 = vperm.xlu0 %2031, %v1771
      %v2033 = vpop.permute.xlu0 %2032
      %v2035 = vlaneseq
      %v2036 = vshrl.u32 %v2035, 7
      %v2037 = vsub.s32 3, %v2036
      %v2038 = vrot.slane %v1925, %v2037
      %v2039 = vlaneseq
      %v2040 = vshrl.u32 %v2039, 7
      %v2041 = vsub.s32 7, %v2040
      %v2042 = vrot.slane %v1925, %v2041
      %v2043 = vlaneseq
      %v2044 = vshrl.u32 %v2043, 7
      %v2045 = vsub.s32 3, %v2044
      %v2046 = vrot.slane %v1926, %v2045
      %v2050 = vlaneseq
      %v2051 = vshrl.u32 %v2050, 7
      %v2052 = vsub.s32 3, %v2051
      %v2053 = vrot.slane %v2038, %v2052
      %v2054 = vlaneseq
      %v2055 = vshrl.u32 %v2054, 7
      %v2056 = vsub.s32 3, %v2055
      %v2057 = vrot.slane %v2042, %v2056
      %v2058 = vlaneseq
      %v2059 = vshrl.u32 %v2058, 7
      %v2060 = vsub.s32 3, %v2059
      %v2061 = vrot.slane %v2046, %v2060
      %v2062 = vmul.f32 %v2033, %v2053
      %v2063 = vmul.f32 %v2033, %v2057
      %v2064 = vmul.f32 %v2033, %v2061
      %v2065 = vadd.f32 %v1960, %v1994
      %v2066 = vadd.f32 %v1961, %v1995
      %v2067 = vadd.f32 %v1962, %v1996
      %v2068 = vadd.f32 %v2028, %v2062
      %v2069 = vadd.f32 %v2029, %v2063
      %v2070 = vadd.f32 %v2030, %v2064
      %v2071 = vadd.f32 %v2065, %v2068
      %v2072 = vadd.f32 %v2066, %v2069
      %v2073 = vadd.f32 %v2067, %v2070
      %v2074 = vmul.f32 %v1925, %v575
      %v2075 = vmul.f32 %v1926, %v573
      %2076 = vset.pattern.permute.xlu0 8
      %2077 = vperm.xlu0 %2076, %v1771
      %v2078 = vpop.permute.xlu0 %2077
      %v2082 = vlaneseq
      %v2083 = vshrl.u32 %v2082, 7
      %v2084 = vsub.s32 0, %v2083
      %v2085 = vrot.slane %v2074, %v2084
      %v2086 = vlaneseq
      %v2087 = vshrl.u32 %v2086, 7
      %v2088 = vsub.s32 4, %v2087
      %v2089 = vrot.slane %v2074, %v2088
      %v2090 = vlaneseq
      %v2091 = vshrl.u32 %v2090, 7
      %v2092 = vsub.s32 0, %v2091
      %v2093 = vrot.slane %v2075, %v2092
      %v2097 = vlaneseq
      %v2098 = vshrl.u32 %v2097, 7
      %v2099 = vsub.s32 0, %v2098
      %v2100 = vrot.slane %v2085, %v2099
      %v2101 = vlaneseq
      %v2102 = vshrl.u32 %v2101, 7
      %v2103 = vsub.s32 0, %v2102
      %v2104 = vrot.slane %v2089, %v2103
      %v2105 = vlaneseq
      %v2106 = vshrl.u32 %v2105, 7
      %v2107 = vsub.s32 0, %v2106
      %v2108 = vrot.slane %v2093, %v2107
      %v2109 = vmul.f32 %v2078, %v2100
      %v2110 = vmul.f32 %v2078, %v2104
      %v2111 = vmul.f32 %v2078, %v2108
      %2112 = vset.pattern.permute.xlu0 9
      %2113 = vperm.xlu0 %2112, %v1771
      %v2114 = vpop.permute.xlu0 %2113
      %v2116 = vlaneseq
      %v2117 = vshrl.u32 %v2116, 7
      %v2118 = vsub.s32 1, %v2117
      %v2119 = vrot.slane %v2074, %v2118
      %v2120 = vlaneseq
      %v2121 = vshrl.u32 %v2120, 7
      %v2122 = vsub.s32 5, %v2121
      %v2123 = vrot.slane %v2074, %v2122
      %v2124 = vlaneseq
      %v2125 = vshrl.u32 %v2124, 7
      %v2126 = vsub.s32 1, %v2125
      %v2127 = vrot.slane %v2075, %v2126
      %v2131 = vlaneseq
      %v2132 = vshrl.u32 %v2131, 7
      %v2133 = vsub.s32 1, %v2132
      %v2134 = vrot.slane %v2119, %v2133
      %v2135 = vlaneseq
      %v2136 = vshrl.u32 %v2135, 7
      %v2137 = vsub.s32 1, %v2136
      %v2138 = vrot.slane %v2123, %v2137
      %v2139 = vlaneseq
      %v2140 = vshrl.u32 %v2139, 7
      %v2141 = vsub.s32 1, %v2140
      %v2142 = vrot.slane %v2127, %v2141
      %v2143 = vmul.f32 %v2114, %v2134
      %v2144 = vmul.f32 %v2114, %v2138
      %v2145 = vmul.f32 %v2114, %v2142
      %2146 = vset.pattern.permute.xlu0 10
      %2147 = vperm.xlu0 %2146, %v1771
      %v2148 = vpop.permute.xlu0 %2147
      %v2150 = vlaneseq
      %v2151 = vshrl.u32 %v2150, 7
      %v2152 = vsub.s32 2, %v2151
      %v2153 = vrot.slane %v2074, %v2152
      %v2154 = vlaneseq
      %v2155 = vshrl.u32 %v2154, 7
      %v2156 = vsub.s32 6, %v2155
      %v2157 = vrot.slane %v2074, %v2156
      %v2158 = vlaneseq
      %v2159 = vshrl.u32 %v2158, 7
      %v2160 = vsub.s32 2, %v2159
      %v2161 = vrot.slane %v2075, %v2160
      %v2165 = vlaneseq
      %v2166 = vshrl.u32 %v2165, 7
      %v2167 = vsub.s32 2, %v2166
      %v2168 = vrot.slane %v2153, %v2167
      %v2169 = vlaneseq
      %v2170 = vshrl.u32 %v2169, 7
      %v2171 = vsub.s32 2, %v2170
      %v2172 = vrot.slane %v2157, %v2171
      %v2173 = vlaneseq
      %v2174 = vshrl.u32 %v2173, 7
      %v2175 = vsub.s32 2, %v2174
      %v2176 = vrot.slane %v2161, %v2175
      %v2177 = vmul.f32 %v2148, %v2168
      %v2178 = vmul.f32 %v2148, %v2172
      %v2179 = vmul.f32 %v2148, %v2176
      %2180 = vset.pattern.permute.xlu0 11
      %2181 = vperm.xlu0 %2180, %v1771
      %v2182 = vpop.permute.xlu0 %2181
      %v2184 = vlaneseq
      %v2185 = vshrl.u32 %v2184, 7
      %v2186 = vsub.s32 3, %v2185
      %v2187 = vrot.slane %v2074, %v2186
      %v2188 = vlaneseq
      %v2189 = vshrl.u32 %v2188, 7
      %v2190 = vsub.s32 7, %v2189
      %v2191 = vrot.slane %v2074, %v2190
      %v2192 = vlaneseq
      %v2193 = vshrl.u32 %v2192, 7
      %v2194 = vsub.s32 3, %v2193
      %v2195 = vrot.slane %v2075, %v2194
      %v2199 = vlaneseq
      %v2200 = vshrl.u32 %v2199, 7
      %v2201 = vsub.s32 3, %v2200
      %v2202 = vrot.slane %v2187, %v2201
      %v2203 = vlaneseq
      %v2204 = vshrl.u32 %v2203, 7
      %v2205 = vsub.s32 3, %v2204
      %v2206 = vrot.slane %v2191, %v2205
      %v2207 = vlaneseq
      %v2208 = vshrl.u32 %v2207, 7
      %v2209 = vsub.s32 3, %v2208
      %v2210 = vrot.slane %v2195, %v2209
      %v2211 = vmul.f32 %v2182, %v2202
      %v2212 = vmul.f32 %v2182, %v2206
      %v2213 = vmul.f32 %v2182, %v2210
      %v2214 = vadd.f32 %v2109, %v2143
      %v2215 = vadd.f32 %v2110, %v2144
      %v2216 = vadd.f32 %v2111, %v2145
      %v2217 = vadd.f32 %v2177, %v2211
      %v2218 = vadd.f32 %v2178, %v2212
      %v2219 = vadd.f32 %v2179, %v2213
      %v2220 = vadd.f32 %v2214, %v2217
      %v2221 = vadd.f32 %v2215, %v2218
      %v2222 = vadd.f32 %v2216, %v2219
      %2226 = vrot.lane.b32.xlu0 %v2071, 127
      %v2227 = vpop.permute.xlu0 %2226
      %2228 = vrot.lane.b32.xlu0 %v2072, 127
      %v2229 = vpop.permute.xlu0 %2228
      %2230 = vrot.lane.b32.xlu0 %v2073, 127
      %v2231 = vpop.permute.xlu0 %2230
      %v2232 = vsel %vm736, %v2227, %v2229
      %v2233 = vsel %vm736, %v2229, %v2231
      %v2237 = vadd.f32 %v1922, %v2232
      %v2238 = vadd.f32 %v1923, %v2233
      %v2239 = vadd.f32 %v1924, %v2231
      %2243 = vrot.lane.b32.xlu0 %v2220, 126
      %v2244 = vpop.permute.xlu0 %2243
      %2245 = vrot.lane.b32.xlu0 %v2221, 126
      %v2246 = vpop.permute.xlu0 %2245
      %2247 = vrot.lane.b32.xlu0 %v2222, 126
      %v2248 = vpop.permute.xlu0 %2247
      %v2249 = vsel %vm754, %v2244, %v2246
      %v2250 = vsel %vm754, %v2246, %v2248
      %v2254 = vadd.f32 %v2237, %v2249
      %v2255 = vadd.f32 %v2238, %v2250
      %v2256 = vadd.f32 %v2239, %v2248
      %v2257 = vld [vmem:[#allocation2] sm:$0xff]
      %v2258 = vld [vmem:[#allocation2 + $0x8] sm:$0xf]
      %v2259 = vmul.f32 %v2257, %v768
      %v2260 = vmul.f32 %v2258, %v767
      %2261 = vset.pattern.permute.xlu0 12
      %2262 = vperm.xlu0 %2261, %v1771
      %v2263 = vpop.permute.xlu0 %2262
      %v2267 = vlaneseq
      %v2268 = vshrl.u32 %v2267, 7
      %v2269 = vsub.s32 0, %v2268
      %v2270 = vrot.slane %v2259, %v2269
      %v2271 = vlaneseq
      %v2272 = vshrl.u32 %v2271, 7
      %v2273 = vsub.s32 4, %v2272
      %v2274 = vrot.slane %v2259, %v2273
      %v2275 = vlaneseq
      %v2276 = vshrl.u32 %v2275, 7
      %v2277 = vsub.s32 0, %v2276
      %v2278 = vrot.slane %v2260, %v2277
      %v2282 = vlaneseq
      %v2283 = vshrl.u32 %v2282, 7
      %v2284 = vsub.s32 0, %v2283
      %v2285 = vrot.slane %v2270, %v2284
      %v2286 = vlaneseq
      %v2287 = vshrl.u32 %v2286, 7
      %v2288 = vsub.s32 0, %v2287
      %v2289 = vrot.slane %v2274, %v2288
      %v2290 = vlaneseq
      %v2291 = vshrl.u32 %v2290, 7
      %v2292 = vsub.s32 0, %v2291
      %v2293 = vrot.slane %v2278, %v2292
      %v2294 = vmul.f32 %v2263, %v2285
      %v2295 = vmul.f32 %v2263, %v2289
      %v2296 = vmul.f32 %v2263, %v2293
      %2297 = vset.pattern.permute.xlu0 13
      %2298 = vperm.xlu0 %2297, %v1771
      %v2299 = vpop.permute.xlu0 %2298
      %v2301 = vlaneseq
      %v2302 = vshrl.u32 %v2301, 7
      %v2303 = vsub.s32 1, %v2302
      %v2304 = vrot.slane %v2259, %v2303
      %v2305 = vlaneseq
      %v2306 = vshrl.u32 %v2305, 7
      %v2307 = vsub.s32 5, %v2306
      %v2308 = vrot.slane %v2259, %v2307
      %v2309 = vlaneseq
      %v2310 = vshrl.u32 %v2309, 7
      %v2311 = vsub.s32 1, %v2310
      %v2312 = vrot.slane %v2260, %v2311
      %v2316 = vlaneseq
      %v2317 = vshrl.u32 %v2316, 7
      %v2318 = vsub.s32 1, %v2317
      %v2319 = vrot.slane %v2304, %v2318
      %v2320 = vlaneseq
      %v2321 = vshrl.u32 %v2320, 7
      %v2322 = vsub.s32 1, %v2321
      %v2323 = vrot.slane %v2308, %v2322
      %v2324 = vlaneseq
      %v2325 = vshrl.u32 %v2324, 7
      %v2326 = vsub.s32 1, %v2325
      %v2327 = vrot.slane %v2312, %v2326
      %v2328 = vmul.f32 %v2299, %v2319
      %v2329 = vmul.f32 %v2299, %v2323
      %v2330 = vmul.f32 %v2299, %v2327
      %2331 = vset.pattern.permute.xlu0 14
      %2332 = vperm.xlu0 %2331, %v1771
      %v2333 = vpop.permute.xlu0 %2332
      %v2335 = vlaneseq
      %v2336 = vshrl.u32 %v2335, 7
      %v2337 = vsub.s32 2, %v2336
      %v2338 = vrot.slane %v2259, %v2337
      %v2339 = vlaneseq
      %v2340 = vshrl.u32 %v2339, 7
      %v2341 = vsub.s32 6, %v2340
      %v2342 = vrot.slane %v2259, %v2341
      %v2343 = vlaneseq
      %v2344 = vshrl.u32 %v2343, 7
      %v2345 = vsub.s32 2, %v2344
      %v2346 = vrot.slane %v2260, %v2345
      %v2350 = vlaneseq
      %v2351 = vshrl.u32 %v2350, 7
      %v2352 = vsub.s32 2, %v2351
      %v2353 = vrot.slane %v2338, %v2352
      %v2354 = vlaneseq
      %v2355 = vshrl.u32 %v2354, 7
      %v2356 = vsub.s32 2, %v2355
      %v2357 = vrot.slane %v2342, %v2356
      %v2358 = vlaneseq
      %v2359 = vshrl.u32 %v2358, 7
      %v2360 = vsub.s32 2, %v2359
      %v2361 = vrot.slane %v2346, %v2360
      %v2362 = vmul.f32 %v2333, %v2353
      %v2363 = vmul.f32 %v2333, %v2357
      %v2364 = vmul.f32 %v2333, %v2361
      %2365 = vset.pattern.permute.xlu0 15
      %2366 = vperm.xlu0 %2365, %v1771
      %v2367 = vpop.permute.xlu0 %2366
      %v2369 = vlaneseq
      %v2370 = vshrl.u32 %v2369, 7
      %v2371 = vsub.s32 3, %v2370
      %v2372 = vrot.slane %v2259, %v2371
      %v2373 = vlaneseq
      %v2374 = vshrl.u32 %v2373, 7
      %v2375 = vsub.s32 7, %v2374
      %v2376 = vrot.slane %v2259, %v2375
      %v2377 = vlaneseq
      %v2378 = vshrl.u32 %v2377, 7
      %v2379 = vsub.s32 3, %v2378
      %v2380 = vrot.slane %v2260, %v2379
      %v2384 = vlaneseq
      %v2385 = vshrl.u32 %v2384, 7
      %v2386 = vsub.s32 3, %v2385
      %v2387 = vrot.slane %v2372, %v2386
      %v2388 = vlaneseq
      %v2389 = vshrl.u32 %v2388, 7
      %v2390 = vsub.s32 3, %v2389
      %v2391 = vrot.slane %v2376, %v2390
      %v2392 = vlaneseq
      %v2393 = vshrl.u32 %v2392, 7
      %v2394 = vsub.s32 3, %v2393
      %v2395 = vrot.slane %v2380, %v2394
      %v2396 = vmul.f32 %v2367, %v2387
      %v2397 = vmul.f32 %v2367, %v2391
      %v2398 = vmul.f32 %v2367, %v2395
      %v2399 = vadd.f32 %v2294, %v2328
      %v2400 = vadd.f32 %v2295, %v2329
      %v2401 = vadd.f32 %v2296, %v2330
      %v2402 = vadd.f32 %v2362, %v2396
      %v2403 = vadd.f32 %v2363, %v2397
      %v2404 = vadd.f32 %v2364, %v2398
      %v2405 = vadd.f32 %v2399, %v2402
      %v2406 = vadd.f32 %v2400, %v2403
      %v2407 = vadd.f32 %v2401, %v2404
      %v2408 = vld [vmem:[#allocation2 + $0x4] sm:$0xff]
      %2409 = vset.pattern.permute.xlu0 16
      %2410 = vperm.xlu0 %2409, %v1771
      %v2411 = vpop.permute.xlu0 %2410
      %v2414 = vlaneseq
      %v2415 = vshrl.u32 %v2414, 7
      %v2416 = vsub.s32 0, %v2415
      %v2417 = vrot.slane %v2408, %v2416
      %v2418 = vlaneseq
      %v2419 = vshrl.u32 %v2418, 7
      %v2420 = vsub.s32 4, %v2419
      %v2421 = vrot.slane %v2408, %v2420
      %v2424 = vlaneseq
      %v2425 = vshrl.u32 %v2424, 7
      %v2426 = vsub.s32 0, %v2425
      %v2427 = vrot.slane %v2417, %v2426
      %v2428 = vlaneseq
      %v2429 = vshrl.u32 %v2428, 7
      %v2430 = vsub.s32 0, %v2429
      %v2431 = vrot.slane %v2421, %v2430
      %v2432 = vmul.f32 %v2411, %v2427
      %v2433 = vmul.f32 %v2411, %v2431
      %2434 = vset.pattern.permute.xlu0 17
      %2435 = vperm.xlu0 %2434, %v1771
      %v2436 = vpop.permute.xlu0 %2435
      %v2438 = vlaneseq
      %v2439 = vshrl.u32 %v2438, 7
      %v2440 = vsub.s32 1, %v2439
      %v2441 = vrot.slane %v2408, %v2440
      %v2442 = vlaneseq
      %v2443 = vshrl.u32 %v2442, 7
      %v2444 = vsub.s32 5, %v2443
      %v2445 = vrot.slane %v2408, %v2444
      %v2448 = vlaneseq
      %v2449 = vshrl.u32 %v2448, 7
      %v2450 = vsub.s32 1, %v2449
      %v2451 = vrot.slane %v2441, %v2450
      %v2452 = vlaneseq
      %v2453 = vshrl.u32 %v2452, 7
      %v2454 = vsub.s32 1, %v2453
      %v2455 = vrot.slane %v2445, %v2454
      %v2456 = vmul.f32 %v2436, %v2451
      %v2457 = vmul.f32 %v2436, %v2455
      %2458 = vset.pattern.permute.xlu0 18
      %2459 = vperm.xlu0 %2458, %v1771
      %v2460 = vpop.permute.xlu0 %2459
      %v2462 = vlaneseq
      %v2463 = vshrl.u32 %v2462, 7
      %v2464 = vsub.s32 2, %v2463
      %v2465 = vrot.slane %v2408, %v2464
      %v2466 = vlaneseq
      %v2467 = vshrl.u32 %v2466, 7
      %v2468 = vsub.s32 6, %v2467
      %v2469 = vrot.slane %v2408, %v2468
      %v2472 = vlaneseq
      %v2473 = vshrl.u32 %v2472, 7
      %v2474 = vsub.s32 2, %v2473
      %v2475 = vrot.slane %v2465, %v2474
      %v2476 = vlaneseq
      %v2477 = vshrl.u32 %v2476, 7
      %v2478 = vsub.s32 2, %v2477
      %v2479 = vrot.slane %v2469, %v2478
      %v2480 = vmul.f32 %v2460, %v2475
      %v2481 = vmul.f32 %v2460, %v2479
      %2482 = vset.pattern.permute.xlu0 19
      %2483 = vperm.xlu0 %2482, %v1771
      %v2484 = vpop.permute.xlu0 %2483
      %v2486 = vlaneseq
      %v2487 = vshrl.u32 %v2486, 7
      %v2488 = vsub.s32 3, %v2487
      %v2489 = vrot.slane %v2408, %v2488
      %v2490 = vlaneseq
      %v2491 = vshrl.u32 %v2490, 7
      %v2492 = vsub.s32 7, %v2491
      %v2493 = vrot.slane %v2408, %v2492
      %v2496 = vlaneseq
      %v2497 = vshrl.u32 %v2496, 7
      %v2498 = vsub.s32 3, %v2497
      %v2499 = vrot.slane %v2489, %v2498
      %v2500 = vlaneseq
      %v2501 = vshrl.u32 %v2500, 7
      %v2502 = vsub.s32 3, %v2501
      %v2503 = vrot.slane %v2493, %v2502
      %v2504 = vmul.f32 %v2484, %v2499
      %v2505 = vmul.f32 %v2484, %v2503
      %v2506 = vadd.f32 %v2432, %v2456
      %v2507 = vadd.f32 %v2433, %v2457
      %v2508 = vadd.f32 %v2480, %v2504
      %v2509 = vadd.f32 %v2481, %v2505
      %v2510 = vadd.f32 %v2506, %v2508
      %v2511 = vadd.f32 %v2507, %v2509
      %v2512 = vld [vmem:[#allocation2 + $0x4] sm:$0xff]
      %v2513 = vld [vmem:[#allocation2 + $0xc] sm:$0xf]
      %v2514 = vmul.f32 %v2512, %v1030
      %v2515 = vmul.f32 %v2513, %v1028
      %2516 = vset.pattern.permute.xlu0 20
      %2517 = vperm.xlu0 %2516, %v1771
      %v2518 = vpop.permute.xlu0 %2517
      %v2522 = vlaneseq
      %v2523 = vshrl.u32 %v2522, 7
      %v2524 = vsub.s32 0, %v2523
      %v2525 = vrot.slane %v2514, %v2524
      %v2526 = vlaneseq
      %v2527 = vshrl.u32 %v2526, 7
      %v2528 = vsub.s32 4, %v2527
      %v2529 = vrot.slane %v2514, %v2528
      %v2530 = vlaneseq
      %v2531 = vshrl.u32 %v2530, 7
      %v2532 = vsub.s32 0, %v2531
      %v2533 = vrot.slane %v2515, %v2532
      %v2537 = vlaneseq
      %v2538 = vshrl.u32 %v2537, 7
      %v2539 = vsub.s32 0, %v2538
      %v2540 = vrot.slane %v2525, %v2539
      %v2541 = vlaneseq
      %v2542 = vshrl.u32 %v2541, 7
      %v2543 = vsub.s32 0, %v2542
      %v2544 = vrot.slane %v2529, %v2543
      %v2545 = vlaneseq
      %v2546 = vshrl.u32 %v2545, 7
      %v2547 = vsub.s32 0, %v2546
      %v2548 = vrot.slane %v2533, %v2547
      %v2549 = vmul.f32 %v2518, %v2540
      %v2550 = vmul.f32 %v2518, %v2544
      %v2551 = vmul.f32 %v2518, %v2548
      %2552 = vset.pattern.permute.xlu0 21
      %2553 = vperm.xlu0 %2552, %v1771
      %v2554 = vpop.permute.xlu0 %2553
      %v2556 = vlaneseq
      %v2557 = vshrl.u32 %v2556, 7
      %v2558 = vsub.s32 1, %v2557
      %v2559 = vrot.slane %v2514, %v2558
      %v2560 = vlaneseq
      %v2561 = vshrl.u32 %v2560, 7
      %v2562 = vsub.s32 5, %v2561
      %v2563 = vrot.slane %v2514, %v2562
      %v2564 = vlaneseq
      %v2565 = vshrl.u32 %v2564, 7
      %v2566 = vsub.s32 1, %v2565
      %v2567 = vrot.slane %v2515, %v2566
      %v2571 = vlaneseq
      %v2572 = vshrl.u32 %v2571, 7
      %v2573 = vsub.s32 1, %v2572
      %v2574 = vrot.slane %v2559, %v2573
      %v2575 = vlaneseq
      %v2576 = vshrl.u32 %v2575, 7
      %v2577 = vsub.s32 1, %v2576
      %v2578 = vrot.slane %v2563, %v2577
      %v2579 = vlaneseq
      %v2580 = vshrl.u32 %v2579, 7
      %v2581 = vsub.s32 1, %v2580
      %v2582 = vrot.slane %v2567, %v2581
      %v2583 = vmul.f32 %v2554, %v2574
      %v2584 = vmul.f32 %v2554, %v2578
      %v2585 = vmul.f32 %v2554, %v2582
      %2586 = vset.pattern.permute.xlu0 22
      %2587 = vperm.xlu0 %2586, %v1771
      %v2588 = vpop.permute.xlu0 %2587
      %v2590 = vlaneseq
      %v2591 = vshrl.u32 %v2590, 7
      %v2592 = vsub.s32 2, %v2591
      %v2593 = vrot.slane %v2514, %v2592
      %v2594 = vlaneseq
      %v2595 = vshrl.u32 %v2594, 7
      %v2596 = vsub.s32 6, %v2595
      %v2597 = vrot.slane %v2514, %v2596
      %v2598 = vlaneseq
      %v2599 = vshrl.u32 %v2598, 7
      %v2600 = vsub.s32 2, %v2599
      %v2601 = vrot.slane %v2515, %v2600
      %v2605 = vlaneseq
      %v2606 = vshrl.u32 %v2605, 7
      %v2607 = vsub.s32 2, %v2606
      %v2608 = vrot.slane %v2593, %v2607
      %v2609 = vlaneseq
      %v2610 = vshrl.u32 %v2609, 7
      %v2611 = vsub.s32 2, %v2610
      %v2612 = vrot.slane %v2597, %v2611
      %v2613 = vlaneseq
      %v2614 = vshrl.u32 %v2613, 7
      %v2615 = vsub.s32 2, %v2614
      %v2616 = vrot.slane %v2601, %v2615
      %v2617 = vmul.f32 %v2588, %v2608
      %v2618 = vmul.f32 %v2588, %v2612
      %v2619 = vmul.f32 %v2588, %v2616
      %2620 = vset.pattern.permute.xlu0 23
      %2621 = vperm.xlu0 %2620, %v1771
      %v2622 = vpop.permute.xlu0 %2621
      %v2624 = vlaneseq
      %v2625 = vshrl.u32 %v2624, 7
      %v2626 = vsub.s32 3, %v2625
      %v2627 = vrot.slane %v2514, %v2626
      %v2628 = vlaneseq
      %v2629 = vshrl.u32 %v2628, 7
      %v2630 = vsub.s32 7, %v2629
      %v2631 = vrot.slane %v2514, %v2630
      %v2632 = vlaneseq
      %v2633 = vshrl.u32 %v2632, 7
      %v2634 = vsub.s32 3, %v2633
      %v2635 = vrot.slane %v2515, %v2634
      %v2639 = vlaneseq
      %v2640 = vshrl.u32 %v2639, 7
      %v2641 = vsub.s32 3, %v2640
      %v2642 = vrot.slane %v2627, %v2641
      %v2643 = vlaneseq
      %v2644 = vshrl.u32 %v2643, 7
      %v2645 = vsub.s32 3, %v2644
      %v2646 = vrot.slane %v2631, %v2645
      %v2647 = vlaneseq
      %v2648 = vshrl.u32 %v2647, 7
      %v2649 = vsub.s32 3, %v2648
      %v2650 = vrot.slane %v2635, %v2649
      %v2651 = vmul.f32 %v2622, %v2642
      %v2652 = vmul.f32 %v2622, %v2646
      %v2653 = vmul.f32 %v2622, %v2650
      %v2654 = vadd.f32 %v2549, %v2583
      %v2655 = vadd.f32 %v2550, %v2584
      %v2656 = vadd.f32 %v2551, %v2585
      %v2657 = vadd.f32 %v2617, %v2651
      %v2658 = vadd.f32 %v2618, %v2652
      %v2659 = vadd.f32 %v2619, %v2653
      %v2660 = vadd.f32 %v2654, %v2657
      %v2661 = vadd.f32 %v2655, %v2658
      %v2662 = vadd.f32 %v2656, %v2659
      %2665 = vrot.lane.b32.xlu0 %v2510, 127
      %v2666 = vpop.permute.xlu0 %2665
      %2667 = vrot.lane.b32.xlu0 %v2511, 127
      %v2668 = vpop.permute.xlu0 %2667
      %v2669 = vsel %vm736, %v2666, %v2668
      %v2673 = vadd.f32 %v2405, %v2666
      %v2674 = vadd.f32 %v2406, %v2669
      %v2675 = vadd.f32 %v2407, %v2668
      %2679 = vrot.lane.b32.xlu0 %v2660, 126
      %v2680 = vpop.permute.xlu0 %2679
      %2681 = vrot.lane.b32.xlu0 %v2661, 126
      %v2682 = vpop.permute.xlu0 %2681
      %2683 = vrot.lane.b32.xlu0 %v2662, 126
      %v2684 = vpop.permute.xlu0 %2683
      %v2685 = vsel %vm754, %v2680, %v2682
      %v2686 = vsel %vm754, %v2682, %v2684
      %v2690 = vadd.f32 %v2673, %v2680
      %v2691 = vadd.f32 %v2674, %v2685
      %v2692 = vadd.f32 %v2675, %v2686
      %v2693 = vld [vmem:[#allocation2 + $0x4] sm:$0xff]
      %v2694 = vld [vmem:[#allocation2 + $0xc] sm:$0xf]
      %v2695 = vmul.f32 %v2693, %v1218
      %v2696 = vmul.f32 %v2694, %v1216
      %2697 = vset.pattern.permute.xlu0 24
      %2698 = vperm.xlu0 %2697, %v1771
      %v2699 = vpop.permute.xlu0 %2698
      %v2703 = vlaneseq
      %v2704 = vshrl.u32 %v2703, 7
      %v2705 = vsub.s32 0, %v2704
      %v2706 = vrot.slane %v2695, %v2705
      %v2707 = vlaneseq
      %v2708 = vshrl.u32 %v2707, 7
      %v2709 = vsub.s32 4, %v2708
      %v2710 = vrot.slane %v2695, %v2709
      %v2711 = vlaneseq
      %v2712 = vshrl.u32 %v2711, 7
      %v2713 = vsub.s32 0, %v2712
      %v2714 = vrot.slane %v2696, %v2713
      %v2718 = vlaneseq
      %v2719 = vshrl.u32 %v2718, 7
      %v2720 = vsub.s32 0, %v2719
      %v2721 = vrot.slane %v2706, %v2720
      %v2722 = vlaneseq
      %v2723 = vshrl.u32 %v2722, 7
      %v2724 = vsub.s32 0, %v2723
      %v2725 = vrot.slane %v2710, %v2724
      %v2726 = vlaneseq
      %v2727 = vshrl.u32 %v2726, 7
      %v2728 = vsub.s32 0, %v2727
      %v2729 = vrot.slane %v2714, %v2728
      %v2730 = vmul.f32 %v2699, %v2721
      %v2731 = vmul.f32 %v2699, %v2725
      %v2732 = vmul.f32 %v2699, %v2729
      %2733 = vset.pattern.permute.xlu0 25
      %2734 = vperm.xlu0 %2733, %v1771
      %v2735 = vpop.permute.xlu0 %2734
      %v2737 = vlaneseq
      %v2738 = vshrl.u32 %v2737, 7
      %v2739 = vsub.s32 1, %v2738
      %v2740 = vrot.slane %v2695, %v2739
      %v2741 = vlaneseq
      %v2742 = vshrl.u32 %v2741, 7
      %v2743 = vsub.s32 5, %v2742
      %v2744 = vrot.slane %v2695, %v2743
      %v2745 = vlaneseq
      %v2746 = vshrl.u32 %v2745, 7
      %v2747 = vsub.s32 1, %v2746
      %v2748 = vrot.slane %v2696, %v2747
      %v2752 = vlaneseq
      %v2753 = vshrl.u32 %v2752, 7
      %v2754 = vsub.s32 1, %v2753
      %v2755 = vrot.slane %v2740, %v2754
      %v2756 = vlaneseq
      %v2757 = vshrl.u32 %v2756, 7
      %v2758 = vsub.s32 1, %v2757
      %v2759 = vrot.slane %v2744, %v2758
      %v2760 = vlaneseq
      %v2761 = vshrl.u32 %v2760, 7
      %v2762 = vsub.s32 1, %v2761
      %v2763 = vrot.slane %v2748, %v2762
      %v2764 = vmul.f32 %v2735, %v2755
      %v2765 = vmul.f32 %v2735, %v2759
      %v2766 = vmul.f32 %v2735, %v2763
      %2767 = vset.pattern.permute.xlu0 26
      %2768 = vperm.xlu0 %2767, %v1771
      %v2769 = vpop.permute.xlu0 %2768
      %v2771 = vlaneseq
      %v2772 = vshrl.u32 %v2771, 7
      %v2773 = vsub.s32 2, %v2772
      %v2774 = vrot.slane %v2695, %v2773
      %v2775 = vlaneseq
      %v2776 = vshrl.u32 %v2775, 7
      %v2777 = vsub.s32 6, %v2776
      %v2778 = vrot.slane %v2695, %v2777
      %v2779 = vlaneseq
      %v2780 = vshrl.u32 %v2779, 7
      %v2781 = vsub.s32 2, %v2780
      %v2782 = vrot.slane %v2696, %v2781
      %v2786 = vlaneseq
      %v2787 = vshrl.u32 %v2786, 7
      %v2788 = vsub.s32 2, %v2787
      %v2789 = vrot.slane %v2774, %v2788
      %v2790 = vlaneseq
      %v2791 = vshrl.u32 %v2790, 7
      %v2792 = vsub.s32 2, %v2791
      %v2793 = vrot.slane %v2778, %v2792
      %v2794 = vlaneseq
      %v2795 = vshrl.u32 %v2794, 7
      %v2796 = vsub.s32 2, %v2795
      %v2797 = vrot.slane %v2782, %v2796
      %v2798 = vmul.f32 %v2769, %v2789
      %v2799 = vmul.f32 %v2769, %v2793
      %v2800 = vmul.f32 %v2769, %v2797
      %2801 = vset.pattern.permute.xlu0 27
      %2802 = vperm.xlu0 %2801, %v1771
      %v2803 = vpop.permute.xlu0 %2802
      %v2805 = vlaneseq
      %v2806 = vshrl.u32 %v2805, 7
      %v2807 = vsub.s32 3, %v2806
      %v2808 = vrot.slane %v2695, %v2807
      %v2809 = vlaneseq
      %v2810 = vshrl.u32 %v2809, 7
      %v2811 = vsub.s32 7, %v2810
      %v2812 = vrot.slane %v2695, %v2811
      %v2813 = vlaneseq
      %v2814 = vshrl.u32 %v2813, 7
      %v2815 = vsub.s32 3, %v2814
      %v2816 = vrot.slane %v2696, %v2815
      %v2820 = vlaneseq
      %v2821 = vshrl.u32 %v2820, 7
      %v2822 = vsub.s32 3, %v2821
      %v2823 = vrot.slane %v2808, %v2822
      %v2824 = vlaneseq
      %v2825 = vshrl.u32 %v2824, 7
      %v2826 = vsub.s32 3, %v2825
      %v2827 = vrot.slane %v2812, %v2826
      %v2828 = vlaneseq
      %v2829 = vshrl.u32 %v2828, 7
      %v2830 = vsub.s32 3, %v2829
      %v2831 = vrot.slane %v2816, %v2830
      %v2832 = vmul.f32 %v2803, %v2823
      %v2833 = vmul.f32 %v2803, %v2827
      %v2834 = vmul.f32 %v2803, %v2831
      %v2835 = vadd.f32 %v2730, %v2764
      %v2836 = vadd.f32 %v2731, %v2765
      %v2837 = vadd.f32 %v2732, %v2766
      %v2838 = vadd.f32 %v2798, %v2832
      %v2839 = vadd.f32 %v2799, %v2833
      %v2840 = vadd.f32 %v2800, %v2834
      %v2841 = vadd.f32 %v2835, %v2838
      %v2842 = vadd.f32 %v2836, %v2839
      %v2843 = vadd.f32 %v2837, %v2840
      %v2844 = vld [vmem:[#allocation2 + $0x4] sm:$0xff]
      %v2845 = vld [vmem:[#allocation2 + $0xc] sm:$0xf]
      %2846 = vset.pattern.permute.xlu0 28
      %2847 = vperm.xlu0 %2846, %v1771
      %v2848 = vpop.permute.xlu0 %2847
      %v2852 = vlaneseq
      %v2853 = vshrl.u32 %v2852, 7
      %v2854 = vsub.s32 0, %v2853
      %v2855 = vrot.slane %v2844, %v2854
      %v2856 = vlaneseq
      %v2857 = vshrl.u32 %v2856, 7
      %v2858 = vsub.s32 4, %v2857
      %v2859 = vrot.slane %v2844, %v2858
      %v2860 = vlaneseq
      %v2861 = vshrl.u32 %v2860, 7
      %v2862 = vsub.s32 0, %v2861
      %v2863 = vrot.slane %v2845, %v2862
      %v2867 = vlaneseq
      %v2868 = vshrl.u32 %v2867, 7
      %v2869 = vsub.s32 0, %v2868
      %v2870 = vrot.slane %v2855, %v2869
      %v2871 = vlaneseq
      %v2872 = vshrl.u32 %v2871, 7
      %v2873 = vsub.s32 0, %v2872
      %v2874 = vrot.slane %v2859, %v2873
      %v2875 = vlaneseq
      %v2876 = vshrl.u32 %v2875, 7
      %v2877 = vsub.s32 0, %v2876
      %v2878 = vrot.slane %v2863, %v2877
      %v2879 = vmul.f32 %v2848, %v2870
      %v2880 = vmul.f32 %v2848, %v2874
      %v2881 = vmul.f32 %v2848, %v2878
      %2882 = vset.pattern.permute.xlu0 29
      %2883 = vperm.xlu0 %2882, %v1771
      %v2884 = vpop.permute.xlu0 %2883
      %v2886 = vlaneseq
      %v2887 = vshrl.u32 %v2886, 7
      %v2888 = vsub.s32 1, %v2887
      %v2889 = vrot.slane %v2844, %v2888
      %v2890 = vlaneseq
      %v2891 = vshrl.u32 %v2890, 7
      %v2892 = vsub.s32 5, %v2891
      %v2893 = vrot.slane %v2844, %v2892
      %v2894 = vlaneseq
      %v2895 = vshrl.u32 %v2894, 7
      %v2896 = vsub.s32 1, %v2895
      %v2897 = vrot.slane %v2845, %v2896
      %v2901 = vlaneseq
      %v2902 = vshrl.u32 %v2901, 7
      %v2903 = vsub.s32 1, %v2902
      %v2904 = vrot.slane %v2889, %v2903
      %v2905 = vlaneseq
      %v2906 = vshrl.u32 %v2905, 7
      %v2907 = vsub.s32 1, %v2906
      %v2908 = vrot.slane %v2893, %v2907
      %v2909 = vlaneseq
      %v2910 = vshrl.u32 %v2909, 7
      %v2911 = vsub.s32 1, %v2910
      %v2912 = vrot.slane %v2897, %v2911
      %v2913 = vmul.f32 %v2884, %v2904
      %v2914 = vmul.f32 %v2884, %v2908
      %v2915 = vmul.f32 %v2884, %v2912
      %2916 = vset.pattern.permute.xlu0 30
      %2917 = vperm.xlu0 %2916, %v1771
      %v2918 = vpop.permute.xlu0 %2917
      %v2920 = vlaneseq
      %v2921 = vshrl.u32 %v2920, 7
      %v2922 = vsub.s32 2, %v2921
      %v2923 = vrot.slane %v2844, %v2922
      %v2924 = vlaneseq
      %v2925 = vshrl.u32 %v2924, 7
      %v2926 = vsub.s32 6, %v2925
      %v2927 = vrot.slane %v2844, %v2926
      %v2928 = vlaneseq
      %v2929 = vshrl.u32 %v2928, 7
      %v2930 = vsub.s32 2, %v2929
      %v2931 = vrot.slane %v2845, %v2930
      %v2935 = vlaneseq
      %v2936 = vshrl.u32 %v2935, 7
      %v2937 = vsub.s32 2, %v2936
      %v2938 = vrot.slane %v2923, %v2937
      %v2939 = vlaneseq
      %v2940 = vshrl.u32 %v2939, 7
      %v2941 = vsub.s32 2, %v2940
      %v2942 = vrot.slane %v2927, %v2941
      %v2943 = vlaneseq
      %v2944 = vshrl.u32 %v2943, 7
      %v2945 = vsub.s32 2, %v2944
      %v2946 = vrot.slane %v2931, %v2945
      %v2947 = vmul.f32 %v2918, %v2938
      %v2948 = vmul.f32 %v2918, %v2942
      %v2949 = vmul.f32 %v2918, %v2946
      %2950 = vset.pattern.permute.xlu0 31
      %2951 = vperm.xlu0 %2950, %v1771
      %v2952 = vpop.permute.xlu0 %2951
      %v2954 = vlaneseq
      %v2955 = vshrl.u32 %v2954, 7
      %v2956 = vsub.s32 3, %v2955
      %v2957 = vrot.slane %v2844, %v2956
      %v2958 = vlaneseq
      %v2959 = vshrl.u32 %v2958, 7
      %v2960 = vsub.s32 7, %v2959
      %v2961 = vrot.slane %v2844, %v2960
      %v2962 = vlaneseq
      %v2963 = vshrl.u32 %v2962, 7
      %v2964 = vsub.s32 3, %v2963
      %v2965 = vrot.slane %v2845, %v2964
      %v2969 = vlaneseq
      %v2970 = vshrl.u32 %v2969, 7
      %v2971 = vsub.s32 3, %v2970
      %v2972 = vrot.slane %v2957, %v2971
      %v2973 = vlaneseq
      %v2974 = vshrl.u32 %v2973, 7
      %v2975 = vsub.s32 3, %v2974
      %v2976 = vrot.slane %v2961, %v2975
      %v2977 = vlaneseq
      %v2978 = vshrl.u32 %v2977, 7
      %v2979 = vsub.s32 3, %v2978
      %v2980 = vrot.slane %v2965, %v2979
      %v2981 = vmul.f32 %v2952, %v2972
      %v2982 = vmul.f32 %v2952, %v2976
      %v2983 = vmul.f32 %v2952, %v2980
      %v2984 = vadd.f32 %v2879, %v2913
      %v2985 = vadd.f32 %v2880, %v2914
      %v2986 = vadd.f32 %v2881, %v2915
      %v2987 = vadd.f32 %v2947, %v2981
      %v2988 = vadd.f32 %v2948, %v2982
      %v2989 = vadd.f32 %v2949, %v2983
      %v2990 = vadd.f32 %v2984, %v2987
      %v2991 = vadd.f32 %v2985, %v2988
      %v2992 = vadd.f32 %v2986, %v2989
      %v2993 = vmul.f32 %v2844, %v1523
      %v2994 = vmul.f32 %v2845, %v1521
      %2995 = vset.pattern.permute.xlu0 32
      %2996 = vperm.xlu0 %2995, %v1771
      %v2997 = vpop.permute.xlu0 %2996
      %v3001 = vlaneseq
      %v3002 = vshrl.u32 %v3001, 7
      %v3003 = vsub.s32 0, %v3002
      %v3004 = vrot.slane %v2993, %v3003
      %v3005 = vlaneseq
      %v3006 = vshrl.u32 %v3005, 7
      %v3007 = vsub.s32 4, %v3006
      %v3008 = vrot.slane %v2993, %v3007
      %v3009 = vlaneseq
      %v3010 = vshrl.u32 %v3009, 7
      %v3011 = vsub.s32 0, %v3010
      %v3012 = vrot.slane %v2994, %v3011
      %v3016 = vlaneseq
      %v3017 = vshrl.u32 %v3016, 7
      %v3018 = vsub.s32 0, %v3017
      %v3019 = vrot.slane %v3004, %v3018
      %v3020 = vlaneseq
      %v3021 = vshrl.u32 %v3020, 7
      %v3022 = vsub.s32 0, %v3021
      %v3023 = vrot.slane %v3008, %v3022
      %v3024 = vlaneseq
      %v3025 = vshrl.u32 %v3024, 7
      %v3026 = vsub.s32 0, %v3025
      %v3027 = vrot.slane %v3012, %v3026
      %v3028 = vmul.f32 %v2997, %v3019
      %v3029 = vmul.f32 %v2997, %v3023
      %v3030 = vmul.f32 %v2997, %v3027
      %3031 = vset.pattern.permute.xlu0 33
      %3032 = vperm.xlu0 %3031, %v1771
      %v3033 = vpop.permute.xlu0 %3032
      %v3035 = vlaneseq
      %v3036 = vshrl.u32 %v3035, 7
      %v3037 = vsub.s32 1, %v3036
      %v3038 = vrot.slane %v2993, %v3037
      %v3039 = vlaneseq
      %v3040 = vshrl.u32 %v3039, 7
      %v3041 = vsub.s32 5, %v3040
      %v3042 = vrot.slane %v2993, %v3041
      %v3043 = vlaneseq
      %v3044 = vshrl.u32 %v3043, 7
      %v3045 = vsub.s32 1, %v3044
      %v3046 = vrot.slane %v2994, %v3045
      %v3050 = vlaneseq
      %v3051 = vshrl.u32 %v3050, 7
      %v3052 = vsub.s32 1, %v3051
      %v3053 = vrot.slane %v3038, %v3052
      %v3054 = vlaneseq
      %v3055 = vshrl.u32 %v3054, 7
      %v3056 = vsub.s32 1, %v3055
      %v3057 = vrot.slane %v3042, %v3056
      %v3058 = vlaneseq
      %v3059 = vshrl.u32 %v3058, 7
      %v3060 = vsub.s32 1, %v3059
      %v3061 = vrot.slane %v3046, %v3060
      %v3062 = vmul.f32 %v3033, %v3053
      %v3063 = vmul.f32 %v3033, %v3057
      %v3064 = vmul.f32 %v3033, %v3061
      %3065 = vset.pattern.permute.xlu0 34
      %3066 = vperm.xlu0 %3065, %v1771
      %v3067 = vpop.permute.xlu0 %3066
      %v3069 = vlaneseq
      %v3070 = vshrl.u32 %v3069, 7
      %v3071 = vsub.s32 2, %v3070
      %v3072 = vrot.slane %v2993, %v3071
      %v3073 = vlaneseq
      %v3074 = vshrl.u32 %v3073, 7
      %v3075 = vsub.s32 6, %v3074
      %v3076 = vrot.slane %v2993, %v3075
      %v3077 = vlaneseq
      %v3078 = vshrl.u32 %v3077, 7
      %v3079 = vsub.s32 2, %v3078
      %v3080 = vrot.slane %v2994, %v3079
      %v3084 = vlaneseq
      %v3085 = vshrl.u32 %v3084, 7
      %v3086 = vsub.s32 2, %v3085
      %v3087 = vrot.slane %v3072, %v3086
      %v3088 = vlaneseq
      %v3089 = vshrl.u32 %v3088, 7
      %v3090 = vsub.s32 2, %v3089
      %v3091 = vrot.slane %v3076, %v3090
      %v3092 = vlaneseq
      %v3093 = vshrl.u32 %v3092, 7
      %v3094 = vsub.s32 2, %v3093
      %v3095 = vrot.slane %v3080, %v3094
      %v3096 = vmul.f32 %v3067, %v3087
      %v3097 = vmul.f32 %v3067, %v3091
      %v3098 = vmul.f32 %v3067, %v3095
      %3099 = vset.pattern.permute.xlu0 35
      %3100 = vperm.xlu0 %3099, %v1771
      %v3101 = vpop.permute.xlu0 %3100
      %v3103 = vlaneseq
      %v3104 = vshrl.u32 %v3103, 7
      %v3105 = vsub.s32 3, %v3104
      %v3106 = vrot.slane %v2993, %v3105
      %v3107 = vlaneseq
      %v3108 = vshrl.u32 %v3107, 7
      %v3109 = vsub.s32 7, %v3108
      %v3110 = vrot.slane %v2993, %v3109
      %v3111 = vlaneseq
      %v3112 = vshrl.u32 %v3111, 7
      %v3113 = vsub.s32 3, %v3112
      %v3114 = vrot.slane %v2994, %v3113
      %v3118 = vlaneseq
      %v3119 = vshrl.u32 %v3118, 7
      %v3120 = vsub.s32 3, %v3119
      %v3121 = vrot.slane %v3106, %v3120
      %v3122 = vlaneseq
      %v3123 = vshrl.u32 %v3122, 7
      %v3124 = vsub.s32 3, %v3123
      %v3125 = vrot.slane %v3110, %v3124
      %v3126 = vlaneseq
      %v3127 = vshrl.u32 %v3126, 7
      %v3128 = vsub.s32 3, %v3127
      %v3129 = vrot.slane %v3114, %v3128
      %v3130 = vmul.f32 %v3101, %v3121
      %v3131 = vmul.f32 %v3101, %v3125
      %v3132 = vmul.f32 %v3101, %v3129
      %v3133 = vadd.f32 %v3028, %v3062
      %v3134 = vadd.f32 %v3029, %v3063
      %v3135 = vadd.f32 %v3030, %v3064
      %v3136 = vadd.f32 %v3096, %v3130
      %v3137 = vadd.f32 %v3097, %v3131
      %v3138 = vadd.f32 %v3098, %v3132
      %v3139 = vadd.f32 %v3133, %v3136
      %v3140 = vadd.f32 %v3134, %v3137
      %v3141 = vadd.f32 %v3135, %v3138
      %3145 = vrot.lane.b32.xlu0 %v2990, 127
      %v3146 = vpop.permute.xlu0 %3145
      %3147 = vrot.lane.b32.xlu0 %v2991, 127
      %v3148 = vpop.permute.xlu0 %3147
      %3149 = vrot.lane.b32.xlu0 %v2992, 127
      %v3150 = vpop.permute.xlu0 %3149
      %v3151 = vsel %vm736, %v3146, %v3148
      %v3152 = vsel %vm736, %v3148, %v3150
      %v3156 = vadd.f32 %v2841, %v3151
      %v3157 = vadd.f32 %v2842, %v3152
      %v3158 = vadd.f32 %v2843, %v3150
      %3162 = vrot.lane.b32.xlu0 %v3139, 126
      %v3163 = vpop.permute.xlu0 %3162
      %3164 = vrot.lane.b32.xlu0 %v3140, 126
      %v3165 = vpop.permute.xlu0 %3164
      %3166 = vrot.lane.b32.xlu0 %v3141, 126
      %v3167 = vpop.permute.xlu0 %3166
      %v3168 = vsel %vm754, %v3163, %v3165
      %v3169 = vsel %vm754, %v3165, %v3167
      %v3173 = vadd.f32 %v3156, %v3168
      %v3174 = vadd.f32 %v3157, %v3169
      %v3175 = vadd.f32 %v3158, %v3167
      %3179 = vrot.lane.b32.xlu0 %v2690, 112
      %v3180 = vpop.permute.xlu0 %3179
      %3181 = vrot.lane.b32.xlu0 %v2691, 112
      %v3182 = vpop.permute.xlu0 %3181
      %3183 = vrot.lane.b32.xlu0 %v2692, 112
      %v3184 = vpop.permute.xlu0 %3183
      %v3185 = vsel %vm1718, %v3180, %v3182
      %v3186 = vsel %vm1718, %v3182, %v3184
      %v3190 = vadd.f32 %v2254, %v3185
      %v3191 = vadd.f32 %v2255, %v3186
      %v3192 = vadd.f32 %v2256, %v3184
      %3196 = vrot.lane.b32.xlu0 %v3173, 96
      %v3197 = vpop.permute.xlu0 %3196
      %3198 = vrot.lane.b32.xlu0 %v3174, 96
      %v3199 = vpop.permute.xlu0 %3198
      %3200 = vrot.lane.b32.xlu0 %v3175, 96
      %v3201 = vpop.permute.xlu0 %3200
      %v3202 = vsel %vm1736, %v3197, %v3199
      %v3203 = vsel %vm1736, %v3199, %v3201
      %v3207 = vadd.f32 %v3190, %v3197
      %v3208 = vadd.f32 %v3191, %v3202
      %v3209 = vadd.f32 %v3192, %v3203
      %3211 = vset.pattern.permute.xlu0 0
      %3212 = vperm.xlu0 %3211, %v1772
      %v3213 = vpop.permute.xlu0 %3212
      %v3215 = vadd.f32 %v3207, %v3213
      %v3216 = vadd.f32 %v3208, %v3213
      %v3217 = vadd.f32 %v3209, %v3213
      %v3219 = vcombine.high %v225, %v225
      %3220 = vrot.lane.b32.xlu0 %v225, 111
      %v3221 = vpop.permute.xlu0 %3220
      %3222 = vrot.lane.b32.xlu0 %v3219, 111
      %v3223 = vpop.permute.xlu0 %3222
      %v3224 = vsel %vm265, %v3221, %v3223
      %v3228 = vadd.f32 %v3215, %v3221
      %v3229 = vadd.f32 %v3216, %v3224
      %v3230 = vadd.f32 %v3217, %v3223
      %v3234 = vcombine.low %v3228, %v3229
      %3235 = vrot.lane.b32.xlu0 %v3234, 17
      %v3236 = vpop.permute.xlu0 %3235
      %3237 = vrot.lane.b32.xlu0 %v3230, 17
      %v3238 = vpop.permute.xlu0 %3237
      %v3239 = vrot.slane %v3236, 4
      %v3240 = vrot.slane %v3238, 4
      %v3241 = vsel %vm1766, %v3239, %v3240
      %v3242 = vsel %vm1522, %v3236, %v3241
      %3244 = vst [vmem:[%s224] sm:$0xff] %v3242
      %p3245 = scmp.lt.s32.totalorder %s16, 1
      %s3246 = scalar_select %p3245, %s16, 1
      %s3247 = smul.addr %s3246, 2
      %s3248 = smul.addr %s3247, 4
      %s3249 = scalar_lea.vmem %s5, %s3248
      // Predicated region
      $region41: #{residual_block_pallas.1} parent=39 // pred_check
        %p3250 = pneg %p144
      $region42: #{residual_block_pallas.1} parent=39 // pred_check_branch
        %3252 = sbr.rel (%p3250) target = $region44
      $region43: #{residual_block_pallas.1} parent=39 // pred_region
        _
      $region44: #{residual_block_pallas.1} parent=39 // pred_fallthru
        _
    $region40: #{residual_block_pallas.1} parent=5 // pred_fallthru
      _
    %p3253 = scmp.le.s32.totalorder 2, %s11
    // Predicated region
    $region45: #{residual_block_pallas.1} parent=5 // pred_check
      %p3254 = pneg %p3253
    $region46: #{residual_block_pallas.1} parent=5 // pred_check_branch
      %3256 = sbr.rel (%p3254) target = $region48
    $region47: #{residual_block_pallas.1} parent=5 // pred_region
      %s3257 = ssub.s32 %s11, 2
      // Predicated region
      $region49: #{residual_block_pallas.1} parent=47 // pred_check
        %p3258 = pneg %p150
      $region50: #{residual_block_pallas.1} parent=47 // pred_check_branch
        %3260 = sbr.rel (%p3258) target = $region52
      $region51: #{residual_block_pallas.1} parent=47 // pred_region
        %p3261 = scmp.lt.s32.totalorder %s17, 1
        %s3262 = scalar_select %p3261, %s17, 1
        %s3263 = smul.addr %s3262, 2
        %s3264 = smul.addr %s3263, 4
        %s3265 = scalar_lea.vmem %s5, %s3264
      $region52: #{residual_block_pallas.1} parent=47 // pred_fallthru
        _
    $region48: #{residual_block_pallas.1} parent=5 // pred_fallthru
      _
  $region6: #{residual_block_pallas.1} parent=0 // loop_footer
    %s15 = sadd.s32 1, %s11
  $region7: #{residual_block_pallas.1} parent=0 // loop_footer_branch
    %10 = sbr.rel target = $region3
  $region8: #{residual_block_pallas.1} parent=0 // loop_exit
    _

</llo_original>
